<compile_context>
chip_gen: v7x
topology: tpu7x:2x2x1
jax: 0.10.0
libtpu: 0.0.40
codegen_flags: <defaults>
</compile_context>

<pallas_src>
from functools import partial

import numpy as np
import jax
import jax.numpy as jnp
from jax.experimental import pallas as pl
from jax.experimental.pallas import tpu as pltpu

_VMEM = pl.BlockSpec(memory_space=pltpu.MemorySpace.VMEM)
_GN_EPS = 1e-5


# --------------------------- in-kernel helpers ------------------------------

def _celu(y):
    # CELU(alpha=1); exp argument clamped to <= 0.
    return jnp.maximum(y, 0.0) + jnp.minimum(0.0, jnp.exp(jnp.minimum(y, 0.0)) - 1.0)


def _sigmoid(y):
    # Numerically stable sigmoid built only from exp/where (no inf intermediate).
    e = jnp.exp(-jnp.abs(y))
    return jnp.where(y >= 0.0, 1.0 / (1.0 + e), e / (1.0 + e))


def _conv_same(x, w, b, mask, k, W, B):
    """k x k 'same' conv on x (Cin, N), N = H*W*B, columns ordered (h, w, b).

    Each tap is a lane roll (XLU) + a precomputed boundary mask row; the k*k shifted
    blocks are stacked into a (Cin*k*k, N) im2col slab -> ONE MXU matmul."""
    Cin, N = x.shape
    pad = (k - 1) // 2
    cols = []
    for t in range(k * k):
        dh, dw = t // k - pad, t % k - pad
        if dh == 0 and dw == 0:
            cols.append(x)                              # centre tap: mask is all-ones
        else:
            delta = (dh * W + dw) * B                   # source column = n + delta
            xs = pltpu.roll(x, shift=(-delta) % N, axis=1)
            cols.append(xs * mask[t:t + 1, :])          # zero-padding via mask
    im2col = jnp.concatenate(cols, axis=0) if len(cols) > 1 else cols[0]
    return jnp.dot(w, im2col, preferred_element_type=jnp.float32) + b


def _groupnorm_celu(x, gamma, beta, A, M, Mb, inv_cnt):
    """PyTorch GroupNorm (biased var, eps=1e-5) + CELU(1) on x (C, N).

    Per-(batch, group) stats via thin precomputed matrices:
      M  (N, B): within-batch column sum      Mb (B, N): broadcast back to columns
      A  (C, C): within-group row ones."""
    s1 = jnp.dot(x, M, preferred_element_type=jnp.float32)            # (C, B)
    s2 = jnp.dot(x * x, M, preferred_element_type=jnp.float32)        # (C, B)
    gm = jnp.dot(A, s1, preferred_element_type=jnp.float32) * inv_cnt
    gs = jnp.dot(A, s2, preferred_element_type=jnp.float32) * inv_cnt
    mean = jnp.dot(gm, Mb, preferred_element_type=jnp.float32)        # (C, N)
    msq = jnp.dot(gs, Mb, preferred_element_type=jnp.float32)         # (C, N)
    var = jnp.maximum(msq - mean * mean, 0.0)
    y = (x - mean) * jax.lax.rsqrt(var + _GN_EPS) * gamma + beta
    return _celu(y)


# ------------------------------ fused kernel --------------------------------

def _bg_decoder_kernel(*refs, plan):
    o_ref = refs[-1]
    pos = [0]

    def nxt():
        r = refs[pos[0]]
        pos[0] += 1
        return r

    x = None
    for i, L in enumerate(plan):
        if i == 0:
            # 1x1-spatial conv + PixelShuffle(u0) lifted to one matmul with
            # K = (subpixel, z_dim); output columns ordered (h, w, b).
            zT = nxt()[...]                                   # (z, B)
            Q = nxt()[...]                                    # (B, N0) batch replicate
            Rrow = nxt()[...]                                 # (S0*z, z) row replicate
            Sel = nxt()[...]                                  # (S0*z, N0) block-diag select
            Wc = nxt()[...]                                   # (f0, S0*z)
            Bc = nxt()[...]                                   # (f0, N0)
            zq = jnp.dot(zT, Q, preferred_element_type=jnp.float32)
            zrep = jnp.dot(Rrow, zq, preferred_element_type=jnp.float32)
            x = jnp.dot(Wc, zrep * Sel, preferred_element_type=jnp.float32) + Bc
        else:
            mask = nxt()[...]
            w = nxt()[...]
            b = nxt()[...]
            y = _conv_same(x, w, b, mask, L["k"], L["W_in"], L["B"])
            if (L["u"] > 1) and (not L["last"]):
                # PixelShuffle via small precomputed per-subpixel scatter matmuls
                # (conv rows pre-permuted host-side to (subpixel, channel) order).
                scat_ref = nxt()
                f = L["f"]
                acc = None
                for s in range(L["u"] * L["u"]):
                    term = jnp.dot(y[s * f:(s + 1) * f, :], scat_ref[s],
                                   preferred_element_type=jnp.float32)
                    acc = term if acc is None else acc + term
                x = acc
            else:
                x = y
        if L["last"]:
            # norm_act_final=False; BgDecoder applies sigmoid.  The last PixelShuffle
            # is folded into the host epilogue so this store stays lane-dense.
            o_ref[...] = _sigmoid(x)
        else:
            A = nxt()[...]
            M = nxt()[...]
            Mb = nxt()[...]
            g = nxt()[...]
            bt = nxt()[...]
            x = _groupnorm_celu(x, g, bt, A, M, Mb, L["inv_cnt"])
    # TODO(synk): if bs or the spatial resolution grows, add a grid over the lane
    # (B*H*W) axis with dimension_semantics=("parallel",) (2 TCs on v7x) and set
    # pltpu.CompilerParams(vmem_limit_bytes=...).  The roll/mask conv and thin GN
    # matrices already scale linearly in N; only the middle-layer PS scatter constant
    # (N x u^2*N) would then need a rolled / strided-store formulation.


# --------------------- host-side constants & weight repack -------------------

def _conv_mask(k, H, W, B):
    """(k*k, N) boundary masks for a 'same' conv on columns ordered (h, w, b)."""
    pad = (k - 1) // 2
    N = H * W * B
    n = np.arange(N)
    h = n // (W * B)
    w = (n // B) % W
    m = np.zeros((k * k, N), np.float32)
    for t in range(k * k):
        dh, dw = t // k - pad, t % k - pad
        m[t] = ((h + dh >= 0) & (h + dh < H) & (w + dw >= 0) & (w + dw < W))
    return m


def _ps_scatter(u, H, W, B):
    """(u*u, N_in, N_out) 0/1 scatters implementing PixelShuffle(u) on (h,w,b) columns."""
    Hr, Wr = H * u, W * u
    N_in, N_out = H * W * B, Hr * Wr * B
    scat = np.zeros((u * u, N_in, N_out), np.float32)
    n_out = np.arange(N_out)
    b = n_out % B
    q = (n_out // B) % Wr
    p = n_out // (Wr * B)
    s = (p % u) * u + (q % u)
    n_in = ((p // u) * W + (q // u)) * B + b
    scat[s, n_in, n_out] = 1.0
    return scat


def _build_plan_and_constants(cfg, bs):
    filters = list(cfg["filters"])
    kernels = list(cfg["kernel_sizes"])
    upscales = list(cfg["upscales"])
    groups = list(cfg["groups"])
    z = cfg["z_bg_dim"]
    n = len(filters)
    plan = []
    consts = {}

    def gn_consts(i, f, g, H, W):
        Cg = f // g
        A = ((np.arange(f)[:, None] // Cg) ==
             (np.arange(f)[None, :] // Cg)).astype(np.float32)
        N = H * W * bs
        M = np.zeros((N, bs), np.float32)
        M[np.arange(N), np.arange(N) % bs] = 1.0
        consts[f"A{i}"] = A
        consts[f"M{i}"] = M
        consts[f"Mb{i}"] = np.ascontiguousarray(M.T)
        return 1.0 / float(Cg * H * W)

    # ---- layer 0: 1x1-spatial conv + PixelShuffle(u0), lifted to one matmul ----
    u0, f0 = upscales[0], filters[0]
    S0 = u0 * u0
    N0 = S0 * bs
    col = np.arange(N0)
    Q = np.zeros((bs, N0), np.float32)
    Q[col % bs, col] = 1.0                                  # Q[b, n] = [n % bs == b]
    consts["Q"] = Q
    consts["Rrow"] = np.tile(np.eye(z, dtype=np.float32), (S0, 1))
    consts["Sel"] = ((np.arange(S0 * z)[:, None] // z) ==
                     (col[None, :] // bs)).astype(np.float32)
    H = W = u0
    inv0 = gn_consts(0, f0, groups[0], H, W) if n > 1 else None
    plan.append(dict(k=kernels[0], u=u0, f=f0, W_in=1, B=bs, last=(n == 1),
                     inv_cnt=inv0))

    # ---- layers 1 .. n-1 ----
    for i in range(1, n):
        f, k, u = filters[i], kernels[i], upscales[i]
        last = (i == n - 1)
        consts[f"mask{i}"] = _conv_mask(k, H, W, bs)
        if (not last) and u > 1:
            consts[f"scat{i}"] = _ps_scatter(u, H, W, bs)
        inv = None
        if not last:
            Hn, Wn = H * u, W * u
            inv = gn_consts(i, f, groups[i], Hn, Wn)
        plan.append(dict(k=k, u=u, f=f, W_in=W, B=bs, last=last, inv_cnt=inv))
        if not last:
            H, W = H * u, W * u
    return tuple(plan), consts


def init_params(key, z_dim, filters, kernel_sizes, upscales, groups):
    """PyTorch-layout params (Conv2d-style uniform fan-in; GN gamma=1, beta=0)."""
    params = {}
    cin = z_dim
    n = len(filters)
    for i in range(n):
        f, k, u = filters[i], kernel_sizes[i], upscales[i]
        cout = f * u * u if u != 1 else f
        key, k1, k2 = jax.random.split(key, 3)
        fan_in = cin * k * k
        bound = 1.0 / float(fan_in) ** 0.5
        params[f"conv{i}_w"] = jax.random.uniform(
            k1, (cout, cin, k, k), jnp.float32, -bound, bound)
        params[f"conv{i}_b"] = jax.random.uniform(
            k2, (cout,), jnp.float32, -bound, bound)
        if i < n - 1:
            params[f"gn{i}_gamma"] = jnp.ones((f,), jnp.float32)
            params[f"gn{i}_beta"] = jnp.zeros((f,), jnp.float32)
        cin = f
    return params


def prepare_params(params, cfg):
    """One-time repack of PyTorch-layout params into the fused-kernel layout."""
    filters = cfg["filters"]
    kernels = cfg["kernel_sizes"]
    upscales = cfg["upscales"]
    z = cfg["z_bg_dim"]
    n = len(filters)
    kp = {}

    # Layer 0: centre tap (input is 1x1 spatial) folded with PixelShuffle(u0) into a
    # lifted weight Wc0[c, s*z + d] = W[c*S0 + s, d].
    f0, u0, k0 = filters[0], upscales[0], kernels[0]
    S0 = u0 * u0
    w0 = params["conv0_w"][:, :, k0 // 2, k0 // 2]          # (f0*S0, z)
    kp["Wc0"] = w0.reshape(f0, S0, z).reshape(f0, S0 * z)
    kp["b0"] = params["conv0_b"].reshape(f0, S0)            # [c, s]

    for i in range(1, n):
        f, k, u = filters[i], kernels[i], upscales[i]
        w = params[f"conv{i}_w"]                             # (cout, cin, k, k)
        b = params[f"conv{i}_b"]
        cout, cin = w.shape[0], w.shape[1]
        if i < n - 1 and u != 1:
            # Row o' = s*f + c holds torch channel c*u*u + s so the in-kernel pixel
            # shuffle only needs contiguous row slices.
            perm = jnp.arange(cout).reshape(f, u * u).T.reshape(-1)
            w = w[perm]
            b = b[perm]
        # im2col weight: column index = (kh*k + kw)*cin + ci.
        kp[f"w{i}"] = jnp.transpose(w, (0, 2, 3, 1)).reshape(cout, k * k * cin)
        kp[f"b{i}"] = b.reshape(cout, 1)

    for i in range(n - 1):
        kp[f"g{i}"] = params[f"gn{i}_gamma"].reshape(filters[i], 1)
        kp[f"bt{i}"] = params[f"gn{i}_beta"].reshape(filters[i], 1)
    return kp


# ------------------------------ forward wrapper ------------------------------

def bg_decoder_forward(z_bg, kparams, cfg):
    """
    :param z_bg: (bs, z_bg_dim, 1, 1)
    :return: [bg] with bg (bs, filters[-1], prod(upscales), prod(upscales))
    """
    filters = tuple(cfg["filters"])
    upscales = tuple(cfg["upscales"])
    n = len(filters)
    assert n >= 2
    bs = z_bg.shape[0]
    plan, consts = _build_plan_and_constants(cfg, bs)

    zT = jnp.transpose(z_bg.reshape(bs, z_bg.shape[1]))      # (z, bs)
    bias0 = jnp.repeat(kparams["b0"], bs, axis=1)            # (f0, S0*bs)

    inputs = [zT, consts["Q"], consts["Rrow"], consts["Sel"], kparams["Wc0"], bias0,
              consts["A0"], consts["M0"], consts["Mb0"], kparams["g0"], kparams["bt0"]]
    for i in range(1, n):
        inputs += [consts[f"mask{i}"], kparams[f"w{i}"], kparams[f"b{i}"]]
        if i < n - 1:
            if upscales[i] > 1:
                inputs.append(consts[f"scat{i}"])
            inputs += [consts[f"A{i}"], consts[f"M{i}"], consts[f"Mb{i}"],
                       kparams[f"g{i}"], kparams[f"bt{i}"]]

    u_last = upscales[-1]
    H2 = 1
    for u in upscales[:-1]:
        H2 *= u
    C = filters[-1]
    cout_last = C * u_last * u_last
    N_last = bs * H2 * H2

    out2d = pl.pallas_call(
        partial(_bg_decoder_kernel, plan=plan),
        out_shape=jax.ShapeDtypeStruct((cout_last, N_last), jnp.float32),
        in_specs=[_VMEM] * len(inputs),
        out_specs=_VMEM,
    )(*inputs)

    # Host epilogue: the final PixelShuffle is a pure relabel of the lane-dense
    # (cout_last, B*H2*W2) output: rows (c, i, j), columns (h, w, b).
    bg = (out2d.reshape(C, u_last, u_last, H2, H2, bs)
                .transpose(5, 0, 3, 1, 4, 2)
                .reshape(bs, C, H2 * u_last, H2 * u_last))
    return [bg]


# ------------------------------ pure-JAX reference ---------------------------

def bg_decoder_reference(z_bg, params, cfg):
    """Plain XLA reference with identical semantics to the PyTorch module."""
    filters = cfg["filters"]
    kernels = cfg["kernel_sizes"]
    upscales = cfg["upscales"]
    groups = cfg["groups"]
    n = len(filters)
    x = z_bg
    for i in range(n):
        k = kernels[i]
        pad = (k - 1) // 2
        x = jax.lax.conv_general_dilated(
            x, params[f"conv{i}_w"], window_strides=(1, 1),
            padding=[(pad, pad), (pad, pad)],
            dimension_numbers=("NCHW", "OIHW", "NCHW"))
        x = x + params[f"conv{i}_b"][None, :, None, None]
        u = upscales[i]
        if u != 1:
            B_, C_, H_, W_ = x.shape
            f = C_ // (u * u)
            x = (x.reshape(B_, f, u, u, H_, W_)
                   .transpose(0, 1, 4, 2, 5, 3)
                   .reshape(B_, f, H_ * u, W_ * u))
        if i < n - 1:
            g = groups[i]
            B_, C_, H_, W_ = x.shape
            xg = x.reshape(B_, g, (C_ // g) * H_ * W_)
            mean = xg.mean(axis=2, keepdims=True)
            var = jnp.mean((xg - mean) ** 2, axis=2, keepdims=True)
            xg = (xg - mean) * jax.lax.rsqrt(var + _GN_EPS)
            x = xg.reshape(B_, C_, H_, W_)
            x = (x * params[f"gn{i}_gamma"][None, :, None, None]
                 + params[f"gn{i}_beta"][None, :, None, None])
            x = jax.nn.celu(x, alpha=1.0)
    return jax.nn.sigmoid(x)


if __name__ == "__main__":
    # Small synthetic architecture consistent with GNM's BgDecoder config:
    # z_bg (bs, 8, 1, 1) --[conv1x1 + PS(4) + GN + CELU]--> (bs, 32, 4, 4)
    #                    --[conv3x3 + PS(2) + GN + CELU]--> (bs, 16, 8, 8)
    #                    --[conv3x3 + PS(2)] -- sigmoid --> (bs, 3, 16, 16)
    cfg = dict(
        z_bg_dim=8,
        filters=(32, 16, 3),
        kernel_sizes=(1, 3, 3),
        upscales=(4, 2, 2),
        groups=(4, 4, 1),
    )
    bs = 2

    key = jax.random.PRNGKey(0)
    kp_key, kz = jax.random.split(key)
    params = init_params(kp_key, cfg["z_bg_dim"], cfg["filters"],
                         cfg["kernel_sizes"], cfg["upscales"], cfg["groups"])
    kparams = prepare_params(params, cfg)        # one-time weight repack
    z_bg = jax.random.normal(kz, (bs, cfg["z_bg_dim"], 1, 1), jnp.float32)

    fwd = jax.jit(lambda z, kp: bg_decoder_forward(z, kp, cfg))
    pa = fwd(z_bg, kparams)
    bg = jax.block_until_ready(pa[0])

    Hf = 1
    for u in cfg["upscales"]:
        Hf *= u
    assert bg.shape == (bs, cfg["filters"][-1], Hf, Hf), bg.shape
    assert bg.dtype == jnp.float32
    assert bool(jnp.all(jnp.isfinite(bg)))
    assert bool(jnp.all((bg >= 0.0) & (bg <= 1.0)))  # sigmoid output range

    ref = jax.block_until_ready(bg_decoder_reference(z_bg, params, cfg))
    err = float(jnp.max(jnp.abs(bg - ref)))
    assert err < 1e-3, f"max abs err vs pure-JAX reference: {err}"
    print("KERNEL_OK")
</pallas_src>

<mosaic_0001>
module attributes {stable_mosaic.version = 11 : i64} {
  func.func @_bg_decoder_kernel(%arg0: memref<8x2xf32, #tpu.memory_space<vmem>>, %arg1: memref<2x32xf32, #tpu.memory_space<vmem>>, %arg2: memref<128x8xf32, #tpu.memory_space<vmem>>, %arg3: memref<128x32xf32, #tpu.memory_space<vmem>>, %arg4: memref<32x128xf32, #tpu.memory_space<vmem>>, %arg5: memref<32x32xf32, #tpu.memory_space<vmem>>, %arg6: memref<32x32xf32, #tpu.memory_space<vmem>>, %arg7: memref<32x2xf32, #tpu.memory_space<vmem>>, %arg8: memref<2x32xf32, #tpu.memory_space<vmem>>, %arg9: memref<32x1xf32, #tpu.memory_space<vmem>>, %arg10: memref<32x1xf32, #tpu.memory_space<vmem>>, %arg11: memref<9x32xf32, #tpu.memory_space<vmem>>, %arg12: memref<64x288xf32, #tpu.memory_space<vmem>>, %arg13: memref<64x1xf32, #tpu.memory_space<vmem>>, %arg14: memref<4x32x128xf32, #tpu.memory_space<vmem>>, %arg15: memref<16x16xf32, #tpu.memory_space<vmem>>, %arg16: memref<128x2xf32, #tpu.memory_space<vmem>>, %arg17: memref<2x128xf32, #tpu.memory_space<vmem>>, %arg18: memref<16x1xf32, #tpu.memory_space<vmem>>, %arg19: memref<16x1xf32, #tpu.memory_space<vmem>>, %arg20: memref<9x128xf32, #tpu.memory_space<vmem>>, %arg21: memref<12x144xf32, #tpu.memory_space<vmem>>, %arg22: memref<12x1xf32, #tpu.memory_space<vmem>>, %arg23: memref<12x128xf32, #tpu.memory_space<vmem>>) attributes {dimension_semantics = [], scalar_prefetch = 0 : i64, scratch_operands = 0 : i64, tpu.core_type = #tpu.core_type<tc>} {
    %c0 = arith.constant 0 : index
    %c0_0 = arith.constant 0 : index
    %0 = vector.load %arg0[%c0, %c0_0] : memref<8x2xf32, #tpu.memory_space<vmem>>, vector<8x2xf32>
    %c0_1 = arith.constant 0 : index
    %c0_2 = arith.constant 0 : index
    %1 = vector.load %arg1[%c0_1, %c0_2] : memref<2x32xf32, #tpu.memory_space<vmem>>, vector<2x32xf32>
    %c0_3 = arith.constant 0 : index
    %c0_4 = arith.constant 0 : index
    %2 = vector.load %arg2[%c0_3, %c0_4] : memref<128x8xf32, #tpu.memory_space<vmem>>, vector<128x8xf32>
    %c0_5 = arith.constant 0 : index
    %c0_6 = arith.constant 0 : index
    %3 = vector.load %arg3[%c0_5, %c0_6] : memref<128x32xf32, #tpu.memory_space<vmem>>, vector<128x32xf32>
    %c0_7 = arith.constant 0 : index
    %c0_8 = arith.constant 0 : index
    %4 = vector.load %arg4[%c0_7, %c0_8] : memref<32x128xf32, #tpu.memory_space<vmem>>, vector<32x128xf32>
    %c0_9 = arith.constant 0 : index
    %c0_10 = arith.constant 0 : index
    %5 = vector.load %arg5[%c0_9, %c0_10] : memref<32x32xf32, #tpu.memory_space<vmem>>, vector<32x32xf32>
    %cst = arith.constant dense<0.000000e+00> : vector<8x32xf32>
    %6 = tpu.matmul %0, %1, %cst {dimension_numbers = #tpu.dot_dimension_numbers<[1], [0], [0], [1], [0, 0, 1, 1], [], []>} : vector<8x2xf32>, vector<2x32xf32>, vector<8x32xf32> -> vector<8x32xf32>
    %cst_11 = arith.constant dense<0.000000e+00> : vector<128x32xf32>
    %7 = tpu.matmul %2, %6, %cst_11 {dimension_numbers = #tpu.dot_dimension_numbers<[1], [0], [0], [1], [0, 0, 1, 1], [], []>} : vector<128x8xf32>, vector<8x32xf32>, vector<128x32xf32> -> vector<128x32xf32>
    %8 = arith.mulf %7, %3 : vector<128x32xf32>
    %cst_12 = arith.constant dense<0.000000e+00> : vector<32x32xf32>
    %9 = tpu.matmul %4, %8, %cst_12 {dimension_numbers = #tpu.dot_dimension_numbers<[1], [0], [0], [1], [0, 0, 1, 1], [], []>} : vector<32x128xf32>, vector<128x32xf32>, vector<32x32xf32> -> vector<32x32xf32>
    %10 = arith.addf %9, %5 : vector<32x32xf32>
    %c0_13 = arith.constant 0 : index
    %c0_14 = arith.constant 0 : index
    %11 = vector.load %arg6[%c0_13, %c0_14] : memref<32x32xf32, #tpu.memory_space<vmem>>, vector<32x32xf32>
    %c0_15 = arith.constant 0 : index
    %c0_16 = arith.constant 0 : index
    %12 = vector.load %arg7[%c0_15, %c0_16] : memref<32x2xf32, #tpu.memory_space<vmem>>, vector<32x2xf32>
    %c0_17 = arith.constant 0 : index
    %c0_18 = arith.constant 0 : index
    %13 = vector.load %arg8[%c0_17, %c0_18] : memref<2x32xf32, #tpu.memory_space<vmem>>, vector<2x32xf32>
    %c0_19 = arith.constant 0 : index
    %c0_20 = arith.constant 0 : index
    %14 = vector.load %arg9[%c0_19, %c0_20] : memref<32x1xf32, #tpu.memory_space<vmem>>, vector<32x1xf32>
    %c0_21 = arith.constant 0 : index
    %c0_22 = arith.constant 0 : index
    %15 = vector.load %arg10[%c0_21, %c0_22] : memref<32x1xf32, #tpu.memory_space<vmem>>, vector<32x1xf32>
    %cst_23 = arith.constant dense<0.000000e+00> : vector<32x2xf32>
    %16 = tpu.matmul %10, %12, %cst_23 {dimension_numbers = #tpu.dot_dimension_numbers<[1], [0], [0], [1], [0, 0, 1, 1], [], []>} : vector<32x32xf32>, vector<32x2xf32>, vector<32x2xf32> -> vector<32x2xf32>
    %17 = arith.mulf %10, %10 : vector<32x32xf32>
    %cst_24 = arith.constant dense<0.000000e+00> : vector<32x2xf32>
    %18 = tpu.matmul %17, %12, %cst_24 {dimension_numbers = #tpu.dot_dimension_numbers<[1], [0], [0], [1], [0, 0, 1, 1], [], []>} : vector<32x32xf32>, vector<32x2xf32>, vector<32x2xf32> -> vector<32x2xf32>
    %cst_25 = arith.constant dense<0.000000e+00> : vector<32x2xf32>
    %19 = tpu.matmul %11, %16, %cst_25 {dimension_numbers = #tpu.dot_dimension_numbers<[1], [0], [0], [1], [0, 0, 1, 1], [], []>} : vector<32x32xf32>, vector<32x2xf32>, vector<32x2xf32> -> vector<32x2xf32>
    %cst_26 = arith.constant 7.812500e-03 : f32
    %20 = vector.broadcast %cst_26 : f32 to vector<32x2xf32>
    %21 = arith.mulf %19, %20 : vector<32x2xf32>
    %cst_27 = arith.constant dense<0.000000e+00> : vector<32x2xf32>
    %22 = tpu.matmul %11, %18, %cst_27 {dimension_numbers = #tpu.dot_dimension_numbers<[1], [0], [0], [1], [0, 0, 1, 1], [], []>} : vector<32x32xf32>, vector<32x2xf32>, vector<32x2xf32> -> vector<32x2xf32>
    %cst_28 = arith.constant 7.812500e-03 : f32
    %23 = vector.broadcast %cst_28 : f32 to vector<32x2xf32>
    %24 = arith.mulf %22, %23 : vector<32x2xf32>
    %cst_29 = arith.constant dense<0.000000e+00> : vector<32x32xf32>
    %25 = tpu.matmul %21, %13, %cst_29 {dimension_numbers = #tpu.dot_dimension_numbers<[1], [0], [0], [1], [0, 0, 1, 1], [], []>} : vector<32x2xf32>, vector<2x32xf32>, vector<32x32xf32> -> vector<32x32xf32>
    %cst_30 = arith.constant dense<0.000000e+00> : vector<32x32xf32>
    %26 = tpu.matmul %24, %13, %cst_30 {dimension_numbers = #tpu.dot_dimension_numbers<[1], [0], [0], [1], [0, 0, 1, 1], [], []>} : vector<32x2xf32>, vector<2x32xf32>, vector<32x32xf32> -> vector<32x32xf32>
    %27 = arith.mulf %25, %25 : vector<32x32xf32>
    %28 = arith.subf %26, %27 : vector<32x32xf32>
    %cst_31 = arith.constant 0.000000e+00 : f32
    %29 = vector.broadcast %cst_31 : f32 to vector<32x32xf32>
    %30 = arith.maximumf %28, %29 : vector<32x32xf32>
    %31 = arith.subf %10, %25 : vector<32x32xf32>
    %cst_32 = arith.constant 9.99999974E-6 : f32
    %32 = vector.broadcast %cst_32 : f32 to vector<32x32xf32>
    %33 = arith.addf %30, %32 : vector<32x32xf32>
    %34 = math.rsqrt %33 : vector<32x32xf32>
    %35 = arith.mulf %31, %34 : vector<32x32xf32>
    %36 = vector.broadcast %14 : vector<32x1xf32> to vector<32x32xf32>
    %37 = arith.mulf %35, %36 : vector<32x32xf32>
    %38 = vector.broadcast %15 : vector<32x1xf32> to vector<32x32xf32>
    %39 = arith.addf %37, %38 : vector<32x32xf32>
    %cst_33 = arith.constant 0.000000e+00 : f32
    %40 = vector.broadcast %cst_33 : f32 to vector<32x32xf32>
    %41 = arith.maximumf %39, %40 : vector<32x32xf32>
    %cst_34 = arith.constant 0.000000e+00 : f32
    %42 = vector.broadcast %cst_34 : f32 to vector<32x32xf32>
    %43 = arith.minimumf %39, %42 : vector<32x32xf32>
    %44 = math.exp %43 : vector<32x32xf32>
    %cst_35 = arith.constant 1.000000e+00 : f32
    %45 = vector.broadcast %cst_35 : f32 to vector<32x32xf32>
    %46 = arith.subf %44, %45 : vector<32x32xf32>
    %cst_36 = arith.constant 0.000000e+00 : f32
    %47 = vector.broadcast %cst_36 : f32 to vector<32x32xf32>
    %48 = arith.minimumf %47, %46 : vector<32x32xf32>
    %49 = arith.addf %41, %48 : vector<32x32xf32>
    %c0_37 = arith.constant 0 : index
    %c0_38 = arith.constant 0 : index
    %50 = vector.load %arg11[%c0_37, %c0_38] : memref<9x32xf32, #tpu.memory_space<vmem>>, vector<9x32xf32>
    %c0_39 = arith.constant 0 : index
    %c0_40 = arith.constant 0 : index
    %51 = vector.load %arg12[%c0_39, %c0_40] : memref<64x288xf32, #tpu.memory_space<vmem>>, vector<64x288xf32>
    %c0_41 = arith.constant 0 : index
    %c0_42 = arith.constant 0 : index
    %52 = vector.load %arg13[%c0_41, %c0_42] : memref<64x1xf32, #tpu.memory_space<vmem>>, vector<64x1xf32>
    %c10_i32 = arith.constant 10 : i32
    %53 = tpu.dynamic_rotate %49 by %c10_i32 dim 1 : vector<32x32xf32>, i32 -> vector<32x32xf32>
    %54 = vector.extract_strided_slice %50 {offsets = [0, 0], sizes = [1, 32], strides = [1, 1]} : vector<9x32xf32> to vector<1x32xf32>
    %55 = vector.broadcast %54 : vector<1x32xf32> to vector<32x32xf32>
    %56 = arith.mulf %53, %55 : vector<32x32xf32>
    %c8_i32 = arith.constant 8 : i32
    %57 = tpu.dynamic_rotate %49 by %c8_i32 dim 1 : vector<32x32xf32>, i32 -> vector<32x32xf32>
    %58 = vector.extract_strided_slice %50 {offsets = [1, 0], sizes = [1, 32], strides = [1, 1]} : vector<9x32xf32> to vector<1x32xf32>
    %59 = vector.broadcast %58 : vector<1x32xf32> to vector<32x32xf32>
    %60 = arith.mulf %57, %59 : vector<32x32xf32>
    %c6_i32 = arith.constant 6 : i32
    %61 = tpu.dynamic_rotate %49 by %c6_i32 dim 1 : vector<32x32xf32>, i32 -> vector<32x32xf32>
    %62 = vector.extract_strided_slice %50 {offsets = [2, 0], sizes = [1, 32], strides = [1, 1]} : vector<9x32xf32> to vector<1x32xf32>
    %63 = vector.broadcast %62 : vector<1x32xf32> to vector<32x32xf32>
    %64 = arith.mulf %61, %63 : vector<32x32xf32>
    %c2_i32 = arith.constant 2 : i32
    %65 = tpu.dynamic_rotate %49 by %c2_i32 dim 1 : vector<32x32xf32>, i32 -> vector<32x32xf32>
    %66 = vector.extract_strided_slice %50 {offsets = [3, 0], sizes = [1, 32], strides = [1, 1]} : vector<9x32xf32> to vector<1x32xf32>
    %67 = vector.broadcast %66 : vector<1x32xf32> to vector<32x32xf32>
    %68 = arith.mulf %65, %67 : vector<32x32xf32>
    %c30_i32 = arith.constant 30 : i32
    %69 = tpu.dynamic_rotate %49 by %c30_i32 dim 1 : vector<32x32xf32>, i32 -> vector<32x32xf32>
    %70 = vector.extract_strided_slice %50 {offsets = [5, 0], sizes = [1, 32], strides = [1, 1]} : vector<9x32xf32> to vector<1x32xf32>
    %71 = vector.broadcast %70 : vector<1x32xf32> to vector<32x32xf32>
    %72 = arith.mulf %69, %71 : vector<32x32xf32>
    %c26_i32 = arith.constant 26 : i32
    %73 = tpu.dynamic_rotate %49 by %c26_i32 dim 1 : vector<32x32xf32>, i32 -> vector<32x32xf32>
    %74 = vector.extract_strided_slice %50 {offsets = [6, 0], sizes = [1, 32], strides = [1, 1]} : vector<9x32xf32> to vector<1x32xf32>
    %75 = vector.broadcast %74 : vector<1x32xf32> to vector<32x32xf32>
    %76 = arith.mulf %73, %75 : vector<32x32xf32>
    %c24_i32 = arith.constant 24 : i32
    %77 = tpu.dynamic_rotate %49 by %c24_i32 dim 1 : vector<32x32xf32>, i32 -> vector<32x32xf32>
    %78 = vector.extract_strided_slice %50 {offsets = [7, 0], sizes = [1, 32], strides = [1, 1]} : vector<9x32xf32> to vector<1x32xf32>
    %79 = vector.broadcast %78 : vector<1x32xf32> to vector<32x32xf32>
    %80 = arith.mulf %77, %79 : vector<32x32xf32>
    %c22_i32 = arith.constant 22 : i32
    %81 = tpu.dynamic_rotate %49 by %c22_i32 dim 1 : vector<32x32xf32>, i32 -> vector<32x32xf32>
    %82 = vector.extract_strided_slice %50 {offsets = [8, 0], sizes = [1, 32], strides = [1, 1]} : vector<9x32xf32> to vector<1x32xf32>
    %83 = vector.broadcast %82 : vector<1x32xf32> to vector<32x32xf32>
    %84 = arith.mulf %81, %83 : vector<32x32xf32>
    %85 = tpu.concatenate %56, %60, %64, %68, %49, %72, %76, %80, %84 in 0 : vector<32x32xf32>, vector<32x32xf32>, vector<32x32xf32>, vector<32x32xf32>, vector<32x32xf32>, vector<32x32xf32>, vector<32x32xf32>, vector<32x32xf32>, vector<32x32xf32> -> vector<288x32xf32>
    %cst_43 = arith.constant dense<0.000000e+00> : vector<64x32xf32>
    %86 = tpu.matmul %51, %85, %cst_43 {dimension_numbers = #tpu.dot_dimension_numbers<[1], [0], [0], [1], [0, 0, 1, 1], [], []>} : vector<64x288xf32>, vector<288x32xf32>, vector<64x32xf32> -> vector<64x32xf32>
    %87 = vector.broadcast %52 : vector<64x1xf32> to vector<64x32xf32>
    %88 = arith.addf %86, %87 : vector<64x32xf32>
    %89 = vector.extract_strided_slice %88 {offsets = [0, 0], sizes = [16, 32], strides = [1, 1]} : vector<64x32xf32> to vector<16x32xf32>
    %c0_44 = arith.constant 0 : index
    %c0_45 = arith.constant 0 : index
    %c0_46 = arith.constant 0 : index
    %90 = vector.load %arg14[%c0_44, %c0_45, %c0_46] : memref<4x32x128xf32, #tpu.memory_space<vmem>>, vector<1x32x128xf32>
    %91 = vector.shape_cast %90 : vector<1x32x128xf32> to vector<32x128xf32>
    %cst_47 = arith.constant dense<0.000000e+00> : vector<16x128xf32>
    %92 = tpu.matmul %89, %91, %cst_47 {dimension_numbers = #tpu.dot_dimension_numbers<[1], [0], [0], [1], [0, 0, 1, 1], [], []>} : vector<16x32xf32>, vector<32x128xf32>, vector<16x128xf32> -> vector<16x128xf32>
    %93 = vector.extract_strided_slice %88 {offsets = [16, 0], sizes = [16, 32], strides = [1, 1]} : vector<64x32xf32> to vector<16x32xf32>
    %c1 = arith.constant 1 : index
    %c0_48 = arith.constant 0 : index
    %c0_49 = arith.constant 0 : index
    %94 = vector.load %arg14[%c1, %c0_48, %c0_49] : memref<4x32x128xf32, #tpu.memory_space<vmem>>, vector<1x32x128xf32>
    %95 = vector.shape_cast %94 : vector<1x32x128xf32> to vector<32x128xf32>
    %cst_50 = arith.constant dense<0.000000e+00> : vector<16x128xf32>
    %96 = tpu.matmul %93, %95, %cst_50 {dimension_numbers = #tpu.dot_dimension_numbers<[1], [0], [0], [1], [0, 0, 1, 1], [], []>} : vector<16x32xf32>, vector<32x128xf32>, vector<16x128xf32> -> vector<16x128xf32>
    %97 = arith.addf %92, %96 : vector<16x128xf32>
    %98 = vector.extract_strided_slice %88 {offsets = [32, 0], sizes = [16, 32], strides = [1, 1]} : vector<64x32xf32> to vector<16x32xf32>
    %c2 = arith.constant 2 : index
    %c0_51 = arith.constant 0 : index
    %c0_52 = arith.constant 0 : index
    %99 = vector.load %arg14[%c2, %c0_51, %c0_52] : memref<4x32x128xf32, #tpu.memory_space<vmem>>, vector<1x32x128xf32>
    %100 = vector.shape_cast %99 : vector<1x32x128xf32> to vector<32x128xf32>
    %cst_53 = arith.constant dense<0.000000e+00> : vector<16x128xf32>
    %101 = tpu.matmul %98, %100, %cst_53 {dimension_numbers = #tpu.dot_dimension_numbers<[1], [0], [0], [1], [0, 0, 1, 1], [], []>} : vector<16x32xf32>, vector<32x128xf32>, vector<16x128xf32> -> vector<16x128xf32>
    %102 = arith.addf %97, %101 : vector<16x128xf32>
    %103 = vector.extract_strided_slice %88 {offsets = [48, 0], sizes = [16, 32], strides = [1, 1]} : vector<64x32xf32> to vector<16x32xf32>
    %c3 = arith.constant 3 : index
    %c0_54 = arith.constant 0 : index
    %c0_55 = arith.constant 0 : index
    %104 = vector.load %arg14[%c3, %c0_54, %c0_55] : memref<4x32x128xf32, #tpu.memory_space<vmem>>, vector<1x32x128xf32>
    %105 = vector.shape_cast %104 : vector<1x32x128xf32> to vector<32x128xf32>
    %cst_56 = arith.constant dense<0.000000e+00> : vector<16x128xf32>
    %106 = tpu.matmul %103, %105, %cst_56 {dimension_numbers = #tpu.dot_dimension_numbers<[1], [0], [0], [1], [0, 0, 1, 1], [], []>} : vector<16x32xf32>, vector<32x128xf32>, vector<16x128xf32> -> vector<16x128xf32>
    %107 = arith.addf %102, %106 : vector<16x128xf32>
    %c0_57 = arith.constant 0 : index
    %c0_58 = arith.constant 0 : index
    %108 = vector.load %arg15[%c0_57, %c0_58] : memref<16x16xf32, #tpu.memory_space<vmem>>, vector<16x16xf32>
    %c0_59 = arith.constant 0 : index
    %c0_60 = arith.constant 0 : index
    %109 = vector.load %arg16[%c0_59, %c0_60] : memref<128x2xf32, #tpu.memory_space<vmem>>, vector<128x2xf32>
    %c0_61 = arith.constant 0 : index
    %c0_62 = arith.constant 0 : index
    %110 = vector.load %arg17[%c0_61, %c0_62] : memref<2x128xf32, #tpu.memory_space<vmem>>, vector<2x128xf32>
    %c0_63 = arith.constant 0 : index
    %c0_64 = arith.constant 0 : index
    %111 = vector.load %arg18[%c0_63, %c0_64] : memref<16x1xf32, #tpu.memory_space<vmem>>, vector<16x1xf32>
    %c0_65 = arith.constant 0 : index
    %c0_66 = arith.constant 0 : index
    %112 = vector.load %arg19[%c0_65, %c0_66] : memref<16x1xf32, #tpu.memory_space<vmem>>, vector<16x1xf32>
    %cst_67 = arith.constant dense<0.000000e+00> : vector<16x2xf32>
    %113 = tpu.matmul %107, %109, %cst_67 {dimension_numbers = #tpu.dot_dimension_numbers<[1], [0], [0], [1], [0, 0, 1, 1], [], []>} : vector<16x128xf32>, vector<128x2xf32>, vector<16x2xf32> -> vector<16x2xf32>
    %114 = arith.mulf %107, %107 : vector<16x128xf32>
    %cst_68 = arith.constant dense<0.000000e+00> : vector<16x2xf32>
    %115 = tpu.matmul %114, %109, %cst_68 {dimension_numbers = #tpu.dot_dimension_numbers<[1], [0], [0], [1], [0, 0, 1, 1], [], []>} : vector<16x128xf32>, vector<128x2xf32>, vector<16x2xf32> -> vector<16x2xf32>
    %cst_69 = arith.constant dense<0.000000e+00> : vector<16x2xf32>
    %116 = tpu.matmul %108, %113, %cst_69 {dimension_numbers = #tpu.dot_dimension_numbers<[1], [0], [0], [1], [0, 0, 1, 1], [], []>} : vector<16x16xf32>, vector<16x2xf32>, vector<16x2xf32> -> vector<16x2xf32>
    %cst_70 = arith.constant 3.906250e-03 : f32
    %117 = vector.broadcast %cst_70 : f32 to vector<16x2xf32>
    %118 = arith.mulf %116, %117 : vector<16x2xf32>
    %cst_71 = arith.constant dense<0.000000e+00> : vector<16x2xf32>
    %119 = tpu.matmul %108, %115, %cst_71 {dimension_numbers = #tpu.dot_dimension_numbers<[1], [0], [0], [1], [0, 0, 1, 1], [], []>} : vector<16x16xf32>, vector<16x2xf32>, vector<16x2xf32> -> vector<16x2xf32>
    %cst_72 = arith.constant 3.906250e-03 : f32
    %120 = vector.broadcast %cst_72 : f32 to vector<16x2xf32>
    %121 = arith.mulf %119, %120 : vector<16x2xf32>
    %cst_73 = arith.constant dense<0.000000e+00> : vector<16x128xf32>
    %122 = tpu.matmul %118, %110, %cst_73 {dimension_numbers = #tpu.dot_dimension_numbers<[1], [0], [0], [1], [0, 0, 1, 1], [], []>} : vector<16x2xf32>, vector<2x128xf32>, vector<16x128xf32> -> vector<16x128xf32>
    %cst_74 = arith.constant dense<0.000000e+00> : vector<16x128xf32>
    %123 = tpu.matmul %121, %110, %cst_74 {dimension_numbers = #tpu.dot_dimension_numbers<[1], [0], [0], [1], [0, 0, 1, 1], [], []>} : vector<16x2xf32>, vector<2x128xf32>, vector<16x128xf32> -> vector<16x128xf32>
    %124 = arith.mulf %122, %122 : vector<16x128xf32>
    %125 = arith.subf %123, %124 : vector<16x128xf32>
    %cst_75 = arith.constant 0.000000e+00 : f32
    %126 = vector.broadcast %cst_75 : f32 to vector<16x128xf32>
    %127 = arith.maximumf %125, %126 : vector<16x128xf32>
    %128 = arith.subf %107, %122 : vector<16x128xf32>
    %cst_76 = arith.constant 9.99999974E-6 : f32
    %129 = vector.broadcast %cst_76 : f32 to vector<16x128xf32>
    %130 = arith.addf %127, %129 : vector<16x128xf32>
    %131 = math.rsqrt %130 : vector<16x128xf32>
    %132 = arith.mulf %128, %131 : vector<16x128xf32>
    %133 = vector.broadcast %111 : vector<16x1xf32> to vector<16x128xf32>
    %134 = arith.mulf %132, %133 : vector<16x128xf32>
    %135 = vector.broadcast %112 : vector<16x1xf32> to vector<16x128xf32>
    %136 = arith.addf %134, %135 : vector<16x128xf32>
    %cst_77 = arith.constant 0.000000e+00 : f32
    %137 = vector.broadcast %cst_77 : f32 to vector<16x128xf32>
    %138 = arith.maximumf %136, %137 : vector<16x128xf32>
    %cst_78 = arith.constant 0.000000e+00 : f32
    %139 = vector.broadcast %cst_78 : f32 to vector<16x128xf32>
    %140 = arith.minimumf %136, %139 : vector<16x128xf32>
    %141 = math.exp %140 : vector<16x128xf32>
    %cst_79 = arith.constant 1.000000e+00 : f32
    %142 = vector.broadcast %cst_79 : f32 to vector<16x128xf32>
    %143 = arith.subf %141, %142 : vector<16x128xf32>
    %cst_80 = arith.constant 0.000000e+00 : f32
    %144 = vector.broadcast %cst_80 : f32 to vector<16x128xf32>
    %145 = arith.minimumf %144, %143 : vector<16x128xf32>
    %146 = arith.addf %138, %145 : vector<16x128xf32>
    %c0_81 = arith.constant 0 : index
    %c0_82 = arith.constant 0 : index
    %147 = vector.load %arg20[%c0_81, %c0_82] : memref<9x128xf32, #tpu.memory_space<vmem>>, vector<9x128xf32>
    %c0_83 = arith.constant 0 : index
    %c0_84 = arith.constant 0 : index
    %148 = vector.load %arg21[%c0_83, %c0_84] : memref<12x144xf32, #tpu.memory_space<vmem>>, vector<12x144xf32>
    %c0_85 = arith.constant 0 : index
    %c0_86 = arith.constant 0 : index
    %149 = vector.load %arg22[%c0_85, %c0_86] : memref<12x1xf32, #tpu.memory_space<vmem>>, vector<12x1xf32>
    %c18_i32 = arith.constant 18 : i32
    %150 = tpu.dynamic_rotate %146 by %c18_i32 dim 1 : vector<16x128xf32>, i32 -> vector<16x128xf32>
    %151 = vector.extract_strided_slice %147 {offsets = [0, 0], sizes = [1, 128], strides = [1, 1]} : vector<9x128xf32> to vector<1x128xf32>
    %152 = vector.broadcast %151 : vector<1x128xf32> to vector<16x128xf32>
    %153 = arith.mulf %150, %152 : vector<16x128xf32>
    %c16_i32 = arith.constant 16 : i32
    %154 = tpu.dynamic_rotate %146 by %c16_i32 dim 1 : vector<16x128xf32>, i32 -> vector<16x128xf32>
    %155 = vector.extract_strided_slice %147 {offsets = [1, 0], sizes = [1, 128], strides = [1, 1]} : vector<9x128xf32> to vector<1x128xf32>
    %156 = vector.broadcast %155 : vector<1x128xf32> to vector<16x128xf32>
    %157 = arith.mulf %154, %156 : vector<16x128xf32>
    %c14_i32 = arith.constant 14 : i32
    %158 = tpu.dynamic_rotate %146 by %c14_i32 dim 1 : vector<16x128xf32>, i32 -> vector<16x128xf32>
    %159 = vector.extract_strided_slice %147 {offsets = [2, 0], sizes = [1, 128], strides = [1, 1]} : vector<9x128xf32> to vector<1x128xf32>
    %160 = vector.broadcast %159 : vector<1x128xf32> to vector<16x128xf32>
    %161 = arith.mulf %158, %160 : vector<16x128xf32>
    %c2_i32_87 = arith.constant 2 : i32
    %162 = tpu.dynamic_rotate %146 by %c2_i32_87 dim 1 : vector<16x128xf32>, i32 -> vector<16x128xf32>
    %163 = vector.extract_strided_slice %147 {offsets = [3, 0], sizes = [1, 128], strides = [1, 1]} : vector<9x128xf32> to vector<1x128xf32>
    %164 = vector.broadcast %163 : vector<1x128xf32> to vector<16x128xf32>
    %165 = arith.mulf %162, %164 : vector<16x128xf32>
    %c126_i32 = arith.constant 126 : i32
    %166 = tpu.dynamic_rotate %146 by %c126_i32 dim 1 : vector<16x128xf32>, i32 -> vector<16x128xf32>
    %167 = vector.extract_strided_slice %147 {offsets = [5, 0], sizes = [1, 128], strides = [1, 1]} : vector<9x128xf32> to vector<1x128xf32>
    %168 = vector.broadcast %167 : vector<1x128xf32> to vector<16x128xf32>
    %169 = arith.mulf %166, %168 : vector<16x128xf32>
    %c114_i32 = arith.constant 114 : i32
    %170 = tpu.dynamic_rotate %146 by %c114_i32 dim 1 : vector<16x128xf32>, i32 -> vector<16x128xf32>
    %171 = vector.extract_strided_slice %147 {offsets = [6, 0], sizes = [1, 128], strides = [1, 1]} : vector<9x128xf32> to vector<1x128xf32>
    %172 = vector.broadcast %171 : vector<1x128xf32> to vector<16x128xf32>
    %173 = arith.mulf %170, %172 : vector<16x128xf32>
    %c112_i32 = arith.constant 112 : i32
    %174 = tpu.dynamic_rotate %146 by %c112_i32 dim 1 : vector<16x128xf32>, i32 -> vector<16x128xf32>
    %175 = vector.extract_strided_slice %147 {offsets = [7, 0], sizes = [1, 128], strides = [1, 1]} : vector<9x128xf32> to vector<1x128xf32>
    %176 = vector.broadcast %175 : vector<1x128xf32> to vector<16x128xf32>
    %177 = arith.mulf %174, %176 : vector<16x128xf32>
    %c110_i32 = arith.constant 110 : i32
    %178 = tpu.dynamic_rotate %146 by %c110_i32 dim 1 : vector<16x128xf32>, i32 -> vector<16x128xf32>
    %179 = vector.extract_strided_slice %147 {offsets = [8, 0], sizes = [1, 128], strides = [1, 1]} : vector<9x128xf32> to vector<1x128xf32>
    %180 = vector.broadcast %179 : vector<1x128xf32> to vector<16x128xf32>
    %181 = arith.mulf %178, %180 : vector<16x128xf32>
    %182 = tpu.concatenate %153, %157, %161, %165, %146, %169, %173, %177, %181 in 0 : vector<16x128xf32>, vector<16x128xf32>, vector<16x128xf32>, vector<16x128xf32>, vector<16x128xf32>, vector<16x128xf32>, vector<16x128xf32>, vector<16x128xf32>, vector<16x128xf32> -> vector<144x128xf32>
    %cst_88 = arith.constant dense<0.000000e+00> : vector<12x128xf32>
    %183 = tpu.matmul %148, %182, %cst_88 {dimension_numbers = #tpu.dot_dimension_numbers<[1], [0], [0], [1], [0, 0, 1, 1], [], []>} : vector<12x144xf32>, vector<144x128xf32>, vector<12x128xf32> -> vector<12x128xf32>
    %184 = vector.broadcast %149 : vector<12x1xf32> to vector<12x128xf32>
    %185 = arith.addf %183, %184 : vector<12x128xf32>
    %186 = math.absf %185 : vector<12x128xf32>
    %cst_89 = arith.constant 0.000000e+00 : f32
    %187 = vector.broadcast %cst_89 : f32 to vector<12x128xf32>
    %188 = arith.subf %187, %186 : vector<12x128xf32>
    %189 = math.exp %188 : vector<12x128xf32>
    %cst_90 = arith.constant 0.000000e+00 : f32
    %190 = vector.broadcast %cst_90 : f32 to vector<12x128xf32>
    %191 = arith.cmpf oge, %185, %190 : vector<12x128xf32>
    %cst_91 = arith.constant 1.000000e+00 : f32
    %192 = vector.broadcast %cst_91 : f32 to vector<12x128xf32>
    %193 = arith.addf %192, %189 : vector<12x128xf32>
    %cst_92 = arith.constant 1.000000e+00 : f32
    %194 = vector.broadcast %cst_92 : f32 to vector<12x128xf32>
    %195 = arith.divf %194, %193 : vector<12x128xf32>
    %cst_93 = arith.constant 1.000000e+00 : f32
    %196 = vector.broadcast %cst_93 : f32 to vector<12x128xf32>
    %197 = arith.addf %196, %189 : vector<12x128xf32>
    %198 = arith.divf %189, %197 : vector<12x128xf32>
    %199 = arith.select %191, %195, %198 : vector<12x128xi1>, vector<12x128xf32>
    %c0_94 = arith.constant 0 : index
    %c0_95 = arith.constant 0 : index
    %200 = vector.load %arg23[%c0_94, %c0_95] : memref<12x128xf32, #tpu.memory_space<vmem>>, vector<12x128xf32>
    tpu.vector_store %arg23[%c0_94, %c0_95], %199 {strides = array<i32>} : memref<12x128xf32, #tpu.memory_space<vmem>>, vector<12x128xf32>,
    return
  }
}

</mosaic_0001>

<llo_original>
// kernel: _lambda_.1
$region0: #{_lambda_.1}
  #allocation0 [shape = 'u32[]', space=smem, size = 0x4, offset = 0x4, fixed_abs, tag = 'smem constant byte address 0x4 - core index']
  #allocation1 [shape = 'u32[144,128]{1,0:T(1,128)}', space=vmem, size = 0x12000, scoped, tag = 'internal scratch']
  %s0 = inlined_call_operand.vmem [shape: f32[8,2], index: 0, kind: input, shape index: {}]
  %s1 = inlined_call_operand.vmem [shape: f32[2,32], index: 1, kind: input, shape index: {}, may-alias: {1,8}]
  %s2 = inlined_call_operand.hbm [shape: f32[128,8], index: 2, kind: input, shape index: {}]
  %s3 = inlined_call_operand.hbm [shape: f32[128,32], index: 3, kind: input, shape index: {}]
  %s4 = inlined_call_operand.hbm [shape: f32[32,128], index: 4, kind: input, shape index: {}]
  %s5 = inlined_call_operand.vmem [shape: f32[32,32], index: 5, kind: input, shape index: {}]
  %s6 = inlined_call_operand.hbm [shape: f32[32,32], index: 6, kind: input, shape index: {}]
  %s7 = inlined_call_operand.hbm [shape: f32[32,2], index: 7, kind: input, shape index: {}]
  %s8 = inlined_call_operand.vmem [shape: f32[2,32], index: 8, kind: input, shape index: {}, may-alias: {1,8}]
  %s9 = inlined_call_operand.vmem [shape: f32[32,1], index: 9, kind: input, shape index: {}]
  %s10 = inlined_call_operand.vmem [shape: f32[32,1], index: 10, kind: input, shape index: {}]
  %s11 = inlined_call_operand.hbm [shape: f32[9,32], index: 11, kind: input, shape index: {}]
  %s12 = inlined_call_operand.vmem [shape: f32[64,288], index: 12, kind: input, shape index: {}]
  %s13 = inlined_call_operand.vmem [shape: f32[64,1], index: 13, kind: input, shape index: {}]
  %s14 = inlined_call_operand.hbm [shape: f32[4,32,128], index: 14, kind: input, shape index: {}]
  %s15 = inlined_call_operand.hbm [shape: f32[16,16], index: 15, kind: input, shape index: {}]
  %s16 = inlined_call_operand.vmem [shape: f32[128,2], index: 16, kind: input, shape index: {}]
  %s17 = inlined_call_operand.vmem [shape: f32[2,128], index: 17, kind: input, shape index: {}]
  %s18 = inlined_call_operand.vmem [shape: f32[16,1], index: 18, kind: input, shape index: {}]
  %s19 = inlined_call_operand.vmem [shape: f32[16,1], index: 19, kind: input, shape index: {}]
  %s20 = inlined_call_operand.vmem [shape: f32[9,128], index: 20, kind: input, shape index: {}]
  %s21 = inlined_call_operand.vmem [shape: f32[12,144], index: 21, kind: input, shape index: {}]
  %s22 = inlined_call_operand.vmem [shape: f32[12,1], index: 22, kind: input, shape index: {}]
  %s23 = inlined_call_operand.vmem [shape: f32[12,128], index: 23, kind: output, shape index: {}]
  %s24 = sld [smem:[#allocation0]]
  $region134: #{_lambda_.1} parent=0
    _
  %s26 = ssub.s32 1, %s24
  %s27 = scalar_select 0, %s26, %s24
  $region1: #{_lambda_.1} parent=0
    #allocation2 [shape = 'u8[65536]{0}', space=vmem, size = 0x10000, scoped, tag = 'input window, operand 2, single buffered']
    #allocation3 [shape = 's32[1]{0}', space=sflag, size = 0x4, scoped, tag = 'scoped memory for _lambda_.1']
    #allocation4 [shape = 'u8[65536]{0}', space=vmem, size = 0x10000, scoped, tag = 'input window, operand 3, single buffered']
    #allocation5 [shape = 's32[1]{0}', space=sflag, size = 0x4, scoped, tag = 'scoped memory for _lambda_.1']
    #allocation6 [shape = 'u8[16384]{0}', space=vmem, size = 0x4000, scoped, tag = 'input window, operand 4, single buffered']
    #allocation7 [shape = 'u8[16384]{0}', space=vmem, size = 0x4000, scoped, tag = 'input window, operand 6, single buffered']
    #allocation8 [shape = 's32[1]{0}', space=sflag, size = 0x4, scoped, tag = 'scoped memory for _lambda_.1']
    #allocation9 [shape = 'u8[16384]{0}', space=vmem, size = 0x4000, scoped, tag = 'input window, operand 7, single buffered']
    #allocation10 [shape = 'u8[8192]{0}', space=vmem, size = 0x2000, scoped, tag = 'input window, operand 11, single buffered']
    #allocation11 [shape = 's32[1]{0}', space=sflag, size = 0x4, scoped, tag = 'scoped memory for _lambda_.1']
    #allocation12 [shape = 'u8[65536]{0}', space=vmem, size = 0x10000, scoped, tag = 'input window, operand 14, single buffered']
    #allocation13 [shape = 'u8[8192]{0}', space=vmem, size = 0x2000, scoped, tag = 'input window, operand 15, single buffered']
    #allocation14 [shape = 's32[1]{0}', space=sflag, size = 0x4, scoped, tag = 'scoped memory for _lambda_.1']
    %28 = vsyncpa [#allocation3], 0
    %29 = vsyncpa [#allocation5], 0
    %30 = vsyncpa [#allocation8], 0
    %31 = vsyncpa [#allocation11], 0
    %32 = vsyncpa [#allocation14], 0
    // Predicated region
    $region2: #{_lambda_.1} parent=1 // pred_check
      _
    $region3: #{_lambda_.1} parent=1 // pred_check_branch
      %34 = sbr.rel (0) target = $region5
    $region4: #{_lambda_.1} parent=1 // pred_region
      _
    $region5: #{_lambda_.1} parent=1 // pred_fallthru
      _
    // Predicated region
    $region6: #{_lambda_.1} parent=1 // pred_check
      _
    $region7: #{_lambda_.1} parent=1 // pred_check_branch
      %36 = sbr.rel (0) target = $region9
    $region8: #{_lambda_.1} parent=1 // pred_region
      _
    $region9: #{_lambda_.1} parent=1 // pred_fallthru
      _
    // Predicated region
    $region10: #{_lambda_.1} parent=1 // pred_check
      _
    $region11: #{_lambda_.1} parent=1 // pred_check_branch
      %38 = sbr.rel (0) target = $region13
    $region12: #{_lambda_.1} parent=1 // pred_region
      %s40 = ssub.s32 2048, 2048
      %41 = vsyncadd [#allocation3], %s40
      %s42 = sshll.u32 [#allocation2], 4
      %s43 = int_to_ptr.vmem [resolvable:$true] %s42
      %48 = dma.hbm_to_vmem [thread:$0]  %s2, 2048, %s43, [#allocation3], 128, 128, 8
    $region13: #{_lambda_.1} parent=1 // pred_fallthru
      _
    // Predicated region
    $region14: #{_lambda_.1} parent=1 // pred_check
      _
    $region15: #{_lambda_.1} parent=1 // pred_check_branch
      %50 = sbr.rel (0) target = $region17
    $region16: #{_lambda_.1} parent=1 // pred_region
      %s52 = ssub.s32 2048, 2048
      %53 = vsyncadd [#allocation5], %s52
      %s54 = sshll.u32 [#allocation4], 4
      %s55 = int_to_ptr.vmem [resolvable:$true] %s54
      %60 = dma.hbm_to_vmem [thread:$0]  %s3, 2048, %s55, [#allocation5], 128, 128, 8
    $region17: #{_lambda_.1} parent=1 // pred_fallthru
      _
    // Predicated region
    $region18: #{_lambda_.1} parent=1 // pred_check
      _
    $region19: #{_lambda_.1} parent=1 // pred_check_branch
      %62 = sbr.rel (0) target = $region21
    $region20: #{_lambda_.1} parent=1 // pred_region
      %s64 = ssub.s32 512, 512
      %65 = vsyncadd [#allocation5], %s64
      %s66 = sshll.u32 [#allocation6], 4
      %s67 = int_to_ptr.vmem [resolvable:$true] %s66
      %72 = dma.hbm_to_vmem [thread:$0]  %s4, 512, %s67, [#allocation5], 128, 128, 8
    $region21: #{_lambda_.1} parent=1 // pred_fallthru
      _
    // Predicated region
    $region22: #{_lambda_.1} parent=1 // pred_check
      _
    $region23: #{_lambda_.1} parent=1 // pred_check_branch
      %74 = sbr.rel (0) target = $region25
    $region24: #{_lambda_.1} parent=1 // pred_region
      _
    $region25: #{_lambda_.1} parent=1 // pred_fallthru
      _
    // Predicated region
    $region26: #{_lambda_.1} parent=1 // pred_check
      _
    $region27: #{_lambda_.1} parent=1 // pred_check_branch
      %76 = sbr.rel (0) target = $region29
    $region28: #{_lambda_.1} parent=1 // pred_region
      %s78 = ssub.s32 512, 512
      %79 = vsyncadd [#allocation8], %s78
      %s80 = sshll.u32 [#allocation7], 4
      %s81 = int_to_ptr.vmem [resolvable:$true] %s80
      %86 = dma.hbm_to_vmem [thread:$0]  %s6, 512, %s81, [#allocation8], 128, 128, 8
    $region29: #{_lambda_.1} parent=1 // pred_fallthru
      _
    // Predicated region
    $region30: #{_lambda_.1} parent=1 // pred_check
      _
    $region31: #{_lambda_.1} parent=1 // pred_check_branch
      %88 = sbr.rel (0) target = $region33
    $region32: #{_lambda_.1} parent=1 // pred_region
      %s90 = ssub.s32 512, 512
      %91 = vsyncadd [#allocation8], %s90
      %s92 = sshll.u32 [#allocation9], 4
      %s93 = int_to_ptr.vmem [resolvable:$true] %s92
      %98 = dma.hbm_to_vmem [thread:$0]  %s7, 512, %s93, [#allocation8], 128, 128, 8
    $region33: #{_lambda_.1} parent=1 // pred_fallthru
      _
    // Predicated region
    $region34: #{_lambda_.1} parent=1 // pred_check
      _
    $region35: #{_lambda_.1} parent=1 // pred_check_branch
      %100 = sbr.rel (0) target = $region37
    $region36: #{_lambda_.1} parent=1 // pred_region
      _
    $region37: #{_lambda_.1} parent=1 // pred_fallthru
      _
    // Predicated region
    $region38: #{_lambda_.1} parent=1 // pred_check
      _
    $region39: #{_lambda_.1} parent=1 // pred_check_branch
      %102 = sbr.rel (0) target = $region41
    $region40: #{_lambda_.1} parent=1 // pred_region
      _
    $region41: #{_lambda_.1} parent=1 // pred_fallthru
      _
    // Predicated region
    $region42: #{_lambda_.1} parent=1 // pred_check
      _
    $region43: #{_lambda_.1} parent=1 // pred_check_branch
      %104 = sbr.rel (0) target = $region45
    $region44: #{_lambda_.1} parent=1 // pred_region
      _
    $region45: #{_lambda_.1} parent=1 // pred_fallthru
      _
    // Predicated region
    $region46: #{_lambda_.1} parent=1 // pred_check
      _
    $region47: #{_lambda_.1} parent=1 // pred_check_branch
      %106 = sbr.rel (0) target = $region49
    $region48: #{_lambda_.1} parent=1 // pred_region
      %s108 = ssub.s32 256, 256
      %109 = vsyncadd [#allocation11], %s108
      %s110 = sshll.u32 [#allocation10], 4
      %s111 = int_to_ptr.vmem [resolvable:$true] %s110
      %116 = dma.hbm_to_vmem [thread:$0]  %s11, 256, %s111, [#allocation11], 128, 128, 8
    $region49: #{_lambda_.1} parent=1 // pred_fallthru
      _
    // Predicated region
    $region50: #{_lambda_.1} parent=1 // pred_check
      _
    $region51: #{_lambda_.1} parent=1 // pred_check_branch
      %118 = sbr.rel (0) target = $region53
    $region52: #{_lambda_.1} parent=1 // pred_region
      _
    $region53: #{_lambda_.1} parent=1 // pred_fallthru
      _
    // Predicated region
    $region54: #{_lambda_.1} parent=1 // pred_check
      _
    $region55: #{_lambda_.1} parent=1 // pred_check_branch
      %120 = sbr.rel (0) target = $region57
    $region56: #{_lambda_.1} parent=1 // pred_region
      _
    $region57: #{_lambda_.1} parent=1 // pred_fallthru
      _
    // Predicated region
    $region58: #{_lambda_.1} parent=1 // pred_check
      _
    $region59: #{_lambda_.1} parent=1 // pred_check_branch
      %122 = sbr.rel (0) target = $region61
    $region60: #{_lambda_.1} parent=1 // pred_region
      %s124 = ssub.s32 2048, 2048
      %125 = vsyncadd [#allocation11], %s124
      %s126 = sshll.u32 [#allocation12], 4
      %s127 = int_to_ptr.vmem [resolvable:$true] %s126
      %132 = dma.hbm_to_vmem [thread:$0]  %s14, 2048, %s127, [#allocation11], 128, 128, 8
    $region61: #{_lambda_.1} parent=1 // pred_fallthru
      _
    // Predicated region
    $region62: #{_lambda_.1} parent=1 // pred_check
      _
    $region63: #{_lambda_.1} parent=1 // pred_check_branch
      %134 = sbr.rel (0) target = $region65
    $region64: #{_lambda_.1} parent=1 // pred_region
      %s136 = ssub.s32 256, 256
      %137 = vsyncadd [#allocation14], %s136
      %s138 = sshll.u32 [#allocation13], 4
      %s139 = int_to_ptr.vmem [resolvable:$true] %s138
      %144 = dma.hbm_to_vmem [thread:$0]  %s15, 256, %s139, [#allocation14], 128, 128, 8
    $region65: #{_lambda_.1} parent=1 // pred_fallthru
      _
    // Predicated region
    $region66: #{_lambda_.1} parent=1 // pred_check
      _
    $region67: #{_lambda_.1} parent=1 // pred_check_branch
      %146 = sbr.rel (0) target = $region69
    $region68: #{_lambda_.1} parent=1 // pred_region
      _
    $region69: #{_lambda_.1} parent=1 // pred_fallthru
      _
    // Predicated region
    $region70: #{_lambda_.1} parent=1 // pred_check
      _
    $region71: #{_lambda_.1} parent=1 // pred_check_branch
      %148 = sbr.rel (0) target = $region73
    $region72: #{_lambda_.1} parent=1 // pred_region
      _
    $region73: #{_lambda_.1} parent=1 // pred_fallthru
      _
    // Predicated region
    $region74: #{_lambda_.1} parent=1 // pred_check
      _
    $region75: #{_lambda_.1} parent=1 // pred_check_branch
      %150 = sbr.rel (0) target = $region77
    $region76: #{_lambda_.1} parent=1 // pred_region
      _
    $region77: #{_lambda_.1} parent=1 // pred_fallthru
      _
    // Predicated region
    $region78: #{_lambda_.1} parent=1 // pred_check
      _
    $region79: #{_lambda_.1} parent=1 // pred_check_branch
      %152 = sbr.rel (0) target = $region81
    $region80: #{_lambda_.1} parent=1 // pred_region
      _
    $region81: #{_lambda_.1} parent=1 // pred_fallthru
      _
    // Predicated region
    $region82: #{_lambda_.1} parent=1 // pred_check
      _
    $region83: #{_lambda_.1} parent=1 // pred_check_branch
      %154 = sbr.rel (0) target = $region85
    $region84: #{_lambda_.1} parent=1 // pred_region
      _
    $region85: #{_lambda_.1} parent=1 // pred_fallthru
      _
    // Predicated region
    $region86: #{_lambda_.1} parent=1 // pred_check
      _
    $region87: #{_lambda_.1} parent=1 // pred_check_branch
      %156 = sbr.rel (0) target = $region89
    $region88: #{_lambda_.1} parent=1 // pred_region
      _
    $region89: #{_lambda_.1} parent=1 // pred_fallthru
      _
    // Predicated region
    $region90: #{_lambda_.1} parent=1 // pred_check
      _
    $region91: #{_lambda_.1} parent=1 // pred_check_branch
      %158 = sbr.rel (0) target = $region93
    $region92: #{_lambda_.1} parent=1 // pred_region
      _
    $region93: #{_lambda_.1} parent=1 // pred_fallthru
      _
    // Predicated region
    $region94: #{_lambda_.1} parent=1 // pred_check
      _
    $region95: #{_lambda_.1} parent=1 // pred_check_branch
      %160 = sbr.rel (0) target = $region97
    $region96: #{_lambda_.1} parent=1 // pred_region
      %161 = dma.done [#allocation3], 2048
    $region97: #{_lambda_.1} parent=1 // pred_fallthru
      _
    // Predicated region
    $region98: #{_lambda_.1} parent=1 // pred_check
      _
    $region99: #{_lambda_.1} parent=1 // pred_check_branch
      %163 = sbr.rel (0) target = $region101
    $region100: #{_lambda_.1} parent=1 // pred_region
      %164 = dma.done [#allocation5], 2048
    $region101: #{_lambda_.1} parent=1 // pred_fallthru
      _
    // Predicated region
    $region102: #{_lambda_.1} parent=1 // pred_check
      _
    $region103: #{_lambda_.1} parent=1 // pred_check_branch
      %166 = sbr.rel (0) target = $region105
    $region104: #{_lambda_.1} parent=1 // pred_region
      %167 = dma.done [#allocation5], 512
    $region105: #{_lambda_.1} parent=1 // pred_fallthru
      _
    // Predicated region
    $region106: #{_lambda_.1} parent=1 // pred_check
      _
    $region107: #{_lambda_.1} parent=1 // pred_check_branch
      %169 = sbr.rel (0) target = $region109
    $region108: #{_lambda_.1} parent=1 // pred_region
      %170 = dma.done [#allocation8], 512
    $region109: #{_lambda_.1} parent=1 // pred_fallthru
      _
    // Predicated region
    $region110: #{_lambda_.1} parent=1 // pred_check
      _
    $region111: #{_lambda_.1} parent=1 // pred_check_branch
      %172 = sbr.rel (0) target = $region113
    $region112: #{_lambda_.1} parent=1 // pred_region
      %173 = dma.done [#allocation8], 512
    $region113: #{_lambda_.1} parent=1 // pred_fallthru
      _
    // Predicated region
    $region114: #{_lambda_.1} parent=1 // pred_check
      _
    $region115: #{_lambda_.1} parent=1 // pred_check_branch
      %175 = sbr.rel (0) target = $region117
    $region116: #{_lambda_.1} parent=1 // pred_region
      %176 = dma.done [#allocation11], 256
    $region117: #{_lambda_.1} parent=1 // pred_fallthru
      _
    // Predicated region
    $region118: #{_lambda_.1} parent=1 // pred_check
      _
    $region119: #{_lambda_.1} parent=1 // pred_check_branch
      %178 = sbr.rel (0) target = $region121
    $region120: #{_lambda_.1} parent=1 // pred_region
      %179 = dma.done [#allocation11], 2048
    $region121: #{_lambda_.1} parent=1 // pred_fallthru
      _
    // Predicated region
    $region122: #{_lambda_.1} parent=1 // pred_check
      _
    $region123: #{_lambda_.1} parent=1 // pred_check_branch
      %181 = sbr.rel (0) target = $region125
    $region124: #{_lambda_.1} parent=1 // pred_region
      %182 = dma.done [#allocation14], 256
    $region125: #{_lambda_.1} parent=1 // pred_fallthru
      _
    %v183 = vld [vmem:[%s0] sm:$0xff]
    %v184 = vld [vmem:[%s1] sm:$0x3]
    %v185 = vld [vmem:[#allocation2] sm:$0xff]
    %v186 = vld [vmem:[#allocation2 + $0x8] sm:$0xff]
    %v187 = vld [vmem:[#allocation2 + $0x10] sm:$0xff]
    %v188 = vld [vmem:[#allocation2 + $0x18] sm:$0xff]
    %v189 = vld [vmem:[#allocation2 + $0x20] sm:$0xff]
    %v190 = vld [vmem:[#allocation2 + $0x28] sm:$0xff]
    %v191 = vld [vmem:[#allocation2 + $0x30] sm:$0xff]
    %v192 = vld [vmem:[#allocation2 + $0x38] sm:$0xff]
    %v193 = vld [vmem:[#allocation2 + $0x40] sm:$0xff]
    %v194 = vld [vmem:[#allocation2 + $0x48] sm:$0xff]
    %v195 = vld [vmem:[#allocation2 + $0x50] sm:$0xff]
    %v196 = vld [vmem:[#allocation2 + $0x58] sm:$0xff]
    %v197 = vld [vmem:[#allocation2 + $0x60] sm:$0xff]
    %v198 = vld [vmem:[#allocation2 + $0x68] sm:$0xff]
    %v199 = vld [vmem:[#allocation2 + $0x70] sm:$0xff]
    %v200 = vld [vmem:[#allocation2 + $0x78] sm:$0xff]
    %v201 = vld [vmem:[#allocation4] sm:$0xff]
    %v202 = vld [vmem:[#allocation4 + $0x8] sm:$0xff]
    %v203 = vld [vmem:[#allocation4 + $0x10] sm:$0xff]
    %v204 = vld [vmem:[#allocation4 + $0x18] sm:$0xff]
    %v205 = vld [vmem:[#allocation4 + $0x20] sm:$0xff]
    %v206 = vld [vmem:[#allocation4 + $0x28] sm:$0xff]
    %v207 = vld [vmem:[#allocation4 + $0x30] sm:$0xff]
    %v208 = vld [vmem:[#allocation4 + $0x38] sm:$0xff]
    %v209 = vld [vmem:[#allocation4 + $0x40] sm:$0xff]
    %v210 = vld [vmem:[#allocation4 + $0x48] sm:$0xff]
    %v211 = vld [vmem:[#allocation4 + $0x50] sm:$0xff]
    %v212 = vld [vmem:[#allocation4 + $0x58] sm:$0xff]
    %v213 = vld [vmem:[#allocation4 + $0x60] sm:$0xff]
    %v214 = vld [vmem:[#allocation4 + $0x68] sm:$0xff]
    %v215 = vld [vmem:[#allocation4 + $0x70] sm:$0xff]
    %v216 = vld [vmem:[#allocation4 + $0x78] sm:$0xff]
    %v217 = vld [vmem:[#allocation6] sm:$0xff]
    %v218 = vld [vmem:[#allocation6 + $0x8] sm:$0xff]
    %v219 = vld [vmem:[#allocation6 + $0x10] sm:$0xff]
    %v220 = vld [vmem:[#allocation6 + $0x18] sm:$0xff]
    %v221 = vld [vmem:[%s5] sm:$0xff]
    %v222 = vld [vmem:[%s5 + $0x8] sm:$0xff]
    %v223 = vld [vmem:[%s5 + $0x10] sm:$0xff]
    %v224 = vld [vmem:[%s5 + $0x18] sm:$0xff]
    %vm225 = vcmask 15360
    %v227 = vsel %vm225, %v183, 0
    %vm229 = vcmask 1041408
    %v231 = vsel %vm229, %v184, 0
    %233 = vmatprep.subr.mxu0 0.0
    %234 = vmatpush1.msra.mxu0 %v231
    %235 = vmatprep.subr.mxu0 0.0
    %236 = vmatpush1.msra.mxu0 0.0
    %237 = vmatprep.subr.mxu0 0.0
    %238 = vmatpush1.msra.mxu0 0.0
    %239 = vmatprep.subr.mxu0 0.0
    %240 = vmatpush1.msra.mxu0 0.0
    %241 = vmatprep.subr.mxu0 0.0
    %242 = vmatpush1.msra.mxu0 0.0
    %243 = vmatprep.subr.mxu0 0.0
    %244 = vmatpush1.msra.mxu0 0.0
    %245 = vmatprep.subr.mxu0 0.0
    %246 = vmatpush1.msra.mxu0 0.0
    %247 = vmatprep.subr.mxu0 0.0
    %248 = vmatpush1.msra.mxu0 0.0
    %249 = vmatprep.subr.mxu0 0.0
    %250 = vmatpush1.msra.mxu0 0.0
    %251 = vmatprep.subr.mxu0 0.0
    %252 = vmatpush1.msra.mxu0 0.0
    %253 = vmatprep.subr.mxu0 0.0
    %254 = vmatpush1.msra.mxu0 0.0
    %255 = vmatprep.subr.mxu0 0.0
    %256 = vmatpush1.msra.mxu0 0.0
    %257 = vmatprep.subr.mxu0 0.0
    %258 = vmatpush1.msra.mxu0 0.0
    %259 = vmatprep.subr.mxu0 0.0
    %260 = vmatpush1.msra.mxu0 0.0
    %261 = vmatprep.subr.mxu0 0.0
    %262 = vmatpush1.msra.mxu0 0.0
    %263 = vmatprep.subr.mxu0 0.0
    %264 = vmatpush1.msra.mxu0 0.0
    %265 = vmatprep.subr.mxu0 0.0
    %266 = vmatpush1.msra.mxu0 0.0
    %267 = vmatprep.subr.mxu0 0.0
    %268 = vmatpush1.msra.mxu0 0.0
    %269 = vmatprep.subr.mxu0 0.0
    %270 = vmatpush1.msra.mxu0 0.0
    %271 = vmatprep.subr.mxu0 0.0
    %272 = vmatpush1.msra.mxu0 0.0
    %273 = vmatprep.subr.mxu0 0.0
    %274 = vmatpush1.msra.mxu0 0.0
    %275 = vmatprep.subr.mxu0 0.0
    %276 = vmatpush1.msra.mxu0 0.0
    %277 = vmatprep.subr.mxu0 0.0
    %278 = vmatpush1.msra.mxu0 0.0
    %279 = vmatprep.subr.mxu0 0.0
    %280 = vmatpush1.msra.mxu0 0.0
    %281 = vmatprep.subr.mxu0 0.0
    %282 = vmatpush1.msra.mxu0 0.0
    %283 = vmatprep.subr.mxu0 0.0
    %284 = vmatpush1.msra.mxu0 0.0
    %285 = vmatprep.subr.mxu0 0.0
    %286 = vmatpush1.msra.mxu0 0.0
    %287 = vmatprep.subr.mxu0 0.0
    %288 = vmatpush1.msra.mxu0 0.0
    %289 = vmatprep.subr.mxu0 0.0
    %290 = vmatpush1.msra.mxu0 0.0
    %291 = vmatprep.subr.mxu0 0.0
    %292 = vmatpush1.msra.mxu0 0.0
    %293 = vmatprep.subr.mxu0 0.0
    %294 = vmatpush1.msra.mxu0 0.0
    %295 = vmatprep.subr.mxu0 0.0
    %296 = vmatpush1.msra.mxu0 0.0
    %297 = vmatprep.mubr.f32.mxu0 0.0
    %298 = vmatmul.mubr.f32.gmra.mrb[0].mxu0 %v227
    %v299 = vpop.f32.mrb[0].mxu0
    %v300 = vadd.f32 0.0, %v299
    %v301 = vpop.f32.mrb[0].mxu0
    %302 = vdwg.mxu0
    %vm303 = vcmask 64512
    %v305 = vsel %vm303, %v185, 0
    %v308 = vsel %vm303, %v186, 0
    %v311 = vsel %vm303, %v187, 0
    %v314 = vsel %vm303, %v188, 0
    %v317 = vsel %vm303, %v189, 0
    %v320 = vsel %vm303, %v190, 0
    %v323 = vsel %vm303, %v191, 0
    %v326 = vsel %vm303, %v192, 0
    %v329 = vsel %vm303, %v193, 0
    %v332 = vsel %vm303, %v194, 0
    %v335 = vsel %vm303, %v195, 0
    %v338 = vsel %vm303, %v196, 0
    %v341 = vsel %vm303, %v197, 0
    %v344 = vsel %vm303, %v198, 0
    %v347 = vsel %vm303, %v199, 0
    %v350 = vsel %vm303, %v200, 0
    %352 = vmatprep.subr.mxu0 0.0
    %353 = vmatpush1.msra.mxu0 %v300
    %354 = vmatprep.subr.mxu0 0.0
    %355 = vmatpush1.msra.mxu0 0.0
    %356 = vmatprep.subr.mxu0 0.0
    %357 = vmatpush1.msra.mxu0 0.0
    %358 = vmatprep.subr.mxu0 0.0
    %359 = vmatpush1.msra.mxu0 0.0
    %360 = vmatprep.subr.mxu0 0.0
    %361 = vmatpush1.msra.mxu0 0.0
    %362 = vmatprep.subr.mxu0 0.0
    %363 = vmatpush1.msra.mxu0 0.0
    %364 = vmatprep.subr.mxu0 0.0
    %365 = vmatpush1.msra.mxu0 0.0
    %366 = vmatprep.subr.mxu0 0.0
    %367 = vmatpush1.msra.mxu0 0.0
    %368 = vmatprep.subr.mxu0 0.0
    %369 = vmatpush1.msra.mxu0 0.0
    %370 = vmatprep.subr.mxu0 0.0
    %371 = vmatpush1.msra.mxu0 0.0
    %372 = vmatprep.subr.mxu0 0.0
    %373 = vmatpush1.msra.mxu0 0.0
    %374 = vmatprep.subr.mxu0 0.0
    %375 = vmatpush1.msra.mxu0 0.0
    %376 = vmatprep.subr.mxu0 0.0
    %377 = vmatpush1.msra.mxu0 0.0
    %378 = vmatprep.subr.mxu0 0.0
    %379 = vmatpush1.msra.mxu0 0.0
    %380 = vmatprep.subr.mxu0 0.0
    %381 = vmatpush1.msra.mxu0 0.0
    %382 = vmatprep.subr.mxu0 0.0
    %383 = vmatpush1.msra.mxu0 0.0
    %384 = vmatprep.subr.mxu0 0.0
    %385 = vmatpush1.msra.mxu0 0.0
    %386 = vmatprep.subr.mxu0 0.0
    %387 = vmatpush1.msra.mxu0 0.0
    %388 = vmatprep.subr.mxu0 0.0
    %389 = vmatpush1.msra.mxu0 0.0
    %390 = vmatprep.subr.mxu0 0.0
    %391 = vmatpush1.msra.mxu0 0.0
    %392 = vmatprep.subr.mxu0 0.0
    %393 = vmatpush1.msra.mxu0 0.0
    %394 = vmatprep.subr.mxu0 0.0
    %395 = vmatpush1.msra.mxu0 0.0
    %396 = vmatprep.subr.mxu0 0.0
    %397 = vmatpush1.msra.mxu0 0.0
    %398 = vmatprep.subr.mxu0 0.0
    %399 = vmatpush1.msra.mxu0 0.0
    %400 = vmatprep.subr.mxu0 0.0
    %401 = vmatpush1.msra.mxu0 0.0
    %402 = vmatprep.subr.mxu0 0.0
    %403 = vmatpush1.msra.mxu0 0.0
    %404 = vmatprep.subr.mxu0 0.0
    %405 = vmatpush1.msra.mxu0 0.0
    %406 = vmatprep.subr.mxu0 0.0
    %407 = vmatpush1.msra.mxu0 0.0
    %408 = vmatprep.subr.mxu0 0.0
    %409 = vmatpush1.msra.mxu0 0.0
    %410 = vmatprep.subr.mxu0 0.0
    %411 = vmatpush1.msra.mxu0 0.0
    %412 = vmatprep.subr.mxu0 0.0
    %413 = vmatpush1.msra.mxu0 0.0
    %414 = vmatprep.subr.mxu0 0.0
    %415 = vmatpush1.msra.mxu0 0.0
    %416 = vmatprep.mubr.f32.mxu0 0.0
    %417 = vmatmul.mubr.f32.gmra.mrb[0].mxu0 %v305
    %v418 = vpop.f32.mrb[0].mxu0
    %v419 = vadd.f32 0.0, %v418
    %v420 = vpop.f32.mrb[0].mxu0
    %421 = vmatprep.mubr.f32.mxu0 0.0
    %422 = vmatmul.mubr.f32.gmra.mrb[0].mxu0 %v308
    %v423 = vpop.f32.mrb[0].mxu0
    %v424 = vadd.f32 0.0, %v423
    %v425 = vpop.f32.mrb[0].mxu0
    %426 = vmatprep.mubr.f32.mxu0 0.0
    %427 = vmatmul.mubr.f32.gmra.mrb[0].mxu0 %v311
    %v428 = vpop.f32.mrb[0].mxu0
    %v429 = vadd.f32 0.0, %v428
    %v430 = vpop.f32.mrb[0].mxu0
    %431 = vmatprep.mubr.f32.mxu0 0.0
    %432 = vmatmul.mubr.f32.gmra.mrb[0].mxu0 %v314
    %v433 = vpop.f32.mrb[0].mxu0
    %v434 = vadd.f32 0.0, %v433
    %v435 = vpop.f32.mrb[0].mxu0
    %436 = vmatprep.mubr.f32.mxu0 0.0
    %437 = vmatmul.mubr.f32.gmra.mrb[0].mxu0 %v317
    %v438 = vpop.f32.mrb[0].mxu0
    %v439 = vadd.f32 0.0, %v438
    %v440 = vpop.f32.mrb[0].mxu0
    %441 = vmatprep.mubr.f32.mxu0 0.0
    %442 = vmatmul.mubr.f32.gmra.mrb[0].mxu0 %v320
    %v443 = vpop.f32.mrb[0].mxu0
    %v444 = vadd.f32 0.0, %v443
    %v445 = vpop.f32.mrb[0].mxu0
    %446 = vmatprep.mubr.f32.mxu0 0.0
    %447 = vmatmul.mubr.f32.gmra.mrb[0].mxu0 %v323
    %v448 = vpop.f32.mrb[0].mxu0
    %v449 = vadd.f32 0.0, %v448
    %v450 = vpop.f32.mrb[0].mxu0
    %451 = vmatprep.mubr.f32.mxu0 0.0
    %452 = vmatmul.mubr.f32.gmra.mrb[0].mxu0 %v326
    %v453 = vpop.f32.mrb[0].mxu0
    %v454 = vadd.f32 0.0, %v453
    %v455 = vpop.f32.mrb[0].mxu0
    %456 = vmatprep.mubr.f32.mxu0 0.0
    %457 = vmatmul.mubr.f32.gmra.mrb[0].mxu0 %v329
    %v458 = vpop.f32.mrb[0].mxu0
    %v459 = vadd.f32 0.0, %v458
    %v460 = vpop.f32.mrb[0].mxu0
    %461 = vmatprep.mubr.f32.mxu0 0.0
    %462 = vmatmul.mubr.f32.gmra.mrb[0].mxu0 %v332
    %v463 = vpop.f32.mrb[0].mxu0
    %v464 = vadd.f32 0.0, %v463
    %v465 = vpop.f32.mrb[0].mxu0
    %466 = vmatprep.mubr.f32.mxu0 0.0
    %467 = vmatmul.mubr.f32.gmra.mrb[0].mxu0 %v335
    %v468 = vpop.f32.mrb[0].mxu0
    %v469 = vadd.f32 0.0, %v468
    %v470 = vpop.f32.mrb[0].mxu0
    %471 = vmatprep.mubr.f32.mxu0 0.0
    %472 = vmatmul.mubr.f32.gmra.mrb[0].mxu0 %v338
    %v473 = vpop.f32.mrb[0].mxu0
    %v474 = vadd.f32 0.0, %v473
    %v475 = vpop.f32.mrb[0].mxu0
    %476 = vmatprep.mubr.f32.mxu0 0.0
    %477 = vmatmul.mubr.f32.gmra.mrb[0].mxu0 %v341
    %v478 = vpop.f32.mrb[0].mxu0
    %v479 = vadd.f32 0.0, %v478
    %v480 = vpop.f32.mrb[0].mxu0
    %481 = vmatprep.mubr.f32.mxu0 0.0
    %482 = vmatmul.mubr.f32.gmra.mrb[0].mxu0 %v344
    %v483 = vpop.f32.mrb[0].mxu0
    %v484 = vadd.f32 0.0, %v483
    %v485 = vpop.f32.mrb[0].mxu0
    %486 = vmatprep.mubr.f32.mxu0 0.0
    %487 = vmatmul.mubr.f32.gmra.mrb[0].mxu0 %v347
    %v488 = vpop.f32.mrb[0].mxu0
    %v489 = vadd.f32 0.0, %v488
    %v490 = vpop.f32.mrb[0].mxu0
    %491 = vmatprep.mubr.f32.mxu0 0.0
    %492 = vmatmul.mubr.f32.gmra.mrb[0].mxu0 %v350
    %v493 = vpop.f32.mrb[0].mxu0
    %v494 = vadd.f32 0.0, %v493
    %v495 = vpop.f32.mrb[0].mxu0
    %496 = vdwg.mxu0
    %v497 = vmul.f32 %v419, %v201
    %v498 = vmul.f32 %v424, %v202
    %v499 = vmul.f32 %v429, %v203
    %v500 = vmul.f32 %v434, %v204
    %v501 = vmul.f32 %v439, %v205
    %v502 = vmul.f32 %v444, %v206
    %v503 = vmul.f32 %v449, %v207
    %v504 = vmul.f32 %v454, %v208
    %v505 = vmul.f32 %v459, %v209
    %v506 = vmul.f32 %v464, %v210
    %v507 = vmul.f32 %v469, %v211
    %v508 = vmul.f32 %v474, %v212
    %v509 = vmul.f32 %v479, %v213
    %v510 = vmul.f32 %v484, %v214
    %v511 = vmul.f32 %v489, %v215
    %v512 = vmul.f32 %v494, %v216
    %513 = vmatprep.subr.mxu0 0.0
    %514 = vmatpush1.msra.mxu0 %v497
    %515 = vmatprep.subr.mxu0 0.0
    %516 = vmatpush1.msra.mxu0 %v498
    %517 = vmatprep.subr.mxu0 0.0
    %518 = vmatpush1.msra.mxu0 %v499
    %519 = vmatprep.subr.mxu0 0.0
    %520 = vmatpush1.msra.mxu0 %v500
    %521 = vmatprep.subr.mxu0 0.0
    %522 = vmatpush1.msra.mxu0 %v501
    %523 = vmatprep.subr.mxu0 0.0
    %524 = vmatpush1.msra.mxu0 %v502
    %525 = vmatprep.subr.mxu0 0.0
    %526 = vmatpush1.msra.mxu0 %v503
    %527 = vmatprep.subr.mxu0 0.0
    %528 = vmatpush1.msra.mxu0 %v504
    %529 = vmatprep.subr.mxu0 0.0
    %530 = vmatpush1.msra.mxu0 %v505
    %531 = vmatprep.subr.mxu0 0.0
    %532 = vmatpush1.msra.mxu0 %v506
    %533 = vmatprep.subr.mxu0 0.0
    %534 = vmatpush1.msra.mxu0 %v507
    %535 = vmatprep.subr.mxu0 0.0
    %536 = vmatpush1.msra.mxu0 %v508
    %537 = vmatprep.subr.mxu0 0.0
    %538 = vmatpush1.msra.mxu0 %v509
    %539 = vmatprep.subr.mxu0 0.0
    %540 = vmatpush1.msra.mxu0 %v510
    %541 = vmatprep.subr.mxu0 0.0
    %542 = vmatpush1.msra.mxu0 %v511
    %543 = vmatprep.subr.mxu0 0.0
    %544 = vmatpush1.msra.mxu0 %v512
    %545 = vmatprep.subr.mxu0 0.0
    %546 = vmatpush1.msra.mxu0 0.0
    %547 = vmatprep.subr.mxu0 0.0
    %548 = vmatpush1.msra.mxu0 0.0
    %549 = vmatprep.subr.mxu0 0.0
    %550 = vmatpush1.msra.mxu0 0.0
    %551 = vmatprep.subr.mxu0 0.0
    %552 = vmatpush1.msra.mxu0 0.0
    %553 = vmatprep.subr.mxu0 0.0
    %554 = vmatpush1.msra.mxu0 0.0
    %555 = vmatprep.subr.mxu0 0.0
    %556 = vmatpush1.msra.mxu0 0.0
    %557 = vmatprep.subr.mxu0 0.0
    %558 = vmatpush1.msra.mxu0 0.0
    %559 = vmatprep.subr.mxu0 0.0
    %560 = vmatpush1.msra.mxu0 0.0
    %561 = vmatprep.subr.mxu0 0.0
    %562 = vmatpush1.msra.mxu0 0.0
    %563 = vmatprep.subr.mxu0 0.0
    %564 = vmatpush1.msra.mxu0 0.0
    %565 = vmatprep.subr.mxu0 0.0
    %566 = vmatpush1.msra.mxu0 0.0
    %567 = vmatprep.subr.mxu0 0.0
    %568 = vmatpush1.msra.mxu0 0.0
    %569 = vmatprep.subr.mxu0 0.0
    %570 = vmatpush1.msra.mxu0 0.0
    %571 = vmatprep.subr.mxu0 0.0
    %572 = vmatpush1.msra.mxu0 0.0
    %573 = vmatprep.subr.mxu0 0.0
    %574 = vmatpush1.msra.mxu0 0.0
    %575 = vmatprep.subr.mxu0 0.0
    %576 = vmatpush1.msra.mxu0 0.0
    %577 = vmatprep.mubr.f32.mxu0 0.0
    %578 = vmatmul.mubr.f32.gmra.mrb[0].mxu0 %v217
    %v579 = vpop.f32.mrb[0].mxu0
    %v580 = vadd.f32 %v221, %v579
    %v581 = vpop.f32.mrb[0].mxu0
    %582 = vmatprep.mubr.f32.mxu0 0.0
    %583 = vmatmul.mubr.f32.gmra.mrb[0].mxu0 %v218
    %v584 = vpop.f32.mrb[0].mxu0
    %v585 = vadd.f32 %v222, %v584
    %v586 = vpop.f32.mrb[0].mxu0
    %587 = vmatprep.mubr.f32.mxu0 0.0
    %588 = vmatmul.mubr.f32.gmra.mrb[0].mxu0 %v219
    %v589 = vpop.f32.mrb[0].mxu0
    %v590 = vadd.f32 %v223, %v589
    %v591 = vpop.f32.mrb[0].mxu0
    %592 = vmatprep.mubr.f32.mxu0 0.0
    %593 = vmatmul.mubr.f32.gmra.mrb[0].mxu0 %v220
    %v594 = vpop.f32.mrb[0].mxu0
    %v595 = vadd.f32 %v224, %v594
    %v596 = vpop.f32.mrb[0].mxu0
    %597 = vdwg.mxu0
    %v598 = vld [vmem:[#allocation7] sm:$0xff]
    %v599 = vld [vmem:[#allocation7 + $0x8] sm:$0xff]
    %v600 = vld [vmem:[#allocation7 + $0x10] sm:$0xff]
    %v601 = vld [vmem:[#allocation7 + $0x18] sm:$0xff]
    %v602 = vld [vmem:[#allocation9] sm:$0xff]
    %v603 = vld [vmem:[#allocation9 + $0x8] sm:$0xff]
    %v604 = vld [vmem:[#allocation9 + $0x10] sm:$0xff]
    %v605 = vld [vmem:[#allocation9 + $0x18] sm:$0xff]
    %v606 = vld [vmem:[%s8] sm:$0x3]
    %v607 = vld [vmem:[%s9] sm:$0xff]
    %v608 = vld [vmem:[%s9 + $0x8] sm:$0xff]
    %v609 = vld [vmem:[%s9 + $0x10] sm:$0xff]
    %v610 = vld [vmem:[%s9 + $0x18] sm:$0xff]
    %v611 = vld [vmem:[%s10] sm:$0xff]
    %v612 = vld [vmem:[%s10 + $0x8] sm:$0xff]
    %v613 = vld [vmem:[%s10 + $0x10] sm:$0xff]
    %v614 = vld [vmem:[%s10 + $0x18] sm:$0xff]
    %vm615 = vcmask 261120
    %v617 = vsel %vm615, %v580, 0
    %v620 = vsel %vm615, %v585, 0
    %v623 = vsel %vm615, %v590, 0
    %v626 = vsel %vm615, %v595, 0
    %628 = vmatprep.subr.mxu0 0.0
    %629 = vmatpush1.msra.mxu0 %v602
    %630 = vmatprep.subr.mxu0 0.0
    %631 = vmatpush1.msra.mxu0 %v603
    %632 = vmatprep.subr.mxu0 0.0
    %633 = vmatpush1.msra.mxu0 %v604
    %634 = vmatprep.subr.mxu0 0.0
    %635 = vmatpush1.msra.mxu0 %v605
    %636 = vmatprep.subr.mxu0 0.0
    %637 = vmatpush1.msra.mxu0 0.0
    %638 = vmatprep.subr.mxu0 0.0
    %639 = vmatpush1.msra.mxu0 0.0
    %640 = vmatprep.subr.mxu0 0.0
    %641 = vmatpush1.msra.mxu0 0.0
    %642 = vmatprep.subr.mxu0 0.0
    %643 = vmatpush1.msra.mxu0 0.0
    %644 = vmatprep.subr.mxu0 0.0
    %645 = vmatpush1.msra.mxu0 0.0
    %646 = vmatprep.subr.mxu0 0.0
    %647 = vmatpush1.msra.mxu0 0.0
    %648 = vmatprep.subr.mxu0 0.0
    %649 = vmatpush1.msra.mxu0 0.0
    %650 = vmatprep.subr.mxu0 0.0
    %651 = vmatpush1.msra.mxu0 0.0
    %652 = vmatprep.subr.mxu0 0.0
    %653 = vmatpush1.msra.mxu0 0.0
    %654 = vmatprep.subr.mxu0 0.0
    %655 = vmatpush1.msra.mxu0 0.0
    %656 = vmatprep.subr.mxu0 0.0
    %657 = vmatpush1.msra.mxu0 0.0
    %658 = vmatprep.subr.mxu0 0.0
    %659 = vmatpush1.msra.mxu0 0.0
    %660 = vmatprep.subr.mxu0 0.0
    %661 = vmatpush1.msra.mxu0 0.0
    %662 = vmatprep.subr.mxu0 0.0
    %663 = vmatpush1.msra.mxu0 0.0
    %664 = vmatprep.subr.mxu0 0.0
    %665 = vmatpush1.msra.mxu0 0.0
    %666 = vmatprep.subr.mxu0 0.0
    %667 = vmatpush1.msra.mxu0 0.0
    %668 = vmatprep.subr.mxu0 0.0
    %669 = vmatpush1.msra.mxu0 0.0
    %670 = vmatprep.subr.mxu0 0.0
    %671 = vmatpush1.msra.mxu0 0.0
    %672 = vmatprep.subr.mxu0 0.0
    %673 = vmatpush1.msra.mxu0 0.0
    %674 = vmatprep.subr.mxu0 0.0
    %675 = vmatpush1.msra.mxu0 0.0
    %676 = vmatprep.subr.mxu0 0.0
    %677 = vmatpush1.msra.mxu0 0.0
    %678 = vmatprep.subr.mxu0 0.0
    %679 = vmatpush1.msra.mxu0 0.0
    %680 = vmatprep.subr.mxu0 0.0
    %681 = vmatpush1.msra.mxu0 0.0
    %682 = vmatprep.subr.mxu0 0.0
    %683 = vmatpush1.msra.mxu0 0.0
    %684 = vmatprep.subr.mxu0 0.0
    %685 = vmatpush1.msra.mxu0 0.0
    %686 = vmatprep.subr.mxu0 0.0
    %687 = vmatpush1.msra.mxu0 0.0
    %688 = vmatprep.subr.mxu0 0.0
    %689 = vmatpush1.msra.mxu0 0.0
    %690 = vmatprep.subr.mxu0 0.0
    %691 = vmatpush1.msra.mxu0 0.0
    %692 = vmatprep.mubr.f32.mxu0 0.0
    %693 = vmatmul.mubr.f32.gmra.mrb[0].mxu0 %v617
    %v694 = vpop.f32.mrb[0].mxu0
    %v695 = vadd.f32 0.0, %v694
    %v696 = vpop.f32.mrb[0].mxu0
    %697 = vmatprep.mubr.f32.mxu0 0.0
    %698 = vmatmul.mubr.f32.gmra.mrb[0].mxu0 %v620
    %v699 = vpop.f32.mrb[0].mxu0
    %v700 = vadd.f32 0.0, %v699
    %v701 = vpop.f32.mrb[0].mxu0
    %702 = vmatprep.mubr.f32.mxu0 0.0
    %703 = vmatmul.mubr.f32.gmra.mrb[0].mxu0 %v623
    %v704 = vpop.f32.mrb[0].mxu0
    %v705 = vadd.f32 0.0, %v704
    %v706 = vpop.f32.mrb[0].mxu0
    %707 = vmatprep.mubr.f32.mxu0 0.0
    %708 = vmatmul.mubr.f32.gmra.mrb[0].mxu0 %v626
    %v709 = vpop.f32.mrb[0].mxu0
    %v710 = vadd.f32 0.0, %v709
    %v711 = vpop.f32.mrb[0].mxu0
    %712 = vdwg.mxu0
    %v713 = vmul.f32 %v580, %v580
    %v714 = vmul.f32 %v585, %v585
    %v715 = vmul.f32 %v590, %v590
    %v716 = vmul.f32 %v595, %v595
    %v718 = vsel %vm615, %v713, 0
    %v721 = vsel %vm615, %v714, 0
    %v724 = vsel %vm615, %v715, 0
    %v727 = vsel %vm615, %v716, 0
    %729 = vmatprep.subr.mxu0 0.0
    %730 = vmatpush1.msra.mxu0 %v602
    %731 = vmatprep.subr.mxu0 0.0
    %732 = vmatpush1.msra.mxu0 %v603
    %733 = vmatprep.subr.mxu0 0.0
    %734 = vmatpush1.msra.mxu0 %v604
    %735 = vmatprep.subr.mxu0 0.0
    %736 = vmatpush1.msra.mxu0 %v605
    %737 = vmatprep.subr.mxu0 0.0
    %738 = vmatpush1.msra.mxu0 0.0
    %739 = vmatprep.subr.mxu0 0.0
    %740 = vmatpush1.msra.mxu0 0.0
    %741 = vmatprep.subr.mxu0 0.0
    %742 = vmatpush1.msra.mxu0 0.0
    %743 = vmatprep.subr.mxu0 0.0
    %744 = vmatpush1.msra.mxu0 0.0
    %745 = vmatprep.subr.mxu0 0.0
    %746 = vmatpush1.msra.mxu0 0.0
    %747 = vmatprep.subr.mxu0 0.0
    %748 = vmatpush1.msra.mxu0 0.0
    %749 = vmatprep.subr.mxu0 0.0
    %750 = vmatpush1.msra.mxu0 0.0
    %751 = vmatprep.subr.mxu0 0.0
    %752 = vmatpush1.msra.mxu0 0.0
    %753 = vmatprep.subr.mxu0 0.0
    %754 = vmatpush1.msra.mxu0 0.0
    %755 = vmatprep.subr.mxu0 0.0
    %756 = vmatpush1.msra.mxu0 0.0
    %757 = vmatprep.subr.mxu0 0.0
    %758 = vmatpush1.msra.mxu0 0.0
    %759 = vmatprep.subr.mxu0 0.0
    %760 = vmatpush1.msra.mxu0 0.0
    %761 = vmatprep.subr.mxu0 0.0
    %762 = vmatpush1.msra.mxu0 0.0
    %763 = vmatprep.subr.mxu0 0.0
    %764 = vmatpush1.msra.mxu0 0.0
    %765 = vmatprep.subr.mxu0 0.0
    %766 = vmatpush1.msra.mxu0 0.0
    %767 = vmatprep.subr.mxu0 0.0
    %768 = vmatpush1.msra.mxu0 0.0
    %769 = vmatprep.subr.mxu0 0.0
    %770 = vmatpush1.msra.mxu0 0.0
    %771 = vmatprep.subr.mxu0 0.0
    %772 = vmatpush1.msra.mxu0 0.0
    %773 = vmatprep.subr.mxu0 0.0
    %774 = vmatpush1.msra.mxu0 0.0
    %775 = vmatprep.subr.mxu0 0.0
    %776 = vmatpush1.msra.mxu0 0.0
    %777 = vmatprep.subr.mxu0 0.0
    %778 = vmatpush1.msra.mxu0 0.0
    %779 = vmatprep.subr.mxu0 0.0
    %780 = vmatpush1.msra.mxu0 0.0
    %781 = vmatprep.subr.mxu0 0.0
    %782 = vmatpush1.msra.mxu0 0.0
    %783 = vmatprep.subr.mxu0 0.0
    %784 = vmatpush1.msra.mxu0 0.0
    %785 = vmatprep.subr.mxu0 0.0
    %786 = vmatpush1.msra.mxu0 0.0
    %787 = vmatprep.subr.mxu0 0.0
    %788 = vmatpush1.msra.mxu0 0.0
    %789 = vmatprep.subr.mxu0 0.0
    %790 = vmatpush1.msra.mxu0 0.0
    %791 = vmatprep.subr.mxu0 0.0
    %792 = vmatpush1.msra.mxu0 0.0
    %793 = vmatprep.mubr.f32.mxu0 0.0
    %794 = vmatmul.mubr.f32.gmra.mrb[0].mxu0 %v718
    %v795 = vpop.f32.mrb[0].mxu0
    %v796 = vadd.f32 0.0, %v795
    %v797 = vpop.f32.mrb[0].mxu0
    %798 = vmatprep.mubr.f32.mxu0 0.0
    %799 = vmatmul.mubr.f32.gmra.mrb[0].mxu0 %v721
    %v800 = vpop.f32.mrb[0].mxu0
    %v801 = vadd.f32 0.0, %v800
    %v802 = vpop.f32.mrb[0].mxu0
    %803 = vmatprep.mubr.f32.mxu0 0.0
    %804 = vmatmul.mubr.f32.gmra.mrb[0].mxu0 %v724
    %v805 = vpop.f32.mrb[0].mxu0
    %v806 = vadd.f32 0.0, %v805
    %v807 = vpop.f32.mrb[0].mxu0
    %808 = vmatprep.mubr.f32.mxu0 0.0
    %809 = vmatmul.mubr.f32.gmra.mrb[0].mxu0 %v727
    %v810 = vpop.f32.mrb[0].mxu0
    %v811 = vadd.f32 0.0, %v810
    %v812 = vpop.f32.mrb[0].mxu0
    %813 = vdwg.mxu0
    %v815 = vsel %vm615, %v598, 0
    %v818 = vsel %vm615, %v599, 0
    %v821 = vsel %vm615, %v600, 0
    %v824 = vsel %vm615, %v601, 0
    %826 = vmatprep.subr.mxu0 0.0
    %827 = vmatpush1.msra.mxu0 %v695
    %828 = vmatprep.subr.mxu0 0.0
    %829 = vmatpush1.msra.mxu0 %v700
    %830 = vmatprep.subr.mxu0 0.0
    %831 = vmatpush1.msra.mxu0 %v705
    %832 = vmatprep.subr.mxu0 0.0
    %833 = vmatpush1.msra.mxu0 %v710
    %834 = vmatprep.subr.mxu0 0.0
    %835 = vmatpush1.msra.mxu0 0.0
    %836 = vmatprep.subr.mxu0 0.0
    %837 = vmatpush1.msra.mxu0 0.0
    %838 = vmatprep.subr.mxu0 0.0
    %839 = vmatpush1.msra.mxu0 0.0
    %840 = vmatprep.subr.mxu0 0.0
    %841 = vmatpush1.msra.mxu0 0.0
    %842 = vmatprep.subr.mxu0 0.0
    %843 = vmatpush1.msra.mxu0 0.0
    %844 = vmatprep.subr.mxu0 0.0
    %845 = vmatpush1.msra.mxu0 0.0
    %846 = vmatprep.subr.mxu0 0.0
    %847 = vmatpush1.msra.mxu0 0.0
    %848 = vmatprep.subr.mxu0 0.0
    %849 = vmatpush1.msra.mxu0 0.0
    %850 = vmatprep.subr.mxu0 0.0
    %851 = vmatpush1.msra.mxu0 0.0
    %852 = vmatprep.subr.mxu0 0.0
    %853 = vmatpush1.msra.mxu0 0.0
    %854 = vmatprep.subr.mxu0 0.0
    %855 = vmatpush1.msra.mxu0 0.0
    %856 = vmatprep.subr.mxu0 0.0
    %857 = vmatpush1.msra.mxu0 0.0
    %858 = vmatprep.subr.mxu0 0.0
    %859 = vmatpush1.msra.mxu0 0.0
    %860 = vmatprep.subr.mxu0 0.0
    %861 = vmatpush1.msra.mxu0 0.0
    %862 = vmatprep.subr.mxu0 0.0
    %863 = vmatpush1.msra.mxu0 0.0
    %864 = vmatprep.subr.mxu0 0.0
    %865 = vmatpush1.msra.mxu0 0.0
    %866 = vmatprep.subr.mxu0 0.0
    %867 = vmatpush1.msra.mxu0 0.0
    %868 = vmatprep.subr.mxu0 0.0
    %869 = vmatpush1.msra.mxu0 0.0
    %870 = vmatprep.subr.mxu0 0.0
    %871 = vmatpush1.msra.mxu0 0.0
    %872 = vmatprep.subr.mxu0 0.0
    %873 = vmatpush1.msra.mxu0 0.0
    %874 = vmatprep.subr.mxu0 0.0
    %875 = vmatpush1.msra.mxu0 0.0
    %876 = vmatprep.subr.mxu0 0.0
    %877 = vmatpush1.msra.mxu0 0.0
    %878 = vmatprep.subr.mxu0 0.0
    %879 = vmatpush1.msra.mxu0 0.0
    %880 = vmatprep.subr.mxu0 0.0
    %881 = vmatpush1.msra.mxu0 0.0
    %882 = vmatprep.subr.mxu0 0.0
    %883 = vmatpush1.msra.mxu0 0.0
    %884 = vmatprep.subr.mxu0 0.0
    %885 = vmatpush1.msra.mxu0 0.0
    %886 = vmatprep.subr.mxu0 0.0
    %887 = vmatpush1.msra.mxu0 0.0
    %888 = vmatprep.subr.mxu0 0.0
    %889 = vmatpush1.msra.mxu0 0.0
    %890 = vmatprep.mubr.f32.mxu0 0.0
    %891 = vmatmul.mubr.f32.gmra.mrb[0].mxu0 %v815
    %v892 = vpop.f32.mrb[0].mxu0
    %v893 = vadd.f32 0.0, %v892
    %v894 = vpop.f32.mrb[0].mxu0
    %895 = vmatprep.mubr.f32.mxu0 0.0
    %896 = vmatmul.mubr.f32.gmra.mrb[0].mxu0 %v818
    %v897 = vpop.f32.mrb[0].mxu0
    %v898 = vadd.f32 0.0, %v897
    %v899 = vpop.f32.mrb[0].mxu0
    %900 = vmatprep.mubr.f32.mxu0 0.0
    %901 = vmatmul.mubr.f32.gmra.mrb[0].mxu0 %v821
    %v902 = vpop.f32.mrb[0].mxu0
    %v903 = vadd.f32 0.0, %v902
    %v904 = vpop.f32.mrb[0].mxu0
    %905 = vmatprep.mubr.f32.mxu0 0.0
    %906 = vmatmul.mubr.f32.gmra.mrb[0].mxu0 %v824
    %v907 = vpop.f32.mrb[0].mxu0
    %v908 = vadd.f32 0.0, %v907
    %v909 = vpop.f32.mrb[0].mxu0
    %910 = vdwg.mxu0
    %v911 = vmul.f32 %v893, 0.0078125
    %v912 = vmul.f32 %v898, 0.0078125
    %v913 = vmul.f32 %v903, 0.0078125
    %v914 = vmul.f32 %v908, 0.0078125
    %915 = vmatprep.subr.mxu0 0.0
    %916 = vmatpush1.msra.mxu0 %v796
    %917 = vmatprep.subr.mxu0 0.0
    %918 = vmatpush1.msra.mxu0 %v801
    %919 = vmatprep.subr.mxu0 0.0
    %920 = vmatpush1.msra.mxu0 %v806
    %921 = vmatprep.subr.mxu0 0.0
    %922 = vmatpush1.msra.mxu0 %v811
    %923 = vmatprep.subr.mxu0 0.0
    %924 = vmatpush1.msra.mxu0 0.0
    %925 = vmatprep.subr.mxu0 0.0
    %926 = vmatpush1.msra.mxu0 0.0
    %927 = vmatprep.subr.mxu0 0.0
    %928 = vmatpush1.msra.mxu0 0.0
    %929 = vmatprep.subr.mxu0 0.0
    %930 = vmatpush1.msra.mxu0 0.0
    %931 = vmatprep.subr.mxu0 0.0
    %932 = vmatpush1.msra.mxu0 0.0
    %933 = vmatprep.subr.mxu0 0.0
    %934 = vmatpush1.msra.mxu0 0.0
    %935 = vmatprep.subr.mxu0 0.0
    %936 = vmatpush1.msra.mxu0 0.0
    %937 = vmatprep.subr.mxu0 0.0
    %938 = vmatpush1.msra.mxu0 0.0
    %939 = vmatprep.subr.mxu0 0.0
    %940 = vmatpush1.msra.mxu0 0.0
    %941 = vmatprep.subr.mxu0 0.0
    %942 = vmatpush1.msra.mxu0 0.0
    %943 = vmatprep.subr.mxu0 0.0
    %944 = vmatpush1.msra.mxu0 0.0
    %945 = vmatprep.subr.mxu0 0.0
    %946 = vmatpush1.msra.mxu0 0.0
    %947 = vmatprep.subr.mxu0 0.0
    %948 = vmatpush1.msra.mxu0 0.0
    %949 = vmatprep.subr.mxu0 0.0
    %950 = vmatpush1.msra.mxu0 0.0
    %951 = vmatprep.subr.mxu0 0.0
    %952 = vmatpush1.msra.mxu0 0.0
    %953 = vmatprep.subr.mxu0 0.0
    %954 = vmatpush1.msra.mxu0 0.0
    %955 = vmatprep.subr.mxu0 0.0
    %956 = vmatpush1.msra.mxu0 0.0
    %957 = vmatprep.subr.mxu0 0.0
    %958 = vmatpush1.msra.mxu0 0.0
    %959 = vmatprep.subr.mxu0 0.0
    %960 = vmatpush1.msra.mxu0 0.0
    %961 = vmatprep.subr.mxu0 0.0
    %962 = vmatpush1.msra.mxu0 0.0
    %963 = vmatprep.subr.mxu0 0.0
    %964 = vmatpush1.msra.mxu0 0.0
    %965 = vmatprep.subr.mxu0 0.0
    %966 = vmatpush1.msra.mxu0 0.0
    %967 = vmatprep.subr.mxu0 0.0
    %968 = vmatpush1.msra.mxu0 0.0
    %969 = vmatprep.subr.mxu0 0.0
    %970 = vmatpush1.msra.mxu0 0.0
    %971 = vmatprep.subr.mxu0 0.0
    %972 = vmatpush1.msra.mxu0 0.0
    %973 = vmatprep.subr.mxu0 0.0
    %974 = vmatpush1.msra.mxu0 0.0
    %975 = vmatprep.subr.mxu0 0.0
    %976 = vmatpush1.msra.mxu0 0.0
    %977 = vmatprep.subr.mxu0 0.0
    %978 = vmatpush1.msra.mxu0 0.0
    %979 = vmatprep.mubr.f32.mxu0 0.0
    %980 = vmatmul.mubr.f32.gmra.mrb[0].mxu0 %v815
    %v981 = vpop.f32.mrb[0].mxu0
    %v982 = vadd.f32 0.0, %v981
    %v983 = vpop.f32.mrb[0].mxu0
    %984 = vmatprep.mubr.f32.mxu0 0.0
    %985 = vmatmul.mubr.f32.gmra.mrb[0].mxu0 %v818
    %v986 = vpop.f32.mrb[0].mxu0
    %v987 = vadd.f32 0.0, %v986
    %v988 = vpop.f32.mrb[0].mxu0
    %989 = vmatprep.mubr.f32.mxu0 0.0
    %990 = vmatmul.mubr.f32.gmra.mrb[0].mxu0 %v821
    %v991 = vpop.f32.mrb[0].mxu0
    %v992 = vadd.f32 0.0, %v991
    %v993 = vpop.f32.mrb[0].mxu0
    %994 = vmatprep.mubr.f32.mxu0 0.0
    %995 = vmatmul.mubr.f32.gmra.mrb[0].mxu0 %v824
    %v996 = vpop.f32.mrb[0].mxu0
    %v997 = vadd.f32 0.0, %v996
    %v998 = vpop.f32.mrb[0].mxu0
    %999 = vdwg.mxu0
    %v1000 = vmul.f32 %v982, 0.0078125
    %v1001 = vmul.f32 %v987, 0.0078125
    %v1002 = vmul.f32 %v992, 0.0078125
    %v1003 = vmul.f32 %v997, 0.0078125
    %v1005 = vsel %vm225, %v911, 0
    %v1008 = vsel %vm225, %v912, 0
    %v1011 = vsel %vm225, %v913, 0
    %v1014 = vsel %vm225, %v914, 0
    %v1017 = vsel %vm229, %v606, 0
    %1019 = vmatprep.subr.mxu0 0.0
    %1020 = vmatpush1.msra.mxu0 %v1017
    %1021 = vmatprep.subr.mxu0 0.0
    %1022 = vmatpush1.msra.mxu0 0.0
    %1023 = vmatprep.subr.mxu0 0.0
    %1024 = vmatpush1.msra.mxu0 0.0
    %1025 = vmatprep.subr.mxu0 0.0
    %1026 = vmatpush1.msra.mxu0 0.0
    %1027 = vmatprep.subr.mxu0 0.0
    %1028 = vmatpush1.msra.mxu0 0.0
    %1029 = vmatprep.subr.mxu0 0.0
    %1030 = vmatpush1.msra.mxu0 0.0
    %1031 = vmatprep.subr.mxu0 0.0
    %1032 = vmatpush1.msra.mxu0 0.0
    %1033 = vmatprep.subr.mxu0 0.0
    %1034 = vmatpush1.msra.mxu0 0.0
    %1035 = vmatprep.subr.mxu0 0.0
    %1036 = vmatpush1.msra.mxu0 0.0
    %1037 = vmatprep.subr.mxu0 0.0
    %1038 = vmatpush1.msra.mxu0 0.0
    %1039 = vmatprep.subr.mxu0 0.0
    %1040 = vmatpush1.msra.mxu0 0.0
    %1041 = vmatprep.subr.mxu0 0.0
    %1042 = vmatpush1.msra.mxu0 0.0
    %1043 = vmatprep.subr.mxu0 0.0
    %1044 = vmatpush1.msra.mxu0 0.0
    %1045 = vmatprep.subr.mxu0 0.0
    %1046 = vmatpush1.msra.mxu0 0.0
    %1047 = vmatprep.subr.mxu0 0.0
    %1048 = vmatpush1.msra.mxu0 0.0
    %1049 = vmatprep.subr.mxu0 0.0
    %1050 = vmatpush1.msra.mxu0 0.0
    %1051 = vmatprep.subr.mxu0 0.0
    %1052 = vmatpush1.msra.mxu0 0.0
    %1053 = vmatprep.subr.mxu0 0.0
    %1054 = vmatpush1.msra.mxu0 0.0
    %1055 = vmatprep.subr.mxu0 0.0
    %1056 = vmatpush1.msra.mxu0 0.0
    %1057 = vmatprep.subr.mxu0 0.0
    %1058 = vmatpush1.msra.mxu0 0.0
    %1059 = vmatprep.subr.mxu0 0.0
    %1060 = vmatpush1.msra.mxu0 0.0
    %1061 = vmatprep.subr.mxu0 0.0
    %1062 = vmatpush1.msra.mxu0 0.0
    %1063 = vmatprep.subr.mxu0 0.0
    %1064 = vmatpush1.msra.mxu0 0.0
    %1065 = vmatprep.subr.mxu0 0.0
    %1066 = vmatpush1.msra.mxu0 0.0
    %1067 = vmatprep.subr.mxu0 0.0
    %1068 = vmatpush1.msra.mxu0 0.0
    %1069 = vmatprep.subr.mxu0 0.0
    %1070 = vmatpush1.msra.mxu0 0.0
    %1071 = vmatprep.subr.mxu0 0.0
    %1072 = vmatpush1.msra.mxu0 0.0
    %1073 = vmatprep.subr.mxu0 0.0
    %1074 = vmatpush1.msra.mxu0 0.0
    %1075 = vmatprep.subr.mxu0 0.0
    %1076 = vmatpush1.msra.mxu0 0.0
    %1077 = vmatprep.subr.mxu0 0.0
    %1078 = vmatpush1.msra.mxu0 0.0
    %1079 = vmatprep.subr.mxu0 0.0
    %1080 = vmatpush1.msra.mxu0 0.0
    %1081 = vmatprep.subr.mxu0 0.0
    %1082 = vmatpush1.msra.mxu0 0.0
    %1083 = vmatprep.mubr.f32.mxu0 0.0
    %1084 = vmatmul.mubr.f32.gmra.mrb[0].mxu0 %v1005
    %v1085 = vpop.f32.mrb[0].mxu0
    %v1086 = vadd.f32 0.0, %v1085
    %v1087 = vpop.f32.mrb[0].mxu0
    %1088 = vmatprep.mubr.f32.mxu0 0.0
    %1089 = vmatmul.mubr.f32.gmra.mrb[0].mxu0 %v1008
    %v1090 = vpop.f32.mrb[0].mxu0
    %v1091 = vadd.f32 0.0, %v1090
    %v1092 = vpop.f32.mrb[0].mxu0
    %1093 = vmatprep.mubr.f32.mxu0 0.0
    %1094 = vmatmul.mubr.f32.gmra.mrb[0].mxu0 %v1011
    %v1095 = vpop.f32.mrb[0].mxu0
    %v1096 = vadd.f32 0.0, %v1095
    %v1097 = vpop.f32.mrb[0].mxu0
    %1098 = vmatprep.mubr.f32.mxu0 0.0
    %1099 = vmatmul.mubr.f32.gmra.mrb[0].mxu0 %v1014
    %v1100 = vpop.f32.mrb[0].mxu0
    %v1101 = vadd.f32 0.0, %v1100
    %v1102 = vpop.f32.mrb[0].mxu0
    %1103 = vdwg.mxu0
    %v1105 = vsel %vm225, %v1000, 0
    %v1108 = vsel %vm225, %v1001, 0
    %v1111 = vsel %vm225, %v1002, 0
    %v1114 = vsel %vm225, %v1003, 0
    %1116 = vmatprep.subr.mxu0 0.0
    %1117 = vmatpush1.msra.mxu0 %v1017
    %1118 = vmatprep.subr.mxu0 0.0
    %1119 = vmatpush1.msra.mxu0 0.0
    %1120 = vmatprep.subr.mxu0 0.0
    %1121 = vmatpush1.msra.mxu0 0.0
    %1122 = vmatprep.subr.mxu0 0.0
    %1123 = vmatpush1.msra.mxu0 0.0
    %1124 = vmatprep.subr.mxu0 0.0
    %1125 = vmatpush1.msra.mxu0 0.0
    %1126 = vmatprep.subr.mxu0 0.0
    %1127 = vmatpush1.msra.mxu0 0.0
    %1128 = vmatprep.subr.mxu0 0.0
    %1129 = vmatpush1.msra.mxu0 0.0
    %1130 = vmatprep.subr.mxu0 0.0
    %1131 = vmatpush1.msra.mxu0 0.0
    %1132 = vmatprep.subr.mxu0 0.0
    %1133 = vmatpush1.msra.mxu0 0.0
    %1134 = vmatprep.subr.mxu0 0.0
    %1135 = vmatpush1.msra.mxu0 0.0
    %1136 = vmatprep.subr.mxu0 0.0
    %1137 = vmatpush1.msra.mxu0 0.0
    %1138 = vmatprep.subr.mxu0 0.0
    %1139 = vmatpush1.msra.mxu0 0.0
    %1140 = vmatprep.subr.mxu0 0.0
    %1141 = vmatpush1.msra.mxu0 0.0
    %1142 = vmatprep.subr.mxu0 0.0
    %1143 = vmatpush1.msra.mxu0 0.0
    %1144 = vmatprep.subr.mxu0 0.0
    %1145 = vmatpush1.msra.mxu0 0.0
    %1146 = vmatprep.subr.mxu0 0.0
    %1147 = vmatpush1.msra.mxu0 0.0
    %1148 = vmatprep.subr.mxu0 0.0
    %1149 = vmatpush1.msra.mxu0 0.0
    %1150 = vmatprep.subr.mxu0 0.0
    %1151 = vmatpush1.msra.mxu0 0.0
    %1152 = vmatprep.subr.mxu0 0.0
    %1153 = vmatpush1.msra.mxu0 0.0
    %1154 = vmatprep.subr.mxu0 0.0
    %1155 = vmatpush1.msra.mxu0 0.0
    %1156 = vmatprep.subr.mxu0 0.0
    %1157 = vmatpush1.msra.mxu0 0.0
    %1158 = vmatprep.subr.mxu0 0.0
    %1159 = vmatpush1.msra.mxu0 0.0
    %1160 = vmatprep.subr.mxu0 0.0
    %1161 = vmatpush1.msra.mxu0 0.0
    %1162 = vmatprep.subr.mxu0 0.0
    %1163 = vmatpush1.msra.mxu0 0.0
    %1164 = vmatprep.subr.mxu0 0.0
    %1165 = vmatpush1.msra.mxu0 0.0
    %1166 = vmatprep.subr.mxu0 0.0
    %1167 = vmatpush1.msra.mxu0 0.0
    %1168 = vmatprep.subr.mxu0 0.0
    %1169 = vmatpush1.msra.mxu0 0.0
    %1170 = vmatprep.subr.mxu0 0.0
    %1171 = vmatpush1.msra.mxu0 0.0
    %1172 = vmatprep.subr.mxu0 0.0
    %1173 = vmatpush1.msra.mxu0 0.0
    %1174 = vmatprep.subr.mxu0 0.0
    %1175 = vmatpush1.msra.mxu0 0.0
    %1176 = vmatprep.subr.mxu0 0.0
    %1177 = vmatpush1.msra.mxu0 0.0
    %1178 = vmatprep.subr.mxu0 0.0
    %1179 = vmatpush1.msra.mxu0 0.0
    %1180 = vmatprep.mubr.f32.mxu0 0.0
    %1181 = vmatmul.mubr.f32.gmra.mrb[0].mxu0 %v1105
    %v1182 = vpop.f32.mrb[0].mxu0
    %v1183 = vadd.f32 0.0, %v1182
    %v1184 = vpop.f32.mrb[0].mxu0
    %1185 = vmatprep.mubr.f32.mxu0 0.0
    %1186 = vmatmul.mubr.f32.gmra.mrb[0].mxu0 %v1108
    %v1187 = vpop.f32.mrb[0].mxu0
    %v1188 = vadd.f32 0.0, %v1187
    %v1189 = vpop.f32.mrb[0].mxu0
    %1190 = vmatprep.mubr.f32.mxu0 0.0
    %1191 = vmatmul.mubr.f32.gmra.mrb[0].mxu0 %v1111
    %v1192 = vpop.f32.mrb[0].mxu0
    %v1193 = vadd.f32 0.0, %v1192
    %v1194 = vpop.f32.mrb[0].mxu0
    %1195 = vmatprep.mubr.f32.mxu0 0.0
    %1196 = vmatmul.mubr.f32.gmra.mrb[0].mxu0 %v1114
    %v1197 = vpop.f32.mrb[0].mxu0
    %v1198 = vadd.f32 0.0, %v1197
    %v1199 = vpop.f32.mrb[0].mxu0
    %1200 = vdwg.mxu0
    %v1201 = vmul.f32 %v1086, %v1086
    %v1202 = vmul.f32 %v1091, %v1091
    %v1203 = vmul.f32 %v1096, %v1096
    %v1204 = vmul.f32 %v1101, %v1101
    %v1205 = vsub.f32 %v1183, %v1201
    %v1206 = vsub.f32 %v1188, %v1202
    %v1207 = vsub.f32 %v1193, %v1203
    %v1208 = vsub.f32 %v1198, %v1204
    %v1209 = vmax.f32 %v1205, 0.0
    %v1210 = vmax.f32 %v1206, 0.0
    %v1211 = vmax.f32 %v1207, 0.0
    %v1212 = vmax.f32 %v1208, 0.0
    %v1213 = vsub.f32 %v580, %v1086
    %v1214 = vsub.f32 %v585, %v1091
    %v1215 = vsub.f32 %v590, %v1096
    %v1216 = vsub.f32 %v595, %v1101
    %v1217 = vadd.f32 %v1209, 1e-05
    %v1218 = vadd.f32 %v1210, 1e-05
    %v1219 = vadd.f32 %v1211, 1e-05
    %v1220 = vadd.f32 %v1212, 1e-05
    %v1221 = vrsqrt.pop %v1217
    %v1222 = vrsqrt.pop %v1218
    %v1223 = vrsqrt.pop %v1219
    %v1224 = vrsqrt.pop %v1220
    %v1225 = vmul.f32 %v1213, %v1221
    %v1226 = vmul.f32 %v1214, %v1222
    %v1227 = vmul.f32 %v1215, %v1223
    %v1228 = vmul.f32 %v1216, %v1224
    %1230 = vset.pattern.permute.xlu0 0
    %1231 = vperm.xlu0 %1230, %v607
    %v1232 = vpop.permute.xlu0 %1231
    %1235 = vset.pattern.permute.xlu0 0
    %1236 = vperm.xlu0 %1235, %v608
    %v1237 = vpop.permute.xlu0 %1236
    %1240 = vset.pattern.permute.xlu0 0
    %1241 = vperm.xlu0 %1240, %v609
    %v1242 = vpop.permute.xlu0 %1241
    %1245 = vset.pattern.permute.xlu0 0
    %1246 = vperm.xlu0 %1245, %v610
    %v1247 = vpop.permute.xlu0 %1246
    %v1249 = vmul.f32 %v1225, %v1232
    %v1250 = vmul.f32 %v1226, %v1237
    %v1251 = vmul.f32 %v1227, %v1242
    %v1252 = vmul.f32 %v1228, %v1247
    %1254 = vset.pattern.permute.xlu0 0
    %1255 = vperm.xlu0 %1254, %v611
    %v1256 = vpop.permute.xlu0 %1255
    %1259 = vset.pattern.permute.xlu0 0
    %1260 = vperm.xlu0 %1259, %v612
    %v1261 = vpop.permute.xlu0 %1260
    %1264 = vset.pattern.permute.xlu0 0
    %1265 = vperm.xlu0 %1264, %v613
    %v1266 = vpop.permute.xlu0 %1265
    %1269 = vset.pattern.permute.xlu0 0
    %1270 = vperm.xlu0 %1269, %v614
    %v1271 = vpop.permute.xlu0 %1270
    %v1273 = vadd.f32 %v1249, %v1256
    %v1274 = vadd.f32 %v1250, %v1261
    %v1275 = vadd.f32 %v1251, %v1266
    %v1276 = vadd.f32 %v1252, %v1271
    %v1277 = vmax.f32 %v1273, 0.0
    %v1278 = vmax.f32 %v1274, 0.0
    %v1279 = vmax.f32 %v1275, 0.0
    %v1280 = vmax.f32 %v1276, 0.0
    %v1281 = vmin.f32 %v1273, 0.0
    %v1282 = vmin.f32 %v1274, 0.0
    %v1283 = vmin.f32 %v1275, 0.0
    %v1284 = vmin.f32 %v1276, 0.0
    %v1285 = vmul.f32 %v1281, 1.442695
    %v1286 = vpow.pop %v1285
    %v1287 = vmul.f32 %v1282, 1.442695
    %v1288 = vpow.pop %v1287
    %v1289 = vmul.f32 %v1283, 1.442695
    %v1290 = vpow.pop %v1289
    %v1291 = vmul.f32 %v1284, 1.442695
    %v1292 = vpow.pop %v1291
    %v1293 = vsub.f32 %v1286, 1.0
    %v1294 = vsub.f32 %v1288, 1.0
    %v1295 = vsub.f32 %v1290, 1.0
    %v1296 = vsub.f32 %v1292, 1.0
    %v1297 = vmin.f32 %v1293, 0.0
    %v1298 = vmin.f32 %v1294, 0.0
    %v1299 = vmin.f32 %v1295, 0.0
    %v1300 = vmin.f32 %v1296, 0.0
    %v1301 = vadd.f32 %v1277, %v1297
    %v1302 = vadd.f32 %v1278, %v1298
    %v1303 = vadd.f32 %v1279, %v1299
    %v1304 = vadd.f32 %v1280, %v1300
    %v1305 = vld [vmem:[#allocation10] sm:$0xff]
    %v1306 = vld [vmem:[#allocation10 + $0x8] sm:$0x1]
    %v1307 = vld [vmem:[%s12] sm:$0xff]
    %v1308 = vld [vmem:[%s12 + $0x8] sm:$0xff]
    %v1309 = vld [vmem:[%s12 + $0x10] sm:$0xff]
    %v1310 = vld [vmem:[%s12 + $0x18] sm:$0xff]
    %v1311 = vld [vmem:[%s12 + $0x20] sm:$0xff]
    %v1312 = vld [vmem:[%s12 + $0x28] sm:$0xff]
    %v1313 = vld [vmem:[%s12 + $0x30] sm:$0xff]
    %v1314 = vld [vmem:[%s12 + $0x38] sm:$0xff]
    %v1315 = vld [vmem:[%s12 + $0x40] sm:$0xff]
    %v1316 = vld [vmem:[%s12 + $0x48] sm:$0xff]
    %v1317 = vld [vmem:[%s12 + $0x50] sm:$0xff]
    %v1318 = vld [vmem:[%s12 + $0x58] sm:$0xff]
    %v1319 = vld [vmem:[%s12 + $0x60] sm:$0xff]
    %v1320 = vld [vmem:[%s12 + $0x68] sm:$0xff]
    %v1321 = vld [vmem:[%s12 + $0x70] sm:$0xff]
    %v1322 = vld [vmem:[%s12 + $0x78] sm:$0xff]
    %v1323 = vld [vmem:[%s12 + $0x80] sm:$0xff]
    %v1324 = vld [vmem:[%s12 + $0x88] sm:$0xff]
    %v1325 = vld [vmem:[%s12 + $0x90] sm:$0xff]
    %v1326 = vld [vmem:[%s12 + $0x98] sm:$0xff]
    %v1327 = vld [vmem:[%s12 + $0xa0] sm:$0xff]
    %v1328 = vld [vmem:[%s12 + $0xa8] sm:$0xff]
    %v1329 = vld [vmem:[%s12 + $0xb0] sm:$0xff]
    %v1330 = vld [vmem:[%s12 + $0xb8] sm:$0xff]
    %v1331 = vld [vmem:[%s13] sm:$0xff]
    %v1332 = vld [vmem:[%s13 + $0x8] sm:$0xff]
    %v1333 = vld [vmem:[%s13 + $0x10] sm:$0xff]
    %v1334 = vld [vmem:[%s13 + $0x18] sm:$0xff]
    %v1335 = vld [vmem:[%s13 + $0x20] sm:$0xff]
    %v1336 = vld [vmem:[%s13 + $0x28] sm:$0xff]
    %v1337 = vld [vmem:[%s13 + $0x30] sm:$0xff]
    %v1338 = vld [vmem:[%s13 + $0x38] sm:$0xff]
    %vm1339 = vcmask 1047808
    %1340 = vrot.lane.b32.xlu0 %v1301, 32
    %v1341 = vpop.permute.xlu0 %1340
    %v1342 = vsel %vm1339, %v1341, %v1301
    %1343 = vrot.lane.b32.xlu0 %v1302, 32
    %v1344 = vpop.permute.xlu0 %1343
    %v1345 = vsel %vm1339, %v1344, %v1302
    %1346 = vrot.lane.b32.xlu0 %v1303, 32
    %v1347 = vpop.permute.xlu0 %1346
    %v1348 = vsel %vm1339, %v1347, %v1303
    %1349 = vrot.lane.b32.xlu0 %v1304, 32
    %v1350 = vpop.permute.xlu0 %1349
    %v1351 = vsel %vm1339, %v1350, %v1304
    %1352 = vrot.lane.b32.xlu0 %v1342, 32
    %v1353 = vpop.permute.xlu0 %1352
    %1354 = vrot.lane.b32.xlu0 %v1345, 32
    %v1355 = vpop.permute.xlu0 %1354
    %1356 = vrot.lane.b32.xlu0 %v1348, 32
    %v1357 = vpop.permute.xlu0 %1356
    %1358 = vrot.lane.b32.xlu0 %v1351, 32
    %v1359 = vpop.permute.xlu0 %1358
    %v1360 = vsel %vm1339, %v1353, %v1301
    %v1361 = vsel %vm1339, %v1355, %v1302
    %v1362 = vsel %vm1339, %v1357, %v1303
    %v1363 = vsel %vm1339, %v1359, %v1304
    %v1364 = vlaneseq
    %v1365 = vshrl.u32 %v1364, 7
    %v1366 = vsub.s32 0, %v1365
    %v1367 = vrot.slane %v1305, %v1366
    %1369 = vrot.lane.b32.xlu0 %v1367, 22
    %v1370 = vpop.permute.xlu0 %1369
    %v1372 = vmul.f32 %v1360, %v1370
    %v1373 = vmul.f32 %v1361, %v1370
    %v1374 = vmul.f32 %v1362, %v1370
    %v1375 = vmul.f32 %v1363, %v1370
    %v1376 = vlaneseq
    %v1377 = vshrl.u32 %v1376, 7
    %v1378 = vsub.s32 1, %v1377
    %v1379 = vrot.slane %v1305, %v1378
    %1381 = vrot.lane.b32.xlu0 %v1379, 24
    %v1382 = vpop.permute.xlu0 %1381
    %v1384 = vmul.f32 %v1360, %v1382
    %v1385 = vmul.f32 %v1361, %v1382
    %v1386 = vmul.f32 %v1362, %v1382
    %v1387 = vmul.f32 %v1363, %v1382
    %v1388 = vlaneseq
    %v1389 = vshrl.u32 %v1388, 7
    %v1390 = vsub.s32 2, %v1389
    %v1391 = vrot.slane %v1305, %v1390
    %1393 = vrot.lane.b32.xlu0 %v1391, 26
    %v1394 = vpop.permute.xlu0 %1393
    %v1396 = vmul.f32 %v1360, %v1394
    %v1397 = vmul.f32 %v1361, %v1394
    %v1398 = vmul.f32 %v1362, %v1394
    %v1399 = vmul.f32 %v1363, %v1394
    %v1400 = vlaneseq
    %v1401 = vshrl.u32 %v1400, 7
    %v1402 = vsub.s32 3, %v1401
    %v1403 = vrot.slane %v1305, %v1402
    %1405 = vrot.lane.b32.xlu0 %v1403, 30
    %v1406 = vpop.permute.xlu0 %1405
    %v1408 = vmul.f32 %v1360, %v1406
    %v1409 = vmul.f32 %v1361, %v1406
    %v1410 = vmul.f32 %v1362, %v1406
    %v1411 = vmul.f32 %v1363, %v1406
    %v1412 = vlaneseq
    %v1413 = vshrl.u32 %v1412, 7
    %v1414 = vsub.s32 5, %v1413
    %v1415 = vrot.slane %v1305, %v1414
    %1417 = vrot.lane.b32.xlu0 %v1415, 2
    %v1418 = vpop.permute.xlu0 %1417
    %v1420 = vmul.f32 %v1360, %v1418
    %v1421 = vmul.f32 %v1361, %v1418
    %v1422 = vmul.f32 %v1362, %v1418
    %v1423 = vmul.f32 %v1363, %v1418
    %v1424 = vlaneseq
    %v1425 = vshrl.u32 %v1424, 7
    %v1426 = vsub.s32 6, %v1425
    %v1427 = vrot.slane %v1305, %v1426
    %1429 = vrot.lane.b32.xlu0 %v1427, 6
    %v1430 = vpop.permute.xlu0 %1429
    %v1432 = vmul.f32 %v1360, %v1430
    %v1433 = vmul.f32 %v1361, %v1430
    %v1434 = vmul.f32 %v1362, %v1430
    %v1435 = vmul.f32 %v1363, %v1430
    %v1436 = vlaneseq
    %v1437 = vshrl.u32 %v1436, 7
    %v1438 = vsub.s32 7, %v1437
    %v1439 = vrot.slane %v1305, %v1438
    %1441 = vrot.lane.b32.xlu0 %v1439, 8
    %v1442 = vpop.permute.xlu0 %1441
    %v1444 = vmul.f32 %v1360, %v1442
    %v1445 = vmul.f32 %v1361, %v1442
    %v1446 = vmul.f32 %v1362, %v1442
    %v1447 = vmul.f32 %v1363, %v1442
    %v1448 = vlaneseq
    %v1449 = vshrl.u32 %v1448, 7
    %v1450 = vsub.s32 0, %v1449
    %v1451 = vrot.slane %v1306, %v1450
    %1453 = vrot.lane.b32.xlu0 %v1451, 10
    %v1454 = vpop.permute.xlu0 %1453
    %v1456 = vmul.f32 %v1360, %v1454
    %v1457 = vmul.f32 %v1361, %v1454
    %v1458 = vmul.f32 %v1362, %v1454
    %v1459 = vmul.f32 %v1363, %v1454
    %1464 = vrot.lane.b32.xlu0 %v1384, 126
    %v1465 = vpop.permute.xlu0 %1464
    %1466 = vrot.lane.b32.xlu0 %v1385, 126
    %v1467 = vpop.permute.xlu0 %1466
    %1468 = vrot.lane.b32.xlu0 %v1386, 126
    %v1469 = vpop.permute.xlu0 %1468
    %1470 = vrot.lane.b32.xlu0 %v1387, 126
    %v1471 = vpop.permute.xlu0 %1470
    %1476 = vrot.lane.b32.xlu0 %v1396, 124
    %v1477 = vpop.permute.xlu0 %1476
    %1478 = vrot.lane.b32.xlu0 %v1397, 124
    %v1479 = vpop.permute.xlu0 %1478
    %1480 = vrot.lane.b32.xlu0 %v1398, 124
    %v1481 = vpop.permute.xlu0 %1480
    %1482 = vrot.lane.b32.xlu0 %v1399, 124
    %v1483 = vpop.permute.xlu0 %1482
    %1488 = vrot.lane.b32.xlu0 %v1408, 120
    %v1489 = vpop.permute.xlu0 %1488
    %1490 = vrot.lane.b32.xlu0 %v1409, 120
    %v1491 = vpop.permute.xlu0 %1490
    %1492 = vrot.lane.b32.xlu0 %v1410, 120
    %v1493 = vpop.permute.xlu0 %1492
    %1494 = vrot.lane.b32.xlu0 %v1411, 120
    %v1495 = vpop.permute.xlu0 %1494
    %1500 = vrot.lane.b32.xlu0 %v1301, 22
    %v1501 = vpop.permute.xlu0 %1500
    %1502 = vrot.lane.b32.xlu0 %v1302, 22
    %v1503 = vpop.permute.xlu0 %1502
    %1504 = vrot.lane.b32.xlu0 %v1303, 22
    %v1505 = vpop.permute.xlu0 %1504
    %1506 = vrot.lane.b32.xlu0 %v1304, 22
    %v1507 = vpop.permute.xlu0 %1506
    %1512 = vrot.lane.b32.xlu0 %v1420, 20
    %v1513 = vpop.permute.xlu0 %1512
    %1514 = vrot.lane.b32.xlu0 %v1421, 20
    %v1515 = vpop.permute.xlu0 %1514
    %1516 = vrot.lane.b32.xlu0 %v1422, 20
    %v1517 = vpop.permute.xlu0 %1516
    %1518 = vrot.lane.b32.xlu0 %v1423, 20
    %v1519 = vpop.permute.xlu0 %1518
    %1524 = vrot.lane.b32.xlu0 %v1432, 16
    %v1525 = vpop.permute.xlu0 %1524
    %1526 = vrot.lane.b32.xlu0 %v1433, 16
    %v1527 = vpop.permute.xlu0 %1526
    %1528 = vrot.lane.b32.xlu0 %v1434, 16
    %v1529 = vpop.permute.xlu0 %1528
    %1530 = vrot.lane.b32.xlu0 %v1435, 16
    %v1531 = vpop.permute.xlu0 %1530
    %1536 = vrot.lane.b32.xlu0 %v1444, 14
    %v1537 = vpop.permute.xlu0 %1536
    %1538 = vrot.lane.b32.xlu0 %v1445, 14
    %v1539 = vpop.permute.xlu0 %1538
    %1540 = vrot.lane.b32.xlu0 %v1446, 14
    %v1541 = vpop.permute.xlu0 %1540
    %1542 = vrot.lane.b32.xlu0 %v1447, 14
    %v1543 = vpop.permute.xlu0 %1542
    %1548 = vrot.lane.b32.xlu0 %v1456, 12
    %v1549 = vpop.permute.xlu0 %1548
    %1550 = vrot.lane.b32.xlu0 %v1457, 12
    %v1551 = vpop.permute.xlu0 %1550
    %1552 = vrot.lane.b32.xlu0 %v1458, 12
    %v1553 = vpop.permute.xlu0 %1552
    %1554 = vrot.lane.b32.xlu0 %v1459, 12
    %v1555 = vpop.permute.xlu0 %1554
    %1557 = vset.pattern.permute.xlu0 0
    %1558 = vperm.xlu0 %1557, %v1331
    %v1559 = vpop.permute.xlu0 %1558
    %1562 = vset.pattern.permute.xlu0 0
    %1563 = vperm.xlu0 %1562, %v1332
    %v1564 = vpop.permute.xlu0 %1563
    %1567 = vset.pattern.permute.xlu0 0
    %1568 = vperm.xlu0 %1567, %v1333
    %v1569 = vpop.permute.xlu0 %1568
    %1572 = vset.pattern.permute.xlu0 0
    %1573 = vperm.xlu0 %1572, %v1334
    %v1574 = vpop.permute.xlu0 %1573
    %1577 = vset.pattern.permute.xlu0 0
    %1578 = vperm.xlu0 %1577, %v1335
    %v1579 = vpop.permute.xlu0 %1578
    %1582 = vset.pattern.permute.xlu0 0
    %1583 = vperm.xlu0 %1582, %v1336
    %v1584 = vpop.permute.xlu0 %1583
    %1587 = vset.pattern.permute.xlu0 0
    %1588 = vperm.xlu0 %1587, %v1337
    %v1589 = vpop.permute.xlu0 %1588
    %1592 = vset.pattern.permute.xlu0 0
    %1593 = vperm.xlu0 %1592, %v1338
    %v1594 = vpop.permute.xlu0 %1593
    %1600 = vrot.lane.b32.xlu0 %v1372, 106
    %v1601 = vpop.permute.xlu0 %1600
    %1602 = vrot.lane.b32.xlu0 %v1373, 106
    %v1603 = vpop.permute.xlu0 %1602
    %1604 = vrot.lane.b32.xlu0 %v1374, 106
    %v1605 = vpop.permute.xlu0 %1604
    %1606 = vrot.lane.b32.xlu0 %v1375, 106
    %v1607 = vpop.permute.xlu0 %1606
    %1608 = vrot.lane.b32.xlu0 %v1465, 106
    %v1609 = vpop.permute.xlu0 %1608
    %1610 = vrot.lane.b32.xlu0 %v1467, 106
    %v1611 = vpop.permute.xlu0 %1610
    %1612 = vrot.lane.b32.xlu0 %v1469, 106
    %v1613 = vpop.permute.xlu0 %1612
    %1614 = vrot.lane.b32.xlu0 %v1471, 106
    %v1615 = vpop.permute.xlu0 %1614
    %1616 = vrot.lane.b32.xlu0 %v1477, 106
    %v1617 = vpop.permute.xlu0 %1616
    %1618 = vrot.lane.b32.xlu0 %v1479, 106
    %v1619 = vpop.permute.xlu0 %1618
    %1620 = vrot.lane.b32.xlu0 %v1481, 106
    %v1621 = vpop.permute.xlu0 %1620
    %1622 = vrot.lane.b32.xlu0 %v1483, 106
    %v1623 = vpop.permute.xlu0 %1622
    %1624 = vrot.lane.b32.xlu0 %v1489, 106
    %v1625 = vpop.permute.xlu0 %1624
    %1626 = vrot.lane.b32.xlu0 %v1491, 106
    %v1627 = vpop.permute.xlu0 %1626
    %1628 = vrot.lane.b32.xlu0 %v1493, 106
    %v1629 = vpop.permute.xlu0 %1628
    %1630 = vrot.lane.b32.xlu0 %v1495, 106
    %v1631 = vpop.permute.xlu0 %1630
    %1632 = vrot.lane.b32.xlu0 %v1501, 106
    %v1633 = vpop.permute.xlu0 %1632
    %1634 = vrot.lane.b32.xlu0 %v1503, 106
    %v1635 = vpop.permute.xlu0 %1634
    %1636 = vrot.lane.b32.xlu0 %v1505, 106
    %v1637 = vpop.permute.xlu0 %1636
    %1638 = vrot.lane.b32.xlu0 %v1507, 106
    %v1639 = vpop.permute.xlu0 %1638
    %1640 = vrot.lane.b32.xlu0 %v1513, 106
    %v1641 = vpop.permute.xlu0 %1640
    %1642 = vrot.lane.b32.xlu0 %v1515, 106
    %v1643 = vpop.permute.xlu0 %1642
    %1644 = vrot.lane.b32.xlu0 %v1517, 106
    %v1645 = vpop.permute.xlu0 %1644
    %1646 = vrot.lane.b32.xlu0 %v1519, 106
    %v1647 = vpop.permute.xlu0 %1646
    %1648 = vrot.lane.b32.xlu0 %v1525, 106
    %v1649 = vpop.permute.xlu0 %1648
    %1650 = vrot.lane.b32.xlu0 %v1527, 106
    %v1651 = vpop.permute.xlu0 %1650
    %1652 = vrot.lane.b32.xlu0 %v1529, 106
    %v1653 = vpop.permute.xlu0 %1652
    %1654 = vrot.lane.b32.xlu0 %v1531, 106
    %v1655 = vpop.permute.xlu0 %1654
    %1656 = vrot.lane.b32.xlu0 %v1537, 106
    %v1657 = vpop.permute.xlu0 %1656
    %1658 = vrot.lane.b32.xlu0 %v1539, 106
    %v1659 = vpop.permute.xlu0 %1658
    %1660 = vrot.lane.b32.xlu0 %v1541, 106
    %v1661 = vpop.permute.xlu0 %1660
    %1662 = vrot.lane.b32.xlu0 %v1543, 106
    %v1663 = vpop.permute.xlu0 %1662
    %1664 = vrot.lane.b32.xlu0 %v1549, 106
    %v1665 = vpop.permute.xlu0 %1664
    %1666 = vrot.lane.b32.xlu0 %v1551, 106
    %v1667 = vpop.permute.xlu0 %1666
    %1668 = vrot.lane.b32.xlu0 %v1553, 106
    %v1669 = vpop.permute.xlu0 %1668
    %1670 = vrot.lane.b32.xlu0 %v1555, 106
    %v1671 = vpop.permute.xlu0 %1670
    %v1709 = vsel %vm615, %v1309, 0
    %v1712 = vsel %vm615, %v1312, 0
    %v1715 = vsel %vm615, %v1315, 0
    %v1718 = vsel %vm615, %v1318, 0
    %v1721 = vsel %vm615, %v1321, 0
    %v1724 = vsel %vm615, %v1324, 0
    %v1727 = vsel %vm615, %v1327, 0
    %v1730 = vsel %vm615, %v1330, 0
    %1732 = vmatprep.subr.mxu0 0.0
    %1733 = vmatpush1.msra.mxu0 %v1601
    %1734 = vmatprep.subr.mxu0 0.0
    %1735 = vmatpush1.msra.mxu0 %v1603
    %1736 = vmatprep.subr.mxu0 0.0
    %1737 = vmatpush1.msra.mxu0 %v1605
    %1738 = vmatprep.subr.mxu0 0.0
    %1739 = vmatpush1.msra.mxu0 %v1607
    %1740 = vmatprep.subr.mxu0 0.0
    %1741 = vmatpush1.msra.mxu0 %v1609
    %1742 = vmatprep.subr.mxu0 0.0
    %1743 = vmatpush1.msra.mxu0 %v1611
    %1744 = vmatprep.subr.mxu0 0.0
    %1745 = vmatpush1.msra.mxu0 %v1613
    %1746 = vmatprep.subr.mxu0 0.0
    %1747 = vmatpush1.msra.mxu0 %v1615
    %1748 = vmatprep.subr.mxu0 0.0
    %1749 = vmatpush1.msra.mxu0 %v1617
    %1750 = vmatprep.subr.mxu0 0.0
    %1751 = vmatpush1.msra.mxu0 %v1619
    %1752 = vmatprep.subr.mxu0 0.0
    %1753 = vmatpush1.msra.mxu0 %v1621
    %1754 = vmatprep.subr.mxu0 0.0
    %1755 = vmatpush1.msra.mxu0 %v1623
    %1756 = vmatprep.subr.mxu0 0.0
    %1757 = vmatpush1.msra.mxu0 %v1625
    %1758 = vmatprep.subr.mxu0 0.0
    %1759 = vmatpush1.msra.mxu0 %v1627
    %1760 = vmatprep.subr.mxu0 0.0
    %1761 = vmatpush1.msra.mxu0 %v1629
    %1762 = vmatprep.subr.mxu0 0.0
    %1763 = vmatpush1.msra.mxu0 %v1631
    %1764 = vmatprep.subr.mxu0 0.0
    %1765 = vmatpush1.msra.mxu0 %v1633
    %1766 = vmatprep.subr.mxu0 0.0
    %1767 = vmatpush1.msra.mxu0 %v1635
    %1768 = vmatprep.subr.mxu0 0.0
    %1769 = vmatpush1.msra.mxu0 %v1637
    %1770 = vmatprep.subr.mxu0 0.0
    %1771 = vmatpush1.msra.mxu0 %v1639
    %1772 = vmatprep.subr.mxu0 0.0
    %1773 = vmatpush1.msra.mxu0 %v1641
    %1774 = vmatprep.subr.mxu0 0.0
    %1775 = vmatpush1.msra.mxu0 %v1643
    %1776 = vmatprep.subr.mxu0 0.0
    %1777 = vmatpush1.msra.mxu0 %v1645
    %1778 = vmatprep.subr.mxu0 0.0
    %1779 = vmatpush1.msra.mxu0 %v1647
    %1780 = vmatprep.subr.mxu0 0.0
    %1781 = vmatpush1.msra.mxu0 %v1649
    %1782 = vmatprep.subr.mxu0 0.0
    %1783 = vmatpush1.msra.mxu0 %v1651
    %1784 = vmatprep.subr.mxu0 0.0
    %1785 = vmatpush1.msra.mxu0 %v1653
    %1786 = vmatprep.subr.mxu0 0.0
    %1787 = vmatpush1.msra.mxu0 %v1655
    %1788 = vmatprep.subr.mxu0 0.0
    %1789 = vmatpush1.msra.mxu0 %v1657
    %1790 = vmatprep.subr.mxu0 0.0
    %1791 = vmatpush1.msra.mxu0 %v1659
    %1792 = vmatprep.subr.mxu0 0.0
    %1793 = vmatpush1.msra.mxu0 %v1661
    %1794 = vmatprep.subr.mxu0 0.0
    %1795 = vmatpush1.msra.mxu0 %v1663
    %1796 = vmatprep.mubr.f32.mxu0 %v1308
    %1797 = vmatmul.mubr.f32.gmra.mrb[0].mxu0 %v1307
    %v1798 = vpop.f32.mrb[0].mxu0
    %v1799 = vadd.f32 %v1559, %v1798
    %v1800 = vpop.f32.mrb[0].mxu0
    %1801 = vmatprep.mubr.f32.mxu0 %v1311
    %1802 = vmatmul.mubr.f32.gmra.mrb[0].mxu0 %v1310
    %v1803 = vpop.f32.mrb[0].mxu0
    %v1804 = vadd.f32 %v1564, %v1803
    %v1805 = vpop.f32.mrb[0].mxu0
    %1806 = vmatprep.mubr.f32.mxu0 %v1314
    %1807 = vmatmul.mubr.f32.gmra.mrb[0].mxu0 %v1313
    %v1808 = vpop.f32.mrb[0].mxu0
    %v1809 = vadd.f32 %v1569, %v1808
    %v1810 = vpop.f32.mrb[0].mxu0
    %1811 = vmatprep.mubr.f32.mxu0 %v1317
    %1812 = vmatmul.mubr.f32.gmra.mrb[0].mxu0 %v1316
    %v1813 = vpop.f32.mrb[0].mxu0
    %v1814 = vadd.f32 %v1574, %v1813
    %v1815 = vpop.f32.mrb[0].mxu0
    %1816 = vmatprep.mubr.f32.mxu0 %v1320
    %1817 = vmatmul.mubr.f32.gmra.mrb[0].mxu0 %v1319
    %v1818 = vpop.f32.mrb[0].mxu0
    %v1819 = vadd.f32 %v1579, %v1818
    %v1820 = vpop.f32.mrb[0].mxu0
    %1821 = vmatprep.mubr.f32.mxu0 %v1323
    %1822 = vmatmul.mubr.f32.gmra.mrb[0].mxu0 %v1322
    %v1823 = vpop.f32.mrb[0].mxu0
    %v1824 = vadd.f32 %v1584, %v1823
    %v1825 = vpop.f32.mrb[0].mxu0
    %1826 = vmatprep.mubr.f32.mxu0 %v1326
    %1827 = vmatmul.mubr.f32.gmra.mrb[0].mxu0 %v1325
    %v1828 = vpop.f32.mrb[0].mxu0
    %v1829 = vadd.f32 %v1589, %v1828
    %v1830 = vpop.f32.mrb[0].mxu0
    %1831 = vmatprep.mubr.f32.mxu0 %v1329
    %1832 = vmatmul.mubr.f32.gmra.mrb[0].mxu0 %v1328
    %v1833 = vpop.f32.mrb[0].mxu0
    %v1834 = vadd.f32 %v1594, %v1833
    %v1835 = vpop.f32.mrb[0].mxu0
    %1836 = vdwg.mxu0
    %1837 = vmatprep.subr.mxu0 0.0
    %1838 = vmatpush1.msra.mxu0 %v1665
    %1839 = vmatprep.subr.mxu0 0.0
    %1840 = vmatpush1.msra.mxu0 %v1667
    %1841 = vmatprep.subr.mxu0 0.0
    %1842 = vmatpush1.msra.mxu0 %v1669
    %1843 = vmatprep.subr.mxu0 0.0
    %1844 = vmatpush1.msra.mxu0 %v1671
    %1845 = vmatprep.subr.mxu0 0.0
    %1846 = vmatpush1.msra.mxu0 0.0
    %1847 = vmatprep.subr.mxu0 0.0
    %1848 = vmatpush1.msra.mxu0 0.0
    %1849 = vmatprep.subr.mxu0 0.0
    %1850 = vmatpush1.msra.mxu0 0.0
    %1851 = vmatprep.subr.mxu0 0.0
    %1852 = vmatpush1.msra.mxu0 0.0
    %1853 = vmatprep.subr.mxu0 0.0
    %1854 = vmatpush1.msra.mxu0 0.0
    %1855 = vmatprep.subr.mxu0 0.0
    %1856 = vmatpush1.msra.mxu0 0.0
    %1857 = vmatprep.subr.mxu0 0.0
    %1858 = vmatpush1.msra.mxu0 0.0
    %1859 = vmatprep.subr.mxu0 0.0
    %1860 = vmatpush1.msra.mxu0 0.0
    %1861 = vmatprep.subr.mxu0 0.0
    %1862 = vmatpush1.msra.mxu0 0.0
    %1863 = vmatprep.subr.mxu0 0.0
    %1864 = vmatpush1.msra.mxu0 0.0
    %1865 = vmatprep.subr.mxu0 0.0
    %1866 = vmatpush1.msra.mxu0 0.0
    %1867 = vmatprep.subr.mxu0 0.0
    %1868 = vmatpush1.msra.mxu0 0.0
    %1869 = vmatprep.subr.mxu0 0.0
    %1870 = vmatpush1.msra.mxu0 0.0
    %1871 = vmatprep.subr.mxu0 0.0
    %1872 = vmatpush1.msra.mxu0 0.0
    %1873 = vmatprep.subr.mxu0 0.0
    %1874 = vmatpush1.msra.mxu0 0.0
    %1875 = vmatprep.subr.mxu0 0.0
    %1876 = vmatpush1.msra.mxu0 0.0
    %1877 = vmatprep.subr.mxu0 0.0
    %1878 = vmatpush1.msra.mxu0 0.0
    %1879 = vmatprep.subr.mxu0 0.0
    %1880 = vmatpush1.msra.mxu0 0.0
    %1881 = vmatprep.subr.mxu0 0.0
    %1882 = vmatpush1.msra.mxu0 0.0
    %1883 = vmatprep.subr.mxu0 0.0
    %1884 = vmatpush1.msra.mxu0 0.0
    %1885 = vmatprep.subr.mxu0 0.0
    %1886 = vmatpush1.msra.mxu0 0.0
    %1887 = vmatprep.subr.mxu0 0.0
    %1888 = vmatpush1.msra.mxu0 0.0
    %1889 = vmatprep.subr.mxu0 0.0
    %1890 = vmatpush1.msra.mxu0 0.0
    %1891 = vmatprep.subr.mxu0 0.0
    %1892 = vmatpush1.msra.mxu0 0.0
    %1893 = vmatprep.subr.mxu0 0.0
    %1894 = vmatpush1.msra.mxu0 0.0
    %1895 = vmatprep.subr.mxu0 0.0
    %1896 = vmatpush1.msra.mxu0 0.0
    %1897 = vmatprep.subr.mxu0 0.0
    %1898 = vmatpush1.msra.mxu0 0.0
    %1899 = vmatprep.subr.mxu0 0.0
    %1900 = vmatpush1.msra.mxu0 0.0
    %1901 = vmatprep.mubr.f32.mxu0 0.0
    %1902 = vmatmul.mubr.f32.gmra.mrb[0].mxu0 %v1709
    %v1903 = vpop.f32.mrb[0].mxu0
    %v1904 = vadd.f32 %v1799, %v1903
    %v1905 = vpop.f32.mrb[0].mxu0
    %1906 = vmatprep.mubr.f32.mxu0 0.0
    %1907 = vmatmul.mubr.f32.gmra.mrb[0].mxu0 %v1712
    %v1908 = vpop.f32.mrb[0].mxu0
    %v1909 = vadd.f32 %v1804, %v1908
    %v1910 = vpop.f32.mrb[0].mxu0
    %1911 = vmatprep.mubr.f32.mxu0 0.0
    %1912 = vmatmul.mubr.f32.gmra.mrb[0].mxu0 %v1715
    %v1913 = vpop.f32.mrb[0].mxu0
    %v1914 = vadd.f32 %v1809, %v1913
    %v1915 = vpop.f32.mrb[0].mxu0
    %1916 = vmatprep.mubr.f32.mxu0 0.0
    %1917 = vmatmul.mubr.f32.gmra.mrb[0].mxu0 %v1718
    %v1918 = vpop.f32.mrb[0].mxu0
    %v1919 = vadd.f32 %v1814, %v1918
    %v1920 = vpop.f32.mrb[0].mxu0
    %1921 = vmatprep.mubr.f32.mxu0 0.0
    %1922 = vmatmul.mubr.f32.gmra.mrb[0].mxu0 %v1721
    %v1923 = vpop.f32.mrb[0].mxu0
    %v1924 = vadd.f32 %v1819, %v1923
    %v1925 = vpop.f32.mrb[0].mxu0
    %1926 = vmatprep.mubr.f32.mxu0 0.0
    %1927 = vmatmul.mubr.f32.gmra.mrb[0].mxu0 %v1724
    %v1928 = vpop.f32.mrb[0].mxu0
    %v1929 = vadd.f32 %v1824, %v1928
    %v1930 = vpop.f32.mrb[0].mxu0
    %1931 = vmatprep.mubr.f32.mxu0 0.0
    %1932 = vmatmul.mubr.f32.gmra.mrb[0].mxu0 %v1727
    %v1933 = vpop.f32.mrb[0].mxu0
    %v1934 = vadd.f32 %v1829, %v1933
    %v1935 = vpop.f32.mrb[0].mxu0
    %1936 = vmatprep.mubr.f32.mxu0 0.0
    %1937 = vmatmul.mubr.f32.gmra.mrb[0].mxu0 %v1730
    %v1938 = vpop.f32.mrb[0].mxu0
    %v1939 = vadd.f32 %v1834, %v1938
    %v1940 = vpop.f32.mrb[0].mxu0
    %1941 = vdwg.mxu0
    %v1942 = vld [vmem:[#allocation12] sm:$0xff]
    %v1943 = vld [vmem:[#allocation12 + $0x8] sm:$0xff]
    %v1944 = vld [vmem:[#allocation12 + $0x10] sm:$0xff]
    %v1945 = vld [vmem:[#allocation12 + $0x18] sm:$0xff]
    %s1946 = scalar_lea.vmem [#allocation12], 32
    %v1947 = vld [vmem:[%s1946] sm:$0xff]
    %v1948 = vld [vmem:[%s1946 + $0x8] sm:$0xff]
    %v1949 = vld [vmem:[%s1946 + $0x10] sm:$0xff]
    %v1950 = vld [vmem:[%s1946 + $0x18] sm:$0xff]
    %v1952 = vsel %vm615, %v1914, 0
    %v1955 = vsel %vm615, %v1919, 0
    %1957 = vmatprep.subr.mxu0 0.0
    %1958 = vmatpush1.msra.mxu0 %v1947
    %1959 = vmatprep.subr.mxu0 0.0
    %1960 = vmatpush1.msra.mxu0 %v1948
    %1961 = vmatprep.subr.mxu0 0.0
    %1962 = vmatpush1.msra.mxu0 %v1949
    %1963 = vmatprep.subr.mxu0 0.0
    %1964 = vmatpush1.msra.mxu0 %v1950
    %1965 = vmatprep.subr.mxu0 0.0
    %1966 = vmatpush1.msra.mxu0 0.0
    %1967 = vmatprep.subr.mxu0 0.0
    %1968 = vmatpush1.msra.mxu0 0.0
    %1969 = vmatprep.subr.mxu0 0.0
    %1970 = vmatpush1.msra.mxu0 0.0
    %1971 = vmatprep.subr.mxu0 0.0
    %1972 = vmatpush1.msra.mxu0 0.0
    %1973 = vmatprep.subr.mxu0 0.0
    %1974 = vmatpush1.msra.mxu0 0.0
    %1975 = vmatprep.subr.mxu0 0.0
    %1976 = vmatpush1.msra.mxu0 0.0
    %1977 = vmatprep.subr.mxu0 0.0
    %1978 = vmatpush1.msra.mxu0 0.0
    %1979 = vmatprep.subr.mxu0 0.0
    %1980 = vmatpush1.msra.mxu0 0.0
    %1981 = vmatprep.subr.mxu0 0.0
    %1982 = vmatpush1.msra.mxu0 0.0
    %1983 = vmatprep.subr.mxu0 0.0
    %1984 = vmatpush1.msra.mxu0 0.0
    %1985 = vmatprep.subr.mxu0 0.0
    %1986 = vmatpush1.msra.mxu0 0.0
    %1987 = vmatprep.subr.mxu0 0.0
    %1988 = vmatpush1.msra.mxu0 0.0
    %1989 = vmatprep.subr.mxu0 0.0
    %1990 = vmatpush1.msra.mxu0 0.0
    %1991 = vmatprep.subr.mxu0 0.0
    %1992 = vmatpush1.msra.mxu0 0.0
    %1993 = vmatprep.subr.mxu0 0.0
    %1994 = vmatpush1.msra.mxu0 0.0
    %1995 = vmatprep.subr.mxu0 0.0
    %1996 = vmatpush1.msra.mxu0 0.0
    %1997 = vmatprep.subr.mxu0 0.0
    %1998 = vmatpush1.msra.mxu0 0.0
    %1999 = vmatprep.subr.mxu0 0.0
    %2000 = vmatpush1.msra.mxu0 0.0
    %2001 = vmatprep.subr.mxu0 0.0
    %2002 = vmatpush1.msra.mxu0 0.0
    %2003 = vmatprep.subr.mxu0 0.0
    %2004 = vmatpush1.msra.mxu0 0.0
    %2005 = vmatprep.subr.mxu0 0.0
    %2006 = vmatpush1.msra.mxu0 0.0
    %2007 = vmatprep.subr.mxu0 0.0
    %2008 = vmatpush1.msra.mxu0 0.0
    %2009 = vmatprep.subr.mxu0 0.0
    %2010 = vmatpush1.msra.mxu0 0.0
    %2011 = vmatprep.subr.mxu0 0.0
    %2012 = vmatpush1.msra.mxu0 0.0
    %2013 = vmatprep.subr.mxu0 0.0
    %2014 = vmatpush1.msra.mxu0 0.0
    %2015 = vmatprep.subr.mxu0 0.0
    %2016 = vmatpush1.msra.mxu0 0.0
    %2017 = vmatprep.subr.mxu0 0.0
    %2018 = vmatpush1.msra.mxu0 0.0
    %2019 = vmatprep.subr.mxu0 0.0
    %2020 = vmatpush1.msra.mxu0 0.0
    %2021 = vmatprep.mubr.f32.mxu0 0.0
    %2022 = vmatmul.mubr.f32.gmra.mrb[0].mxu0 %v1952
    %v2023 = vpop.f32.mrb[0].mxu0
    %v2024 = vadd.f32 0.0, %v2023
    %v2025 = vpop.f32.mrb[0].mxu0
    %2026 = vmatprep.mubr.f32.mxu0 0.0
    %2027 = vmatmul.mubr.f32.gmra.mrb[0].mxu0 %v1955
    %v2028 = vpop.f32.mrb[0].mxu0
    %v2029 = vadd.f32 0.0, %v2028
    %v2030 = vpop.f32.mrb[0].mxu0
    %2031 = vdwg.mxu0
    %v2033 = vsel %vm615, %v1904, 0
    %v2036 = vsel %vm615, %v1909, 0
    %2038 = vmatprep.subr.mxu0 0.0
    %2039 = vmatpush1.msra.mxu0 %v1942
    %2040 = vmatprep.subr.mxu0 0.0
    %2041 = vmatpush1.msra.mxu0 %v1943
    %2042 = vmatprep.subr.mxu0 0.0
    %2043 = vmatpush1.msra.mxu0 %v1944
    %2044 = vmatprep.subr.mxu0 0.0
    %2045 = vmatpush1.msra.mxu0 %v1945
    %2046 = vmatprep.subr.mxu0 0.0
    %2047 = vmatpush1.msra.mxu0 0.0
    %2048 = vmatprep.subr.mxu0 0.0
    %2049 = vmatpush1.msra.mxu0 0.0
    %2050 = vmatprep.subr.mxu0 0.0
    %2051 = vmatpush1.msra.mxu0 0.0
    %2052 = vmatprep.subr.mxu0 0.0
    %2053 = vmatpush1.msra.mxu0 0.0
    %2054 = vmatprep.subr.mxu0 0.0
    %2055 = vmatpush1.msra.mxu0 0.0
    %2056 = vmatprep.subr.mxu0 0.0
    %2057 = vmatpush1.msra.mxu0 0.0
    %2058 = vmatprep.subr.mxu0 0.0
    %2059 = vmatpush1.msra.mxu0 0.0
    %2060 = vmatprep.subr.mxu0 0.0
    %2061 = vmatpush1.msra.mxu0 0.0
    %2062 = vmatprep.subr.mxu0 0.0
    %2063 = vmatpush1.msra.mxu0 0.0
    %2064 = vmatprep.subr.mxu0 0.0
    %2065 = vmatpush1.msra.mxu0 0.0
    %2066 = vmatprep.subr.mxu0 0.0
    %2067 = vmatpush1.msra.mxu0 0.0
    %2068 = vmatprep.subr.mxu0 0.0
    %2069 = vmatpush1.msra.mxu0 0.0
    %2070 = vmatprep.subr.mxu0 0.0
    %2071 = vmatpush1.msra.mxu0 0.0
    %2072 = vmatprep.subr.mxu0 0.0
    %2073 = vmatpush1.msra.mxu0 0.0
    %2074 = vmatprep.subr.mxu0 0.0
    %2075 = vmatpush1.msra.mxu0 0.0
    %2076 = vmatprep.subr.mxu0 0.0
    %2077 = vmatpush1.msra.mxu0 0.0
    %2078 = vmatprep.subr.mxu0 0.0
    %2079 = vmatpush1.msra.mxu0 0.0
    %2080 = vmatprep.subr.mxu0 0.0
    %2081 = vmatpush1.msra.mxu0 0.0
    %2082 = vmatprep.subr.mxu0 0.0
    %2083 = vmatpush1.msra.mxu0 0.0
    %2084 = vmatprep.subr.mxu0 0.0
    %2085 = vmatpush1.msra.mxu0 0.0
    %2086 = vmatprep.subr.mxu0 0.0
    %2087 = vmatpush1.msra.mxu0 0.0
    %2088 = vmatprep.subr.mxu0 0.0
    %2089 = vmatpush1.msra.mxu0 0.0
    %2090 = vmatprep.subr.mxu0 0.0
    %2091 = vmatpush1.msra.mxu0 0.0
    %2092 = vmatprep.subr.mxu0 0.0
    %2093 = vmatpush1.msra.mxu0 0.0
    %2094 = vmatprep.subr.mxu0 0.0
    %2095 = vmatpush1.msra.mxu0 0.0
    %2096 = vmatprep.subr.mxu0 0.0
    %2097 = vmatpush1.msra.mxu0 0.0
    %2098 = vmatprep.subr.mxu0 0.0
    %2099 = vmatpush1.msra.mxu0 0.0
    %2100 = vmatprep.subr.mxu0 0.0
    %2101 = vmatpush1.msra.mxu0 0.0
    %2102 = vmatprep.mubr.f32.mxu0 0.0
    %2103 = vmatmul.mubr.f32.gmra.mrb[0].mxu0 %v2033
    %v2104 = vpop.f32.mrb[0].mxu0
    %v2105 = vadd.f32 %v2024, %v2104
    %v2106 = vpop.f32.mrb[0].mxu0
    %2107 = vmatprep.mubr.f32.mxu0 0.0
    %2108 = vmatmul.mubr.f32.gmra.mrb[0].mxu0 %v2036
    %v2109 = vpop.f32.mrb[0].mxu0
    %v2110 = vadd.f32 %v2029, %v2109
    %v2111 = vpop.f32.mrb[0].mxu0
    %2112 = vdwg.mxu0
    %s2113 = scalar_lea.vmem [#allocation12], 64
    %v2114 = vld [vmem:[%s2113] sm:$0xff]
    %v2115 = vld [vmem:[%s2113 + $0x8] sm:$0xff]
    %v2116 = vld [vmem:[%s2113 + $0x10] sm:$0xff]
    %v2117 = vld [vmem:[%s2113 + $0x18] sm:$0xff]
    %v2119 = vsel %vm615, %v1924, 0
    %v2122 = vsel %vm615, %v1929, 0
    %2124 = vmatprep.subr.mxu0 0.0
    %2125 = vmatpush1.msra.mxu0 %v2114
    %2126 = vmatprep.subr.mxu0 0.0
    %2127 = vmatpush1.msra.mxu0 %v2115
    %2128 = vmatprep.subr.mxu0 0.0
    %2129 = vmatpush1.msra.mxu0 %v2116
    %2130 = vmatprep.subr.mxu0 0.0
    %2131 = vmatpush1.msra.mxu0 %v2117
    %2132 = vmatprep.subr.mxu0 0.0
    %2133 = vmatpush1.msra.mxu0 0.0
    %2134 = vmatprep.subr.mxu0 0.0
    %2135 = vmatpush1.msra.mxu0 0.0
    %2136 = vmatprep.subr.mxu0 0.0
    %2137 = vmatpush1.msra.mxu0 0.0
    %2138 = vmatprep.subr.mxu0 0.0
    %2139 = vmatpush1.msra.mxu0 0.0
    %2140 = vmatprep.subr.mxu0 0.0
    %2141 = vmatpush1.msra.mxu0 0.0
    %2142 = vmatprep.subr.mxu0 0.0
    %2143 = vmatpush1.msra.mxu0 0.0
    %2144 = vmatprep.subr.mxu0 0.0
    %2145 = vmatpush1.msra.mxu0 0.0
    %2146 = vmatprep.subr.mxu0 0.0
    %2147 = vmatpush1.msra.mxu0 0.0
    %2148 = vmatprep.subr.mxu0 0.0
    %2149 = vmatpush1.msra.mxu0 0.0
    %2150 = vmatprep.subr.mxu0 0.0
    %2151 = vmatpush1.msra.mxu0 0.0
    %2152 = vmatprep.subr.mxu0 0.0
    %2153 = vmatpush1.msra.mxu0 0.0
    %2154 = vmatprep.subr.mxu0 0.0
    %2155 = vmatpush1.msra.mxu0 0.0
    %2156 = vmatprep.subr.mxu0 0.0
    %2157 = vmatpush1.msra.mxu0 0.0
    %2158 = vmatprep.subr.mxu0 0.0
    %2159 = vmatpush1.msra.mxu0 0.0
    %2160 = vmatprep.subr.mxu0 0.0
    %2161 = vmatpush1.msra.mxu0 0.0
    %2162 = vmatprep.subr.mxu0 0.0
    %2163 = vmatpush1.msra.mxu0 0.0
    %2164 = vmatprep.subr.mxu0 0.0
    %2165 = vmatpush1.msra.mxu0 0.0
    %2166 = vmatprep.subr.mxu0 0.0
    %2167 = vmatpush1.msra.mxu0 0.0
    %2168 = vmatprep.subr.mxu0 0.0
    %2169 = vmatpush1.msra.mxu0 0.0
    %2170 = vmatprep.subr.mxu0 0.0
    %2171 = vmatpush1.msra.mxu0 0.0
    %2172 = vmatprep.subr.mxu0 0.0
    %2173 = vmatpush1.msra.mxu0 0.0
    %2174 = vmatprep.subr.mxu0 0.0
    %2175 = vmatpush1.msra.mxu0 0.0
    %2176 = vmatprep.subr.mxu0 0.0
    %2177 = vmatpush1.msra.mxu0 0.0
    %2178 = vmatprep.subr.mxu0 0.0
    %2179 = vmatpush1.msra.mxu0 0.0
    %2180 = vmatprep.subr.mxu0 0.0
    %2181 = vmatpush1.msra.mxu0 0.0
    %2182 = vmatprep.subr.mxu0 0.0
    %2183 = vmatpush1.msra.mxu0 0.0
    %2184 = vmatprep.subr.mxu0 0.0
    %2185 = vmatpush1.msra.mxu0 0.0
    %2186 = vmatprep.subr.mxu0 0.0
    %2187 = vmatpush1.msra.mxu0 0.0
    %2188 = vmatprep.mubr.f32.mxu0 0.0
    %2189 = vmatmul.mubr.f32.gmra.mrb[0].mxu0 %v2119
    %v2190 = vpop.f32.mrb[0].mxu0
    %v2191 = vadd.f32 0.0, %v2190
    %v2192 = vpop.f32.mrb[0].mxu0
    %2193 = vmatprep.mubr.f32.mxu0 0.0
    %2194 = vmatmul.mubr.f32.gmra.mrb[0].mxu0 %v2122
    %v2195 = vpop.f32.mrb[0].mxu0
    %v2196 = vadd.f32 0.0, %v2195
    %v2197 = vpop.f32.mrb[0].mxu0
    %2198 = vdwg.mxu0
    %v2199 = vadd.f32 %v2105, %v2191
    %v2200 = vadd.f32 %v2110, %v2196
    %s2201 = scalar_lea.vmem [#allocation12], 96
    %v2202 = vld [vmem:[%s2201] sm:$0xff]
    %v2203 = vld [vmem:[%s2201 + $0x8] sm:$0xff]
    %v2204 = vld [vmem:[%s2201 + $0x10] sm:$0xff]
    %v2205 = vld [vmem:[%s2201 + $0x18] sm:$0xff]
    %v2207 = vsel %vm615, %v1934, 0
    %v2210 = vsel %vm615, %v1939, 0
    %2212 = vmatprep.subr.mxu0 0.0
    %2213 = vmatpush1.msra.mxu0 %v2202
    %2214 = vmatprep.subr.mxu0 0.0
    %2215 = vmatpush1.msra.mxu0 %v2203
    %2216 = vmatprep.subr.mxu0 0.0
    %2217 = vmatpush1.msra.mxu0 %v2204
    %2218 = vmatprep.subr.mxu0 0.0
    %2219 = vmatpush1.msra.mxu0 %v2205
    %2220 = vmatprep.subr.mxu0 0.0
    %2221 = vmatpush1.msra.mxu0 0.0
    %2222 = vmatprep.subr.mxu0 0.0
    %2223 = vmatpush1.msra.mxu0 0.0
    %2224 = vmatprep.subr.mxu0 0.0
    %2225 = vmatpush1.msra.mxu0 0.0
    %2226 = vmatprep.subr.mxu0 0.0
    %2227 = vmatpush1.msra.mxu0 0.0
    %2228 = vmatprep.subr.mxu0 0.0
    %2229 = vmatpush1.msra.mxu0 0.0
    %2230 = vmatprep.subr.mxu0 0.0
    %2231 = vmatpush1.msra.mxu0 0.0
    %2232 = vmatprep.subr.mxu0 0.0
    %2233 = vmatpush1.msra.mxu0 0.0
    %2234 = vmatprep.subr.mxu0 0.0
    %2235 = vmatpush1.msra.mxu0 0.0
    %2236 = vmatprep.subr.mxu0 0.0
    %2237 = vmatpush1.msra.mxu0 0.0
    %2238 = vmatprep.subr.mxu0 0.0
    %2239 = vmatpush1.msra.mxu0 0.0
    %2240 = vmatprep.subr.mxu0 0.0
    %2241 = vmatpush1.msra.mxu0 0.0
    %2242 = vmatprep.subr.mxu0 0.0
    %2243 = vmatpush1.msra.mxu0 0.0
    %2244 = vmatprep.subr.mxu0 0.0
    %2245 = vmatpush1.msra.mxu0 0.0
    %2246 = vmatprep.subr.mxu0 0.0
    %2247 = vmatpush1.msra.mxu0 0.0
    %2248 = vmatprep.subr.mxu0 0.0
    %2249 = vmatpush1.msra.mxu0 0.0
    %2250 = vmatprep.subr.mxu0 0.0
    %2251 = vmatpush1.msra.mxu0 0.0
    %2252 = vmatprep.subr.mxu0 0.0
    %2253 = vmatpush1.msra.mxu0 0.0
    %2254 = vmatprep.subr.mxu0 0.0
    %2255 = vmatpush1.msra.mxu0 0.0
    %2256 = vmatprep.subr.mxu0 0.0
    %2257 = vmatpush1.msra.mxu0 0.0
    %2258 = vmatprep.subr.mxu0 0.0
    %2259 = vmatpush1.msra.mxu0 0.0
    %2260 = vmatprep.subr.mxu0 0.0
    %2261 = vmatpush1.msra.mxu0 0.0
    %2262 = vmatprep.subr.mxu0 0.0
    %2263 = vmatpush1.msra.mxu0 0.0
    %2264 = vmatprep.subr.mxu0 0.0
    %2265 = vmatpush1.msra.mxu0 0.0
    %2266 = vmatprep.subr.mxu0 0.0
    %2267 = vmatpush1.msra.mxu0 0.0
    %2268 = vmatprep.subr.mxu0 0.0
    %2269 = vmatpush1.msra.mxu0 0.0
    %2270 = vmatprep.subr.mxu0 0.0
    %2271 = vmatpush1.msra.mxu0 0.0
    %2272 = vmatprep.subr.mxu0 0.0
    %2273 = vmatpush1.msra.mxu0 0.0
    %2274 = vmatprep.subr.mxu0 0.0
    %2275 = vmatpush1.msra.mxu0 0.0
    %2276 = vmatprep.mubr.f32.mxu0 0.0
    %2277 = vmatmul.mubr.f32.gmra.mrb[0].mxu0 %v2207
    %v2278 = vpop.f32.mrb[0].mxu0
    %v2279 = vadd.f32 0.0, %v2278
    %v2280 = vpop.f32.mrb[0].mxu0
    %2281 = vmatprep.mubr.f32.mxu0 0.0
    %2282 = vmatmul.mubr.f32.gmra.mrb[0].mxu0 %v2210
    %v2283 = vpop.f32.mrb[0].mxu0
    %v2284 = vadd.f32 0.0, %v2283
    %v2285 = vpop.f32.mrb[0].mxu0
    %2286 = vdwg.mxu0
    %v2287 = vadd.f32 %v2199, %v2279
    %v2288 = vadd.f32 %v2200, %v2284
    %v2289 = vld [vmem:[#allocation13] sm:$0xff]
    %v2290 = vld [vmem:[#allocation13 + $0x8] sm:$0xff]
    %v2291 = vld [vmem:[%s16] sm:$0xff]
    %v2292 = vld [vmem:[%s16 + $0x8] sm:$0xff]
    %v2293 = vld [vmem:[%s16 + $0x10] sm:$0xff]
    %v2294 = vld [vmem:[%s16 + $0x18] sm:$0xff]
    %v2295 = vld [vmem:[%s16 + $0x20] sm:$0xff]
    %v2296 = vld [vmem:[%s16 + $0x28] sm:$0xff]
    %v2297 = vld [vmem:[%s16 + $0x30] sm:$0xff]
    %v2298 = vld [vmem:[%s16 + $0x38] sm:$0xff]
    %v2299 = vld [vmem:[%s16 + $0x40] sm:$0xff]
    %v2300 = vld [vmem:[%s16 + $0x48] sm:$0xff]
    %v2301 = vld [vmem:[%s16 + $0x50] sm:$0xff]
    %v2302 = vld [vmem:[%s16 + $0x58] sm:$0xff]
    %v2303 = vld [vmem:[%s16 + $0x60] sm:$0xff]
    %v2304 = vld [vmem:[%s16 + $0x68] sm:$0xff]
    %v2305 = vld [vmem:[%s16 + $0x70] sm:$0xff]
    %v2306 = vld [vmem:[%s16 + $0x78] sm:$0xff]
    %v2307 = vld [vmem:[%s17] sm:$0x3]
    %v2308 = vld [vmem:[%s18] sm:$0xff]
    %v2309 = vld [vmem:[%s18 + $0x8] sm:$0xff]
    %v2310 = vld [vmem:[%s19] sm:$0xff]
    %v2311 = vld [vmem:[%s19 + $0x8] sm:$0xff]
    %2312 = vmatprep.subr.mxu0 0.0
    %2313 = vmatpush1.msra.mxu0 %v2291
    %2314 = vmatprep.subr.mxu0 0.0
    %2315 = vmatpush1.msra.mxu0 %v2292
    %2316 = vmatprep.subr.mxu0 0.0
    %2317 = vmatpush1.msra.mxu0 %v2293
    %2318 = vmatprep.subr.mxu0 0.0
    %2319 = vmatpush1.msra.mxu0 %v2294
    %2320 = vmatprep.subr.mxu0 0.0
    %2321 = vmatpush1.msra.mxu0 %v2295
    %2322 = vmatprep.subr.mxu0 0.0
    %2323 = vmatpush1.msra.mxu0 %v2296
    %2324 = vmatprep.subr.mxu0 0.0
    %2325 = vmatpush1.msra.mxu0 %v2297
    %2326 = vmatprep.subr.mxu0 0.0
    %2327 = vmatpush1.msra.mxu0 %v2298
    %2328 = vmatprep.subr.mxu0 0.0
    %2329 = vmatpush1.msra.mxu0 %v2299
    %2330 = vmatprep.subr.mxu0 0.0
    %2331 = vmatpush1.msra.mxu0 %v2300
    %2332 = vmatprep.subr.mxu0 0.0
    %2333 = vmatpush1.msra.mxu0 %v2301
    %2334 = vmatprep.subr.mxu0 0.0
    %2335 = vmatpush1.msra.mxu0 %v2302
    %2336 = vmatprep.subr.mxu0 0.0
    %2337 = vmatpush1.msra.mxu0 %v2303
    %2338 = vmatprep.subr.mxu0 0.0
    %2339 = vmatpush1.msra.mxu0 %v2304
    %2340 = vmatprep.subr.mxu0 0.0
    %2341 = vmatpush1.msra.mxu0 %v2305
    %2342 = vmatprep.subr.mxu0 0.0
    %2343 = vmatpush1.msra.mxu0 %v2306
    %2344 = vmatprep.subr.mxu0 0.0
    %2345 = vmatpush1.msra.mxu0 0.0
    %2346 = vmatprep.subr.mxu0 0.0
    %2347 = vmatpush1.msra.mxu0 0.0
    %2348 = vmatprep.subr.mxu0 0.0
    %2349 = vmatpush1.msra.mxu0 0.0
    %2350 = vmatprep.subr.mxu0 0.0
    %2351 = vmatpush1.msra.mxu0 0.0
    %2352 = vmatprep.subr.mxu0 0.0
    %2353 = vmatpush1.msra.mxu0 0.0
    %2354 = vmatprep.subr.mxu0 0.0
    %2355 = vmatpush1.msra.mxu0 0.0
    %2356 = vmatprep.subr.mxu0 0.0
    %2357 = vmatpush1.msra.mxu0 0.0
    %2358 = vmatprep.subr.mxu0 0.0
    %2359 = vmatpush1.msra.mxu0 0.0
    %2360 = vmatprep.subr.mxu0 0.0
    %2361 = vmatpush1.msra.mxu0 0.0
    %2362 = vmatprep.subr.mxu0 0.0
    %2363 = vmatpush1.msra.mxu0 0.0
    %2364 = vmatprep.subr.mxu0 0.0
    %2365 = vmatpush1.msra.mxu0 0.0
    %2366 = vmatprep.subr.mxu0 0.0
    %2367 = vmatpush1.msra.mxu0 0.0
    %2368 = vmatprep.subr.mxu0 0.0
    %2369 = vmatpush1.msra.mxu0 0.0
    %2370 = vmatprep.subr.mxu0 0.0
    %2371 = vmatpush1.msra.mxu0 0.0
    %2372 = vmatprep.subr.mxu0 0.0
    %2373 = vmatpush1.msra.mxu0 0.0
    %2374 = vmatprep.subr.mxu0 0.0
    %2375 = vmatpush1.msra.mxu0 0.0
    %2376 = vmatprep.mubr.f32.mxu0 0.0
    %2377 = vmatmul.mubr.f32.gmra.mrb[0].mxu0 %v2287
    %v2378 = vpop.f32.mrb[0].mxu0
    %v2379 = vadd.f32 0.0, %v2378
    %v2380 = vpop.f32.mrb[0].mxu0
    %2381 = vmatprep.mubr.f32.mxu0 0.0
    %2382 = vmatmul.mubr.f32.gmra.mrb[0].mxu0 %v2288
    %v2383 = vpop.f32.mrb[0].mxu0
    %v2384 = vadd.f32 0.0, %v2383
    %v2385 = vpop.f32.mrb[0].mxu0
    %2386 = vdwg.mxu0
    %v2387 = vmul.f32 %v2287, %v2287
    %v2388 = vmul.f32 %v2288, %v2288
    %2389 = vmatprep.subr.mxu0 0.0
    %2390 = vmatpush1.msra.mxu0 %v2291
    %2391 = vmatprep.subr.mxu0 0.0
    %2392 = vmatpush1.msra.mxu0 %v2292
    %2393 = vmatprep.subr.mxu0 0.0
    %2394 = vmatpush1.msra.mxu0 %v2293
    %2395 = vmatprep.subr.mxu0 0.0
    %2396 = vmatpush1.msra.mxu0 %v2294
    %2397 = vmatprep.subr.mxu0 0.0
    %2398 = vmatpush1.msra.mxu0 %v2295
    %2399 = vmatprep.subr.mxu0 0.0
    %2400 = vmatpush1.msra.mxu0 %v2296
    %2401 = vmatprep.subr.mxu0 0.0
    %2402 = vmatpush1.msra.mxu0 %v2297
    %2403 = vmatprep.subr.mxu0 0.0
    %2404 = vmatpush1.msra.mxu0 %v2298
    %2405 = vmatprep.subr.mxu0 0.0
    %2406 = vmatpush1.msra.mxu0 %v2299
    %2407 = vmatprep.subr.mxu0 0.0
    %2408 = vmatpush1.msra.mxu0 %v2300
    %2409 = vmatprep.subr.mxu0 0.0
    %2410 = vmatpush1.msra.mxu0 %v2301
    %2411 = vmatprep.subr.mxu0 0.0
    %2412 = vmatpush1.msra.mxu0 %v2302
    %2413 = vmatprep.subr.mxu0 0.0
    %2414 = vmatpush1.msra.mxu0 %v2303
    %2415 = vmatprep.subr.mxu0 0.0
    %2416 = vmatpush1.msra.mxu0 %v2304
    %2417 = vmatprep.subr.mxu0 0.0
    %2418 = vmatpush1.msra.mxu0 %v2305
    %2419 = vmatprep.subr.mxu0 0.0
    %2420 = vmatpush1.msra.mxu0 %v2306
    %2421 = vmatprep.subr.mxu0 0.0
    %2422 = vmatpush1.msra.mxu0 0.0
    %2423 = vmatprep.subr.mxu0 0.0
    %2424 = vmatpush1.msra.mxu0 0.0
    %2425 = vmatprep.subr.mxu0 0.0
    %2426 = vmatpush1.msra.mxu0 0.0
    %2427 = vmatprep.subr.mxu0 0.0
    %2428 = vmatpush1.msra.mxu0 0.0
    %2429 = vmatprep.subr.mxu0 0.0
    %2430 = vmatpush1.msra.mxu0 0.0
    %2431 = vmatprep.subr.mxu0 0.0
    %2432 = vmatpush1.msra.mxu0 0.0
    %2433 = vmatprep.subr.mxu0 0.0
    %2434 = vmatpush1.msra.mxu0 0.0
    %2435 = vmatprep.subr.mxu0 0.0
    %2436 = vmatpush1.msra.mxu0 0.0
    %2437 = vmatprep.subr.mxu0 0.0
    %2438 = vmatpush1.msra.mxu0 0.0
    %2439 = vmatprep.subr.mxu0 0.0
    %2440 = vmatpush1.msra.mxu0 0.0
    %2441 = vmatprep.subr.mxu0 0.0
    %2442 = vmatpush1.msra.mxu0 0.0
    %2443 = vmatprep.subr.mxu0 0.0
    %2444 = vmatpush1.msra.mxu0 0.0
    %2445 = vmatprep.subr.mxu0 0.0
    %2446 = vmatpush1.msra.mxu0 0.0
    %2447 = vmatprep.subr.mxu0 0.0
    %2448 = vmatpush1.msra.mxu0 0.0
    %2449 = vmatprep.subr.mxu0 0.0
    %2450 = vmatpush1.msra.mxu0 0.0
    %2451 = vmatprep.subr.mxu0 0.0
    %2452 = vmatpush1.msra.mxu0 0.0
    %2453 = vmatprep.mubr.f32.mxu0 0.0
    %2454 = vmatmul.mubr.f32.gmra.mrb[0].mxu0 %v2387
    %v2455 = vpop.f32.mrb[0].mxu0
    %v2456 = vadd.f32 0.0, %v2455
    %v2457 = vpop.f32.mrb[0].mxu0
    %2458 = vmatprep.mubr.f32.mxu0 0.0
    %2459 = vmatmul.mubr.f32.gmra.mrb[0].mxu0 %v2388
    %v2460 = vpop.f32.mrb[0].mxu0
    %v2461 = vadd.f32 0.0, %v2460
    %v2462 = vpop.f32.mrb[0].mxu0
    %2463 = vdwg.mxu0
    %vm2464 = vcmask 130048
    %v2466 = vsel %vm2464, %v2289, 0
    %v2469 = vsel %vm2464, %v2290, 0
    %2471 = vmatprep.subr.mxu0 0.0
    %2472 = vmatpush1.msra.mxu0 %v2379
    %2473 = vmatprep.subr.mxu0 0.0
    %2474 = vmatpush1.msra.mxu0 %v2384
    %2475 = vmatprep.subr.mxu0 0.0
    %2476 = vmatpush1.msra.mxu0 0.0
    %2477 = vmatprep.subr.mxu0 0.0
    %2478 = vmatpush1.msra.mxu0 0.0
    %2479 = vmatprep.subr.mxu0 0.0
    %2480 = vmatpush1.msra.mxu0 0.0
    %2481 = vmatprep.subr.mxu0 0.0
    %2482 = vmatpush1.msra.mxu0 0.0
    %2483 = vmatprep.subr.mxu0 0.0
    %2484 = vmatpush1.msra.mxu0 0.0
    %2485 = vmatprep.subr.mxu0 0.0
    %2486 = vmatpush1.msra.mxu0 0.0
    %2487 = vmatprep.subr.mxu0 0.0
    %2488 = vmatpush1.msra.mxu0 0.0
    %2489 = vmatprep.subr.mxu0 0.0
    %2490 = vmatpush1.msra.mxu0 0.0
    %2491 = vmatprep.subr.mxu0 0.0
    %2492 = vmatpush1.msra.mxu0 0.0
    %2493 = vmatprep.subr.mxu0 0.0
    %2494 = vmatpush1.msra.mxu0 0.0
    %2495 = vmatprep.subr.mxu0 0.0
    %2496 = vmatpush1.msra.mxu0 0.0
    %2497 = vmatprep.subr.mxu0 0.0
    %2498 = vmatpush1.msra.mxu0 0.0
    %2499 = vmatprep.subr.mxu0 0.0
    %2500 = vmatpush1.msra.mxu0 0.0
    %2501 = vmatprep.subr.mxu0 0.0
    %2502 = vmatpush1.msra.mxu0 0.0
    %2503 = vmatprep.subr.mxu0 0.0
    %2504 = vmatpush1.msra.mxu0 0.0
    %2505 = vmatprep.subr.mxu0 0.0
    %2506 = vmatpush1.msra.mxu0 0.0
    %2507 = vmatprep.subr.mxu0 0.0
    %2508 = vmatpush1.msra.mxu0 0.0
    %2509 = vmatprep.subr.mxu0 0.0
    %2510 = vmatpush1.msra.mxu0 0.0
    %2511 = vmatprep.subr.mxu0 0.0
    %2512 = vmatpush1.msra.mxu0 0.0
    %2513 = vmatprep.subr.mxu0 0.0
    %2514 = vmatpush1.msra.mxu0 0.0
    %2515 = vmatprep.subr.mxu0 0.0
    %2516 = vmatpush1.msra.mxu0 0.0
    %2517 = vmatprep.subr.mxu0 0.0
    %2518 = vmatpush1.msra.mxu0 0.0
    %2519 = vmatprep.subr.mxu0 0.0
    %2520 = vmatpush1.msra.mxu0 0.0
    %2521 = vmatprep.subr.mxu0 0.0
    %2522 = vmatpush1.msra.mxu0 0.0
    %2523 = vmatprep.subr.mxu0 0.0
    %2524 = vmatpush1.msra.mxu0 0.0
    %2525 = vmatprep.subr.mxu0 0.0
    %2526 = vmatpush1.msra.mxu0 0.0
    %2527 = vmatprep.subr.mxu0 0.0
    %2528 = vmatpush1.msra.mxu0 0.0
    %2529 = vmatprep.subr.mxu0 0.0
    %2530 = vmatpush1.msra.mxu0 0.0
    %2531 = vmatprep.subr.mxu0 0.0
    %2532 = vmatpush1.msra.mxu0 0.0
    %2533 = vmatprep.subr.mxu0 0.0
    %2534 = vmatpush1.msra.mxu0 0.0
    %2535 = vmatprep.mubr.f32.mxu0 0.0
    %2536 = vmatmul.mubr.f32.gmra.mrb[0].mxu0 %v2466
    %v2537 = vpop.f32.mrb[0].mxu0
    %v2538 = vadd.f32 0.0, %v2537
    %v2539 = vpop.f32.mrb[0].mxu0
    %2540 = vmatprep.mubr.f32.mxu0 0.0
    %2541 = vmatmul.mubr.f32.gmra.mrb[0].mxu0 %v2469
    %v2542 = vpop.f32.mrb[0].mxu0
    %v2543 = vadd.f32 0.0, %v2542
    %v2544 = vpop.f32.mrb[0].mxu0
    %2545 = vdwg.mxu0
    %v2546 = vmul.f32 %v2538, 0.00390625
    %v2547 = vmul.f32 %v2543, 0.00390625
    %2548 = vmatprep.subr.mxu0 0.0
    %2549 = vmatpush1.msra.mxu0 %v2456
    %2550 = vmatprep.subr.mxu0 0.0
    %2551 = vmatpush1.msra.mxu0 %v2461
    %2552 = vmatprep.subr.mxu0 0.0
    %2553 = vmatpush1.msra.mxu0 0.0
    %2554 = vmatprep.subr.mxu0 0.0
    %2555 = vmatpush1.msra.mxu0 0.0
    %2556 = vmatprep.subr.mxu0 0.0
    %2557 = vmatpush1.msra.mxu0 0.0
    %2558 = vmatprep.subr.mxu0 0.0
    %2559 = vmatpush1.msra.mxu0 0.0
    %2560 = vmatprep.subr.mxu0 0.0
    %2561 = vmatpush1.msra.mxu0 0.0
    %2562 = vmatprep.subr.mxu0 0.0
    %2563 = vmatpush1.msra.mxu0 0.0
    %2564 = vmatprep.subr.mxu0 0.0
    %2565 = vmatpush1.msra.mxu0 0.0
    %2566 = vmatprep.subr.mxu0 0.0
    %2567 = vmatpush1.msra.mxu0 0.0
    %2568 = vmatprep.subr.mxu0 0.0
    %2569 = vmatpush1.msra.mxu0 0.0
    %2570 = vmatprep.subr.mxu0 0.0
    %2571 = vmatpush1.msra.mxu0 0.0
    %2572 = vmatprep.subr.mxu0 0.0
    %2573 = vmatpush1.msra.mxu0 0.0
    %2574 = vmatprep.subr.mxu0 0.0
    %2575 = vmatpush1.msra.mxu0 0.0
    %2576 = vmatprep.subr.mxu0 0.0
    %2577 = vmatpush1.msra.mxu0 0.0
    %2578 = vmatprep.subr.mxu0 0.0
    %2579 = vmatpush1.msra.mxu0 0.0
    %2580 = vmatprep.subr.mxu0 0.0
    %2581 = vmatpush1.msra.mxu0 0.0
    %2582 = vmatprep.subr.mxu0 0.0
    %2583 = vmatpush1.msra.mxu0 0.0
    %2584 = vmatprep.subr.mxu0 0.0
    %2585 = vmatpush1.msra.mxu0 0.0
    %2586 = vmatprep.subr.mxu0 0.0
    %2587 = vmatpush1.msra.mxu0 0.0
    %2588 = vmatprep.subr.mxu0 0.0
    %2589 = vmatpush1.msra.mxu0 0.0
    %2590 = vmatprep.subr.mxu0 0.0
    %2591 = vmatpush1.msra.mxu0 0.0
    %2592 = vmatprep.subr.mxu0 0.0
    %2593 = vmatpush1.msra.mxu0 0.0
    %2594 = vmatprep.subr.mxu0 0.0
    %2595 = vmatpush1.msra.mxu0 0.0
    %2596 = vmatprep.subr.mxu0 0.0
    %2597 = vmatpush1.msra.mxu0 0.0
    %2598 = vmatprep.subr.mxu0 0.0
    %2599 = vmatpush1.msra.mxu0 0.0
    %2600 = vmatprep.subr.mxu0 0.0
    %2601 = vmatpush1.msra.mxu0 0.0
    %2602 = vmatprep.subr.mxu0 0.0
    %2603 = vmatpush1.msra.mxu0 0.0
    %2604 = vmatprep.subr.mxu0 0.0
    %2605 = vmatpush1.msra.mxu0 0.0
    %2606 = vmatprep.subr.mxu0 0.0
    %2607 = vmatpush1.msra.mxu0 0.0
    %2608 = vmatprep.subr.mxu0 0.0
    %2609 = vmatpush1.msra.mxu0 0.0
    %2610 = vmatprep.subr.mxu0 0.0
    %2611 = vmatpush1.msra.mxu0 0.0
    %2612 = vmatprep.mubr.f32.mxu0 0.0
    %2613 = vmatmul.mubr.f32.gmra.mrb[0].mxu0 %v2466
    %v2614 = vpop.f32.mrb[0].mxu0
    %v2615 = vadd.f32 0.0, %v2614
    %v2616 = vpop.f32.mrb[0].mxu0
    %2617 = vmatprep.mubr.f32.mxu0 0.0
    %2618 = vmatmul.mubr.f32.gmra.mrb[0].mxu0 %v2469
    %v2619 = vpop.f32.mrb[0].mxu0
    %v2620 = vadd.f32 0.0, %v2619
    %v2621 = vpop.f32.mrb[0].mxu0
    %2622 = vdwg.mxu0
    %v2623 = vmul.f32 %v2615, 0.00390625
    %v2624 = vmul.f32 %v2620, 0.00390625
    %v2626 = vsel %vm225, %v2546, 0
    %v2629 = vsel %vm225, %v2547, 0
    %v2632 = vsel %vm229, %v2307, 0
    %2634 = vmatprep.subr.mxu0 0.0
    %2635 = vmatpush1.msra.mxu0 %v2632
    %2636 = vmatprep.subr.mxu0 0.0
    %2637 = vmatpush1.msra.mxu0 0.0
    %2638 = vmatprep.subr.mxu0 0.0
    %2639 = vmatpush1.msra.mxu0 0.0
    %2640 = vmatprep.subr.mxu0 0.0
    %2641 = vmatpush1.msra.mxu0 0.0
    %2642 = vmatprep.subr.mxu0 0.0
    %2643 = vmatpush1.msra.mxu0 0.0
    %2644 = vmatprep.subr.mxu0 0.0
    %2645 = vmatpush1.msra.mxu0 0.0
    %2646 = vmatprep.subr.mxu0 0.0
    %2647 = vmatpush1.msra.mxu0 0.0
    %2648 = vmatprep.subr.mxu0 0.0
    %2649 = vmatpush1.msra.mxu0 0.0
    %2650 = vmatprep.subr.mxu0 0.0
    %2651 = vmatpush1.msra.mxu0 0.0
    %2652 = vmatprep.subr.mxu0 0.0
    %2653 = vmatpush1.msra.mxu0 0.0
    %2654 = vmatprep.subr.mxu0 0.0
    %2655 = vmatpush1.msra.mxu0 0.0
    %2656 = vmatprep.subr.mxu0 0.0
    %2657 = vmatpush1.msra.mxu0 0.0
    %2658 = vmatprep.subr.mxu0 0.0
    %2659 = vmatpush1.msra.mxu0 0.0
    %2660 = vmatprep.subr.mxu0 0.0
    %2661 = vmatpush1.msra.mxu0 0.0
    %2662 = vmatprep.subr.mxu0 0.0
    %2663 = vmatpush1.msra.mxu0 0.0
    %2664 = vmatprep.subr.mxu0 0.0
    %2665 = vmatpush1.msra.mxu0 0.0
    %2666 = vmatprep.subr.mxu0 0.0
    %2667 = vmatpush1.msra.mxu0 0.0
    %2668 = vmatprep.subr.mxu0 0.0
    %2669 = vmatpush1.msra.mxu0 0.0
    %2670 = vmatprep.subr.mxu0 0.0
    %2671 = vmatpush1.msra.mxu0 0.0
    %2672 = vmatprep.subr.mxu0 0.0
    %2673 = vmatpush1.msra.mxu0 0.0
    %2674 = vmatprep.subr.mxu0 0.0
    %2675 = vmatpush1.msra.mxu0 0.0
    %2676 = vmatprep.subr.mxu0 0.0
    %2677 = vmatpush1.msra.mxu0 0.0
    %2678 = vmatprep.subr.mxu0 0.0
    %2679 = vmatpush1.msra.mxu0 0.0
    %2680 = vmatprep.subr.mxu0 0.0
    %2681 = vmatpush1.msra.mxu0 0.0
    %2682 = vmatprep.subr.mxu0 0.0
    %2683 = vmatpush1.msra.mxu0 0.0
    %2684 = vmatprep.subr.mxu0 0.0
    %2685 = vmatpush1.msra.mxu0 0.0
    %2686 = vmatprep.subr.mxu0 0.0
    %2687 = vmatpush1.msra.mxu0 0.0
    %2688 = vmatprep.subr.mxu0 0.0
    %2689 = vmatpush1.msra.mxu0 0.0
    %2690 = vmatprep.subr.mxu0 0.0
    %2691 = vmatpush1.msra.mxu0 0.0
    %2692 = vmatprep.subr.mxu0 0.0
    %2693 = vmatpush1.msra.mxu0 0.0
    %2694 = vmatprep.subr.mxu0 0.0
    %2695 = vmatpush1.msra.mxu0 0.0
    %2696 = vmatprep.subr.mxu0 0.0
    %2697 = vmatpush1.msra.mxu0 0.0
    %2698 = vmatprep.mubr.f32.mxu0 0.0
    %2699 = vmatmul.mubr.f32.gmra.mrb[0].mxu0 %v2626
    %v2700 = vpop.f32.mrb[0].mxu0
    %v2701 = vadd.f32 0.0, %v2700
    %v2702 = vpop.f32.mrb[0].mxu0
    %2703 = vmatprep.mubr.f32.mxu0 0.0
    %2704 = vmatmul.mubr.f32.gmra.mrb[0].mxu0 %v2629
    %v2705 = vpop.f32.mrb[0].mxu0
    %v2706 = vadd.f32 0.0, %v2705
    %v2707 = vpop.f32.mrb[0].mxu0
    %2708 = vdwg.mxu0
    %v2710 = vsel %vm225, %v2623, 0
    %v2713 = vsel %vm225, %v2624, 0
    %2715 = vmatprep.subr.mxu0 0.0
    %2716 = vmatpush1.msra.mxu0 %v2632
    %2717 = vmatprep.subr.mxu0 0.0
    %2718 = vmatpush1.msra.mxu0 0.0
    %2719 = vmatprep.subr.mxu0 0.0
    %2720 = vmatpush1.msra.mxu0 0.0
    %2721 = vmatprep.subr.mxu0 0.0
    %2722 = vmatpush1.msra.mxu0 0.0
    %2723 = vmatprep.subr.mxu0 0.0
    %2724 = vmatpush1.msra.mxu0 0.0
    %2725 = vmatprep.subr.mxu0 0.0
    %2726 = vmatpush1.msra.mxu0 0.0
    %2727 = vmatprep.subr.mxu0 0.0
    %2728 = vmatpush1.msra.mxu0 0.0
    %2729 = vmatprep.subr.mxu0 0.0
    %2730 = vmatpush1.msra.mxu0 0.0
    %2731 = vmatprep.subr.mxu0 0.0
    %2732 = vmatpush1.msra.mxu0 0.0
    %2733 = vmatprep.subr.mxu0 0.0
    %2734 = vmatpush1.msra.mxu0 0.0
    %2735 = vmatprep.subr.mxu0 0.0
    %2736 = vmatpush1.msra.mxu0 0.0
    %2737 = vmatprep.subr.mxu0 0.0
    %2738 = vmatpush1.msra.mxu0 0.0
    %2739 = vmatprep.subr.mxu0 0.0
    %2740 = vmatpush1.msra.mxu0 0.0
    %2741 = vmatprep.subr.mxu0 0.0
    %2742 = vmatpush1.msra.mxu0 0.0
    %2743 = vmatprep.subr.mxu0 0.0
    %2744 = vmatpush1.msra.mxu0 0.0
    %2745 = vmatprep.subr.mxu0 0.0
    %2746 = vmatpush1.msra.mxu0 0.0
    %2747 = vmatprep.subr.mxu0 0.0
    %2748 = vmatpush1.msra.mxu0 0.0
    %2749 = vmatprep.subr.mxu0 0.0
    %2750 = vmatpush1.msra.mxu0 0.0
    %2751 = vmatprep.subr.mxu0 0.0
    %2752 = vmatpush1.msra.mxu0 0.0
    %2753 = vmatprep.subr.mxu0 0.0
    %2754 = vmatpush1.msra.mxu0 0.0
    %2755 = vmatprep.subr.mxu0 0.0
    %2756 = vmatpush1.msra.mxu0 0.0
    %2757 = vmatprep.subr.mxu0 0.0
    %2758 = vmatpush1.msra.mxu0 0.0
    %2759 = vmatprep.subr.mxu0 0.0
    %2760 = vmatpush1.msra.mxu0 0.0
    %2761 = vmatprep.subr.mxu0 0.0
    %2762 = vmatpush1.msra.mxu0 0.0
    %2763 = vmatprep.subr.mxu0 0.0
    %2764 = vmatpush1.msra.mxu0 0.0
    %2765 = vmatprep.subr.mxu0 0.0
    %2766 = vmatpush1.msra.mxu0 0.0
    %2767 = vmatprep.subr.mxu0 0.0
    %2768 = vmatpush1.msra.mxu0 0.0
    %2769 = vmatprep.subr.mxu0 0.0
    %2770 = vmatpush1.msra.mxu0 0.0
    %2771 = vmatprep.subr.mxu0 0.0
    %2772 = vmatpush1.msra.mxu0 0.0
    %2773 = vmatprep.subr.mxu0 0.0
    %2774 = vmatpush1.msra.mxu0 0.0
    %2775 = vmatprep.subr.mxu0 0.0
    %2776 = vmatpush1.msra.mxu0 0.0
    %2777 = vmatprep.subr.mxu0 0.0
    %2778 = vmatpush1.msra.mxu0 0.0
    %2779 = vmatprep.mubr.f32.mxu0 0.0
    %2780 = vmatmul.mubr.f32.gmra.mrb[0].mxu0 %v2710
    %v2781 = vpop.f32.mrb[0].mxu0
    %v2782 = vadd.f32 0.0, %v2781
    %v2783 = vpop.f32.mrb[0].mxu0
    %2784 = vmatprep.mubr.f32.mxu0 0.0
    %2785 = vmatmul.mubr.f32.gmra.mrb[0].mxu0 %v2713
    %v2786 = vpop.f32.mrb[0].mxu0
    %v2787 = vadd.f32 0.0, %v2786
    %v2788 = vpop.f32.mrb[0].mxu0
    %2789 = vdwg.mxu0
    %v2790 = vmul.f32 %v2701, %v2701
    %v2791 = vmul.f32 %v2706, %v2706
    %v2792 = vsub.f32 %v2782, %v2790
    %v2793 = vsub.f32 %v2787, %v2791
    %v2794 = vmax.f32 %v2792, 0.0
    %v2795 = vmax.f32 %v2793, 0.0
    %v2796 = vsub.f32 %v2287, %v2701
    %v2797 = vsub.f32 %v2288, %v2706
    %v2798 = vadd.f32 %v2794, 1e-05
    %v2799 = vadd.f32 %v2795, 1e-05
    %v2800 = vrsqrt.pop %v2798
    %v2801 = vrsqrt.pop %v2799
    %v2802 = vmul.f32 %v2796, %v2800
    %v2803 = vmul.f32 %v2797, %v2801
    %2805 = vset.pattern.permute.xlu0 0
    %2806 = vperm.xlu0 %2805, %v2308
    %v2807 = vpop.permute.xlu0 %2806
    %2810 = vset.pattern.permute.xlu0 0
    %2811 = vperm.xlu0 %2810, %v2309
    %v2812 = vpop.permute.xlu0 %2811
    %v2814 = vmul.f32 %v2802, %v2807
    %v2815 = vmul.f32 %v2803, %v2812
    %2817 = vset.pattern.permute.xlu0 0
    %2818 = vperm.xlu0 %2817, %v2310
    %v2819 = vpop.permute.xlu0 %2818
    %2822 = vset.pattern.permute.xlu0 0
    %2823 = vperm.xlu0 %2822, %v2311
    %v2824 = vpop.permute.xlu0 %2823
    %v2826 = vadd.f32 %v2814, %v2819
    %v2827 = vadd.f32 %v2815, %v2824
    %v2828 = vmax.f32 %v2826, 0.0
    %v2829 = vmax.f32 %v2827, 0.0
    %v2830 = vmin.f32 %v2826, 0.0
    %v2831 = vmin.f32 %v2827, 0.0
    %v2832 = vmul.f32 %v2830, 1.442695
    %v2833 = vpow.pop %v2832
    %v2834 = vmul.f32 %v2831, 1.442695
    %v2835 = vpow.pop %v2834
    %v2836 = vsub.f32 %v2833, 1.0
    %v2837 = vsub.f32 %v2835, 1.0
    %v2838 = vmin.f32 %v2836, 0.0
    %v2839 = vmin.f32 %v2837, 0.0
    %v2840 = vadd.f32 %v2828, %v2838
    %v2841 = vadd.f32 %v2829, %v2839
    %v2842 = vld [vmem:[%s20] sm:$0xff]
    %v2843 = vld [vmem:[%s20 + $0x8] sm:$0x1]
    %v2844 = vld [vmem:[%s21] sm:$0xff]
    %v2845 = vld [vmem:[%s21 + $0x8] sm:$0xff]
    %v2846 = vld [vmem:[%s21 + $0x10] sm:$0xf]
    %v2847 = vld [vmem:[%s21 + $0x18] sm:$0xf]
    %v2848 = vld [vmem:[%s22] sm:$0xff]
    %v2849 = vld [vmem:[%s22 + $0x8] sm:$0xf]
    %2850 = vrot.lane.b32.xlu0 %v2840, 18
    %v2851 = vpop.permute.xlu0 %2850
    %2852 = vrot.lane.b32.xlu0 %v2841, 18
    %v2853 = vpop.permute.xlu0 %2852
    %v2854 = vlaneseq
    %v2855 = vshrl.u32 %v2854, 7
    %v2856 = vsub.s32 0, %v2855
    %v2857 = vrot.slane %v2842, %v2856
    %v2858 = vmul.f32 %v2851, %v2857
    %v2859 = vmul.f32 %v2853, %v2857
    %2860 = vrot.lane.b32.xlu0 %v2840, 16
    %v2861 = vpop.permute.xlu0 %2860
    %2862 = vrot.lane.b32.xlu0 %v2841, 16
    %v2863 = vpop.permute.xlu0 %2862
    %v2864 = vlaneseq
    %v2865 = vshrl.u32 %v2864, 7
    %v2866 = vsub.s32 1, %v2865
    %v2867 = vrot.slane %v2842, %v2866
    %v2868 = vmul.f32 %v2861, %v2867
    %v2869 = vmul.f32 %v2863, %v2867
    %2870 = vrot.lane.b32.xlu0 %v2840, 14
    %v2871 = vpop.permute.xlu0 %2870
    %2872 = vrot.lane.b32.xlu0 %v2841, 14
    %v2873 = vpop.permute.xlu0 %2872
    %v2874 = vlaneseq
    %v2875 = vshrl.u32 %v2874, 7
    %v2876 = vsub.s32 2, %v2875
    %v2877 = vrot.slane %v2842, %v2876
    %v2878 = vmul.f32 %v2871, %v2877
    %v2879 = vmul.f32 %v2873, %v2877
    %2880 = vrot.lane.b32.xlu0 %v2840, 2
    %v2881 = vpop.permute.xlu0 %2880
    %2882 = vrot.lane.b32.xlu0 %v2841, 2
    %v2883 = vpop.permute.xlu0 %2882
    %v2884 = vlaneseq
    %v2885 = vshrl.u32 %v2884, 7
    %v2886 = vsub.s32 3, %v2885
    %v2887 = vrot.slane %v2842, %v2886
    %v2888 = vmul.f32 %v2881, %v2887
    %v2889 = vmul.f32 %v2883, %v2887
    %2890 = vrot.lane.b32.xlu0 %v2840, 126
    %v2891 = vpop.permute.xlu0 %2890
    %2892 = vrot.lane.b32.xlu0 %v2841, 126
    %v2893 = vpop.permute.xlu0 %2892
    %v2894 = vlaneseq
    %v2895 = vshrl.u32 %v2894, 7
    %v2896 = vsub.s32 5, %v2895
    %v2897 = vrot.slane %v2842, %v2896
    %v2898 = vmul.f32 %v2891, %v2897
    %v2899 = vmul.f32 %v2893, %v2897
    %2900 = vrot.lane.b32.xlu0 %v2840, 114
    %v2901 = vpop.permute.xlu0 %2900
    %2902 = vrot.lane.b32.xlu0 %v2841, 114
    %v2903 = vpop.permute.xlu0 %2902
    %v2904 = vlaneseq
    %v2905 = vshrl.u32 %v2904, 7
    %v2906 = vsub.s32 6, %v2905
    %v2907 = vrot.slane %v2842, %v2906
    %v2908 = vmul.f32 %v2901, %v2907
    %v2909 = vmul.f32 %v2903, %v2907
    %2910 = vrot.lane.b32.xlu0 %v2840, 112
    %v2911 = vpop.permute.xlu0 %2910
    %2912 = vrot.lane.b32.xlu0 %v2841, 112
    %v2913 = vpop.permute.xlu0 %2912
    %v2914 = vlaneseq
    %v2915 = vshrl.u32 %v2914, 7
    %v2916 = vsub.s32 7, %v2915
    %v2917 = vrot.slane %v2842, %v2916
    %v2918 = vmul.f32 %v2911, %v2917
    %v2919 = vmul.f32 %v2913, %v2917
    %2920 = vrot.lane.b32.xlu0 %v2840, 110
    %v2921 = vpop.permute.xlu0 %2920
    %2922 = vrot.lane.b32.xlu0 %v2841, 110
    %v2923 = vpop.permute.xlu0 %2922
    %v2924 = vlaneseq
    %v2925 = vshrl.u32 %v2924, 7
    %v2926 = vsub.s32 0, %v2925
    %v2927 = vrot.slane %v2843, %v2926
    %v2928 = vmul.f32 %v2921, %v2927
    %v2929 = vmul.f32 %v2923, %v2927
    %2931 = vset.pattern.permute.xlu0 0
    %2932 = vperm.xlu0 %2931, %v2848
    %v2933 = vpop.permute.xlu0 %2932
    %2936 = vset.pattern.permute.xlu0 0
    %2937 = vperm.xlu0 %2936, %v2849
    %v2938 = vpop.permute.xlu0 %2937
    %v2941 = vsel %vm2464, %v2845, 0
    %v2944 = vsel %vm2464, %v2847, 0
    %2946 = vmatprep.subr.mxu0 0.0
    %2947 = vmatpush1.msra.mxu0 %v2858
    %2948 = vmatprep.subr.mxu0 0.0
    %2949 = vmatpush1.msra.mxu0 %v2859
    %2950 = vmatprep.subr.mxu0 0.0
    %2951 = vmatpush1.msra.mxu0 %v2868
    %2952 = vmatprep.subr.mxu0 0.0
    %2953 = vmatpush1.msra.mxu0 %v2869
    %2954 = vmatprep.subr.mxu0 0.0
    %2955 = vmatpush1.msra.mxu0 %v2878
    %2956 = vmatprep.subr.mxu0 0.0
    %2957 = vmatpush1.msra.mxu0 %v2879
    %2958 = vmatprep.subr.mxu0 0.0
    %2959 = vmatpush1.msra.mxu0 %v2888
    %2960 = vmatprep.subr.mxu0 0.0
    %2961 = vmatpush1.msra.mxu0 %v2889
    %2962 = vmatprep.subr.mxu0 0.0
    %2963 = vmatpush1.msra.mxu0 %v2840
    %2964 = vmatprep.subr.mxu0 0.0
    %2965 = vmatpush1.msra.mxu0 %v2841
    %2966 = vmatprep.subr.mxu0 0.0
    %2967 = vmatpush1.msra.mxu0 %v2898
    %2968 = vmatprep.subr.mxu0 0.0
    %2969 = vmatpush1.msra.mxu0 %v2899
    %2970 = vmatprep.subr.mxu0 0.0
    %2971 = vmatpush1.msra.mxu0 %v2908
    %2972 = vmatprep.subr.mxu0 0.0
    %2973 = vmatpush1.msra.mxu0 %v2909
    %2974 = vmatprep.subr.mxu0 0.0
    %2975 = vmatpush1.msra.mxu0 %v2918
    %2976 = vmatprep.subr.mxu0 0.0
    %2977 = vmatpush1.msra.mxu0 %v2919
    %2978 = vmatprep.subr.mxu0 0.0
    %2979 = vmatpush1.msra.mxu0 %v2928
    %2980 = vmatprep.subr.mxu0 0.0
    %2981 = vmatpush1.msra.mxu0 %v2929
    %2982 = vmatprep.subr.mxu0 0.0
    %2983 = vmatpush1.msra.mxu0 0.0
    %2984 = vmatprep.subr.mxu0 0.0
    %2985 = vmatpush1.msra.mxu0 0.0
    %2986 = vmatprep.subr.mxu0 0.0
    %2987 = vmatpush1.msra.mxu0 0.0
    %2988 = vmatprep.subr.mxu0 0.0
    %2989 = vmatpush1.msra.mxu0 0.0
    %2990 = vmatprep.subr.mxu0 0.0
    %2991 = vmatpush1.msra.mxu0 0.0
    %2992 = vmatprep.subr.mxu0 0.0
    %2993 = vmatpush1.msra.mxu0 0.0
    %2994 = vmatprep.subr.mxu0 0.0
    %2995 = vmatpush1.msra.mxu0 0.0
    %2996 = vmatprep.subr.mxu0 0.0
    %2997 = vmatpush1.msra.mxu0 0.0
    %2998 = vmatprep.subr.mxu0 0.0
    %2999 = vmatpush1.msra.mxu0 0.0
    %3000 = vmatprep.subr.mxu0 0.0
    %3001 = vmatpush1.msra.mxu0 0.0
    %3002 = vmatprep.subr.mxu0 0.0
    %3003 = vmatpush1.msra.mxu0 0.0
    %3004 = vmatprep.subr.mxu0 0.0
    %3005 = vmatpush1.msra.mxu0 0.0
    %3006 = vmatprep.subr.mxu0 0.0
    %3007 = vmatpush1.msra.mxu0 0.0
    %3008 = vmatprep.subr.mxu0 0.0
    %3009 = vmatpush1.msra.mxu0 0.0
    %3010 = vmatprep.mubr.f32.mxu0 %v2941
    %3011 = vmatmul.mubr.f32.gmra.mrb[0].mxu0 %v2844
    %v3012 = vpop.f32.mrb[0].mxu0
    %v3013 = vadd.f32 %v2933, %v3012
    %v3014 = vpop.f32.mrb[0].mxu0
    %3015 = vmatprep.mubr.f32.mxu0 %v2944
    %3016 = vmatmul.mubr.f32.gmra.mrb[0].mxu0 %v2846
    %v3017 = vpop.f32.mrb[0].mxu0
    %v3018 = vadd.f32 %v2938, %v3017
    %v3019 = vpop.f32.mrb[0].mxu0
    %3020 = vdwg.mxu0
    %v3021 = vand.u32 2147483647, %v3013
    %v3022 = vand.u32 2147483647, %v3018
    %v3023 = vsub.f32 0.0, %v3021
    %v3024 = vsub.f32 0.0, %v3022
    %v3025 = vmul.f32 %v3023, 1.442695
    %v3026 = vpow.pop %v3025
    %v3027 = vmul.f32 %v3024, 1.442695
    %v3028 = vpow.pop %v3027
    %vm3029 = vcmp.ge.f32.partialorder %v3013, 0.0
    %vm3030 = vcmp.ge.f32.partialorder %v3018, 0.0
    %v3031 = vadd.f32 %v3026, 1.0
    %v3032 = vadd.f32 %v3028, 1.0
    %v3033 = vrcp.pop %v3031
    %v3034 = vmul.f32 1.0, %v3033
    %v3035 = vrcp.pop %v3032
    %v3036 = vmul.f32 1.0, %v3035
    %v3037 = vmul.f32 %v3026, %v3033
    %v3038 = vmul.f32 %v3028, %v3035
    %v3039 = vsel %vm3029, %v3034, %v3037
    %v3040 = vsel %vm3030, %v3036, %v3038
    %3041 = vst [vmem:[%s23] sm:$0xff] %v3039
    %3042 = vst [vmem:[%s23 + $0x8] sm:$0xf] %v3040
    // Predicated region
    $region126: #{_lambda_.1} parent=1 // pred_check
      _
    $region127: #{_lambda_.1} parent=1 // pred_check_branch
      %3044 = sbr.rel (0) target = $region129
    $region128: #{_lambda_.1} parent=1 // pred_region
      _
    $region129: #{_lambda_.1} parent=1 // pred_fallthru
      _
    // Predicated region
    $region130: #{_lambda_.1} parent=1 // pred_check
      _
    $region131: #{_lambda_.1} parent=1 // pred_check_branch
      %3046 = sbr.rel (0) target = $region133
    $region132: #{_lambda_.1} parent=1 // pred_region
      _
    $region133: #{_lambda_.1} parent=1 // pred_fallthru
      _
    %3047 = vsyncpa [#allocation3], 1
    %3048 = vsyncpa [#allocation5], 1
    %3049 = vsyncpa [#allocation8], 1
    %3050 = vsyncpa [#allocation11], 1
    %3051 = vsyncpa [#allocation14], 1

</llo_original>
